<compile_context>
chip_gen: v6e
topology: v6e:2x2x1
jax: 0.10.0
libtpu: 0.0.40
codegen_flags: <defaults>
</compile_context>

<pallas_src>
import jax
import jax.numpy as jnp
from jax.experimental import pallas as pl
from jax.experimental.pallas import tpu as pltpu


def _round_up(x, m):
    return (x + m - 1) // m * m


def fasttext_kernel(ids_ref,               # SMEM : (T_pad,) int32 token ids (scalar prefetch)
                    bag_ref,               # VMEM : (1, 1, K) int32 bag id per token of this chunk
                    tokw_ref,              # VMEM : (1, 1, K) f32 per-token weight (1/count, 0 for pad)
                    emb_hbm,               # HBM  : (V, Dp) f32 embedding table
                    w_hbm,                 # HBM  : (Dp, Cp) bf16 folded classifier weight
                    b_ref,                 # VMEM : (1, Cp) f32 bias
                    out_ref,               # VMEM : (Bp, Cp) f32
                    rows_buf,              # VMEM scratch: (2, K, Dp) f32 double-buffered rows
                    row_sems,              # DMA sems: (2, K)
                    w_vmem,                # VMEM scratch: (Dp, Cp) bf16 (single-buffered weight)
                    w_sem,                 # DMA sem: (1,)
                    acc_ref):              # VMEM scratch: (Bp, Dp) f32 per-bag mean accumulator
    c = pl.program_id(0)
    nc = pl.num_programs(0)
    _, K, _ = rows_buf.shape
    Bp = acc_ref.shape[0]

    def start_row_fetches(chunk, slot):
        base = chunk * K
        for k in range(K):                              # static unroll: K gathers in flight
            tok = ids_ref[base + k]
            pltpu.make_async_copy(
                emb_hbm.at[pl.ds(tok, 1)],
                rows_buf.at[slot, pl.ds(k, 1)],
                row_sems.at[slot, k],
            ).start()

    @pl.when(c == 0)
    def _init():
        acc_ref[...] = jnp.zeros_like(acc_ref)
        # Classifier weight: a single HBM->VMEM copy, overlapped with the whole token loop.
        pltpu.make_async_copy(w_hbm, w_vmem, w_sem.at[0]).start()
        start_row_fetches(0, 0)

    slot = c & 1

    # Prefetch the next chunk's rows into the other buffer slot.
    @pl.when(c + 1 < nc)
    def _prefetch():
        start_row_fetches(c + 1, 1 - slot)

    # Wait for this chunk's K gathered rows.
    for k in range(K):
        pltpu.make_async_copy(
            emb_hbm.at[pl.ds(0, 1)],
            rows_buf.at[slot, pl.ds(k, 1)],
            row_sems.at[slot, k],
        ).wait()

    rows = rows_buf[slot]                               # (K, Dp) f32
    bag_vec = bag_ref[0]                                # (1, K) int32
    w_vec = tokw_ref[0]                                 # (1, K) f32
    row_iota = jax.lax.broadcasted_iota(jnp.int32, (Bp, K), 0)
    scatter = jnp.where(row_iota == bag_vec, w_vec, 0.0)          # (Bp, K) weighted one-hot
    # Segment-sum of the gathered rows on the MXU (f32): acc accumulates the per-bag mean.
    acc_ref[...] += jnp.dot(scatter, rows, preferred_element_type=jnp.float32)

    @pl.when(c == nc - 1)
    def _finalize():
        pltpu.make_async_copy(w_hbm, w_vmem, w_sem.at[0]).wait()
        x = acc_ref[...]                                          # EmbeddingBag(mode='mean')
        x = jnp.where(x >= 0.0, x, 0.1 * x)                       # LeakyReLU(0.1)
        # AvgPool1d(2,2) already folded into w; single bf16 MXU pass, f32 accumulation.
        out = jnp.dot(x.astype(jnp.bfloat16), w_vmem[...],
                      preferred_element_type=jnp.float32) + b_ref[...]
        out_ref[...] = out.astype(out_ref.dtype)


def fasttext_forward(text, offsets, emb_tbl, fc_w, fc_b, *, tokens_per_step=32):
    """text: (T,) int token ids; offsets: (B,) ascending bag starts (offsets[0]=0)."""
    T = int(text.shape[0])
    B = int(offsets.shape[0])
    V, D = emb_tbl.shape
    Dh, C = fc_w.shape

    if T == 0:
        # No tokens: every bag is empty -> mean 0 -> LeakyReLU(0)=0 -> output is the bias.
        return jnp.broadcast_to(fc_b.reshape(1, C).astype(jnp.float32), (B, C))

    K = int(tokens_per_step)
    Bp = _round_up(B, 8)            # full sublane tiles for accumulator / output
    Dp = _round_up(D, 128)          # lane-dense embedding rows
    Cp = _round_up(C, 128)          # lane-dense (unmasked) output store
    num_chunks = -(-T // K)
    T_pad = num_chunks * K

    # ---- plain-JAX prep: O(T + B + D*C), plus a one-time lane-pad of the table ----
    text = jnp.clip(text.astype(jnp.int32), 0, V - 1)
    tok_pos = jnp.arange(T, dtype=offsets.dtype)
    bag_of_tok = jnp.searchsorted(offsets, tok_pos, side="right").astype(jnp.int32) - 1
    bag_of_tok = jnp.clip(bag_of_tok, 0, B - 1)
    counts = jnp.zeros((B,), jnp.float32).at[bag_of_tok].add(1.0)
    inv_counts = 1.0 / jnp.maximum(counts, 1.0)         # empty bag -> zero row -> bias-only output
    tok_w = inv_counts[bag_of_tok]                      # EmbeddingBag mean folded per token

    pad = T_pad - T
    text_pad = jnp.pad(text, (0, pad))                  # padded ids -> row 0 (valid address)
    bag_pad = jnp.pad(bag_of_tok, (0, pad))
    tokw_pad = jnp.pad(tok_w, (0, pad))                 # zero weight -> padding contributes nothing
    bag_chunks = bag_pad.reshape(num_chunks, 1, K)
    tokw_chunks = tokw_pad.reshape(num_chunks, 1, K)

    # Embedding rows stay f32 (gathered straight from HBM); lane-pad feature dim to Dp.
    emb_pad = jnp.zeros((V, Dp), jnp.float32).at[:, :D].set(emb_tbl.astype(jnp.float32))

    # Fold AvgPool1d(kernel=2, stride=2) into the Linear weight: W'[i,c] = 0.5*W[i//2,c].
    # (Odd D: AvgPool drops the trailing feature -> it simply stays zero in w_pad.)
    w_fold = 0.5 * jnp.repeat(fc_w, 2, axis=0)          # (2*Dh, C)
    w_pad = jnp.zeros((Dp, Cp), jnp.bfloat16).at[:2 * Dh, :C].set(w_fold.astype(jnp.bfloat16))
    b_pad = jnp.zeros((1, Cp), jnp.float32).at[:, :C].set(fc_b.reshape(1, C).astype(jnp.float32))

    grid_spec = pltpu.PrefetchScalarGridSpec(
        num_scalar_prefetch=1,                  # token ids -> SMEM (drive the gather DMAs)
        grid=(num_chunks,),
        in_specs=[
            pl.BlockSpec((1, 1, K), lambda c, ids: (c, 0, 0)),    # bag ids of this chunk
            pl.BlockSpec((1, 1, K), lambda c, ids: (c, 0, 0)),    # per-token mean weights
            pl.BlockSpec(memory_space=pl.ANY),                    # embedding table (HBM)
            pl.BlockSpec(memory_space=pl.ANY),                    # classifier weight (HBM)
            pl.BlockSpec((1, Cp), lambda c, ids: (0, 0)),         # bias
        ],
        out_specs=pl.BlockSpec((Bp, Cp), lambda c, ids: (0, 0)),
        scratch_shapes=[
            pltpu.VMEM((2, K, Dp), jnp.float32),       # double-buffered gathered rows
            pltpu.SemaphoreType.DMA((2, K)),
            pltpu.VMEM((Dp, Cp), jnp.bfloat16),        # single-buffered classifier weight
            pltpu.SemaphoreType.DMA((1,)),
            pltpu.VMEM((Bp, Dp), jnp.float32),         # per-bag mean accumulator
        ],
    )

    out_pad = pl.pallas_call(
        fasttext_kernel,
        out_shape=jax.ShapeDtypeStruct((Bp, Cp), jnp.float32),
        grid_spec=grid_spec,
        compiler_params=pltpu.CompilerParams(
            dimension_semantics=("arbitrary",),        # sequential accumulation over token chunks
            vmem_limit_bytes=64 * 1024 * 1024,
        ),
    )(text_pad, bag_chunks, tokw_chunks, emb_pad, w_pad, b_pad)

    # TODO(synk): on v7x, tile a large class count over a leading "parallel" grid axis to use
    # the second TensorCore; for very long documents chunk the scalar-prefetched id stream.
    return out_pad[:B, :C]


def reference_forward(text, offsets, emb_tbl, fc_w, fc_b):
    """Pure-JAX f32 reference matching PyTorch semantics."""
    T = text.shape[0]
    B = offsets.shape[0]
    ends = jnp.concatenate([offsets[1:], jnp.array([T], dtype=offsets.dtype)])
    rows = emb_tbl[text]                                # (T, D)
    outs = []
    for b in range(B):
        s, e = int(offsets[b]), int(ends[b])
        outs.append(rows[s:e].mean(axis=0))
    emb_bag = jnp.stack(outs)                           # (B, D)
    x = jnp.where(emb_bag >= 0, emb_bag, 0.1 * emb_bag)  # LeakyReLU(0.1)
    pooled = 0.5 * (x[:, 0::2] + x[:, 1::2])            # AvgPool1d(2, 2)
    return pooled @ fc_w + fc_b                         # Linear


if __name__ == "__main__":
    # Small synthetic config consistent with the module:
    #   vocab V=64, embedding_dim D=32, num_labels C=8, B=4 bags over T=100 tokens.
    V, D, C = 64, 32, 8
    B, T = 4, 100

    key = jax.random.PRNGKey(0)
    k_emb, k_w, k_b, k_txt = jax.random.split(key, 4)

    # Deterministic parameter init (shapes per nn.EmbeddingBag / nn.Linear).
    emb_tbl = jax.random.normal(k_emb, (V, D), dtype=jnp.float32)            # EmbeddingBag weight
    bound = 1.0 / (D // 2) ** 0.5
    fc_w = jax.random.uniform(k_w, (D // 2, C), jnp.float32, -bound, bound)  # Linear weight (transposed)
    fc_b = jax.random.uniform(k_b, (1, C), jnp.float32, -bound, bound)       # Linear bias

    # Inputs: flat token ids + bag offsets (EmbeddingBag calling convention).
    text = jax.random.randint(k_txt, (T,), 0, V, dtype=jnp.int32)
    offsets = jnp.array([0, 30, 55, 81], dtype=jnp.int32)

    out = fasttext_forward(text, offsets, emb_tbl, fc_w, fc_b, tokens_per_step=32)
    out = jax.block_until_ready(out)

    ref = reference_forward(text, offsets, emb_tbl, fc_w, fc_b)
    assert out.shape == (B, C)
    # f32 gather/mean; only the classifier matmul is bf16 (f32 accumulate) -> tight-ish tol.
    assert jnp.allclose(out, ref, atol=2e-2, rtol=2e-2), "mismatch vs reference"

    print("KERNEL_OK")
</pallas_src>

<mosaic_0001>
module attributes {stable_mosaic.version = 11 : i64} {
  func.func @fasttext_kernel(%arg0: i32, %arg1: memref<128xi32, #tpu.memory_space<smem>>, %arg2: memref<1x1x32xi32, #tpu.memory_space<vmem>>, %arg3: memref<1x1x32xf32, #tpu.memory_space<vmem>>, %arg4: memref<64x128xf32, #tpu.memory_space<any>>, %arg5: memref<128x128xbf16, #tpu.memory_space<any>>, %arg6: memref<1x128xf32, #tpu.memory_space<vmem>>, %arg7: memref<8x128xf32, #tpu.memory_space<vmem>>, %arg8: memref<2x32x128xf32, #tpu.memory_space<vmem>>, %arg9: memref<2x32x!tpu.dma_semaphore, #tpu.memory_space<semaphore_mem>>, %arg10: memref<128x128xbf16, #tpu.memory_space<vmem>>, %arg11: memref<1x!tpu.dma_semaphore, #tpu.memory_space<semaphore_mem>>, %arg12: memref<8x128xf32, #tpu.memory_space<vmem>>) attributes {dimension_semantics = [#tpu.dimension_semantics<arbitrary>], iteration_bounds = array<i64: 4>, scalar_prefetch = 1 : i64, scratch_operands = 5 : i64, tpu.core_type = #tpu.core_type<tc>, window_params = [{transform_indices = @transform_0, window_bounds = array<i64: 1, 1, 32>}, {transform_indices = @transform_1, window_bounds = array<i64: 1, 1, 32>}, {}, {}, {pipeline_mode = #tpu.pipeline_mode<synchronous>, transform_indices = @transform_4, window_bounds = array<i64: 1, 128>}, {pipeline_mode = #tpu.pipeline_mode<synchronous>, transform_indices = @transform_5, window_bounds = array<i64: 8, 128>}]} {
    %c0_i32 = arith.constant 0 : i32
    %0 = arith.cmpi eq, %arg0, %c0_i32 : i32
    %1 = arith.extui %0 : i1 to i32
    %c0_i32_0 = arith.constant 0 : i32
    %2 = arith.cmpi ne, %1, %c0_i32_0 : i32
    scf.if %2 {
      %cst_148 = arith.constant 0.000000e+00 : f32
      %189 = vector.broadcast %cst_148 : f32 to vector<8x128xf32>
      %c0_149 = arith.constant 0 : index
      %c0_150 = arith.constant 0 : index
      %190 = vector.load %arg12[%c0_149, %c0_150] : memref<8x128xf32, #tpu.memory_space<vmem>>, vector<8x128xf32>
      tpu.vector_store %arg12[%c0_149, %c0_150], %189 {strides = array<i32>} : memref<8x128xf32, #tpu.memory_space<vmem>>, vector<8x128xf32>,
      %c0_i32_151 = arith.constant 0 : i32
      %191 = tpu.memref_slice %arg11[%c0_i32_151] : memref<1x!tpu.dma_semaphore, #tpu.memory_space<semaphore_mem>> -> memref<1x!tpu.dma_semaphore, #tpu.memory_space<semaphore_mem>>
      %192 = tpu.memref_squeeze %191 : memref<1x!tpu.dma_semaphore, #tpu.memory_space<semaphore_mem>> -> memref<!tpu.dma_semaphore, #tpu.memory_space<semaphore_mem>>
      tpu.enqueue_dma source(%arg5 : memref<128x128xbf16, #tpu.memory_space<any>>) target(%arg10 : memref<128x128xbf16, #tpu.memory_space<vmem>>) target_semaphore(%192 : memref<!tpu.dma_semaphore, #tpu.memory_space<semaphore_mem>>)
      %c0_152 = arith.constant 0 : index
      %193 = memref.load %arg1[%c0_152] : memref<128xi32, #tpu.memory_space<smem>>
      %c0_i32_153 = arith.constant 0 : i32
      %c0_i32_154 = arith.constant 0 : i32
      %c0_i32_155 = arith.constant 0 : i32
      %c0_i32_156 = arith.constant 0 : i32
      %194 = tpu.memref_slice %arg4[%193, %c0_i32_156] : memref<64x128xf32, #tpu.memory_space<any>> -> memref<1x128xf32, #tpu.memory_space<any>>
      %c0_i32_157 = arith.constant 0 : i32
      %c0_i32_158 = arith.constant 0 : i32
      %195 = tpu.memref_slice %arg8[%c0_i32_153, %c0_i32_157, %c0_i32_158] : memref<2x32x128xf32, #tpu.memory_space<vmem>> -> memref<1x1x128xf32, #tpu.memory_space<vmem>>
      %196 = tpu.memref_squeeze %195 : memref<1x1x128xf32, #tpu.memory_space<vmem>> -> memref<1x128xf32, #tpu.memory_space<vmem>>
      %197 = tpu.memref_slice %arg9[%c0_i32_154, %c0_i32_155] : memref<2x32x!tpu.dma_semaphore, #tpu.memory_space<semaphore_mem>> -> memref<1x1x!tpu.dma_semaphore, #tpu.memory_space<semaphore_mem>>
      %198 = tpu.memref_squeeze %197 : memref<1x1x!tpu.dma_semaphore, #tpu.memory_space<semaphore_mem>> -> memref<!tpu.dma_semaphore, #tpu.memory_space<semaphore_mem>>
      tpu.enqueue_dma source(%194 : memref<1x128xf32, #tpu.memory_space<any>>) target(%196 : memref<1x128xf32, #tpu.memory_space<vmem>>) target_semaphore(%198 : memref<!tpu.dma_semaphore, #tpu.memory_space<semaphore_mem>>)
      %c1 = arith.constant 1 : index
      %199 = memref.load %arg1[%c1] : memref<128xi32, #tpu.memory_space<smem>>
      %c0_i32_159 = arith.constant 0 : i32
      %c0_i32_160 = arith.constant 0 : i32
      %c1_i32_161 = arith.constant 1 : i32
      %c0_i32_162 = arith.constant 0 : i32
      %200 = tpu.memref_slice %arg4[%199, %c0_i32_162] : memref<64x128xf32, #tpu.memory_space<any>> -> memref<1x128xf32, #tpu.memory_space<any>>
      %c1_i32_163 = arith.constant 1 : i32
      %c0_i32_164 = arith.constant 0 : i32
      %201 = tpu.memref_slice %arg8[%c0_i32_159, %c1_i32_163, %c0_i32_164] : memref<2x32x128xf32, #tpu.memory_space<vmem>> -> memref<1x1x128xf32, #tpu.memory_space<vmem>>
      %202 = tpu.memref_squeeze %201 : memref<1x1x128xf32, #tpu.memory_space<vmem>> -> memref<1x128xf32, #tpu.memory_space<vmem>>
      %203 = tpu.memref_slice %arg9[%c0_i32_160, %c1_i32_161] : memref<2x32x!tpu.dma_semaphore, #tpu.memory_space<semaphore_mem>> -> memref<1x1x!tpu.dma_semaphore, #tpu.memory_space<semaphore_mem>>
      %204 = tpu.memref_squeeze %203 : memref<1x1x!tpu.dma_semaphore, #tpu.memory_space<semaphore_mem>> -> memref<!tpu.dma_semaphore, #tpu.memory_space<semaphore_mem>>
      tpu.enqueue_dma source(%200 : memref<1x128xf32, #tpu.memory_space<any>>) target(%202 : memref<1x128xf32, #tpu.memory_space<vmem>>) target_semaphore(%204 : memref<!tpu.dma_semaphore, #tpu.memory_space<semaphore_mem>>)
      %c2 = arith.constant 2 : index
      %205 = memref.load %arg1[%c2] : memref<128xi32, #tpu.memory_space<smem>>
      %c0_i32_165 = arith.constant 0 : i32
      %c0_i32_166 = arith.constant 0 : i32
      %c2_i32_167 = arith.constant 2 : i32
      %c0_i32_168 = arith.constant 0 : i32
      %206 = tpu.memref_slice %arg4[%205, %c0_i32_168] : memref<64x128xf32, #tpu.memory_space<any>> -> memref<1x128xf32, #tpu.memory_space<any>>
      %c2_i32_169 = arith.constant 2 : i32
      %c0_i32_170 = arith.constant 0 : i32
      %207 = tpu.memref_slice %arg8[%c0_i32_165, %c2_i32_169, %c0_i32_170] : memref<2x32x128xf32, #tpu.memory_space<vmem>> -> memref<1x1x128xf32, #tpu.memory_space<vmem>>
      %208 = tpu.memref_squeeze %207 : memref<1x1x128xf32, #tpu.memory_space<vmem>> -> memref<1x128xf32, #tpu.memory_space<vmem>>
      %209 = tpu.memref_slice %arg9[%c0_i32_166, %c2_i32_167] : memref<2x32x!tpu.dma_semaphore, #tpu.memory_space<semaphore_mem>> -> memref<1x1x!tpu.dma_semaphore, #tpu.memory_space<semaphore_mem>>
      %210 = tpu.memref_squeeze %209 : memref<1x1x!tpu.dma_semaphore, #tpu.memory_space<semaphore_mem>> -> memref<!tpu.dma_semaphore, #tpu.memory_space<semaphore_mem>>
      tpu.enqueue_dma source(%206 : memref<1x128xf32, #tpu.memory_space<any>>) target(%208 : memref<1x128xf32, #tpu.memory_space<vmem>>) target_semaphore(%210 : memref<!tpu.dma_semaphore, #tpu.memory_space<semaphore_mem>>)
      %c3 = arith.constant 3 : index
      %211 = memref.load %arg1[%c3] : memref<128xi32, #tpu.memory_space<smem>>
      %c0_i32_171 = arith.constant 0 : i32
      %c0_i32_172 = arith.constant 0 : i32
      %c3_i32_173 = arith.constant 3 : i32
      %c0_i32_174 = arith.constant 0 : i32
      %212 = tpu.memref_slice %arg4[%211, %c0_i32_174] : memref<64x128xf32, #tpu.memory_space<any>> -> memref<1x128xf32, #tpu.memory_space<any>>
      %c3_i32_175 = arith.constant 3 : i32
      %c0_i32_176 = arith.constant 0 : i32
      %213 = tpu.memref_slice %arg8[%c0_i32_171, %c3_i32_175, %c0_i32_176] : memref<2x32x128xf32, #tpu.memory_space<vmem>> -> memref<1x1x128xf32, #tpu.memory_space<vmem>>
      %214 = tpu.memref_squeeze %213 : memref<1x1x128xf32, #tpu.memory_space<vmem>> -> memref<1x128xf32, #tpu.memory_space<vmem>>
      %215 = tpu.memref_slice %arg9[%c0_i32_172, %c3_i32_173] : memref<2x32x!tpu.dma_semaphore, #tpu.memory_space<semaphore_mem>> -> memref<1x1x!tpu.dma_semaphore, #tpu.memory_space<semaphore_mem>>
      %216 = tpu.memref_squeeze %215 : memref<1x1x!tpu.dma_semaphore, #tpu.memory_space<semaphore_mem>> -> memref<!tpu.dma_semaphore, #tpu.memory_space<semaphore_mem>>
      tpu.enqueue_dma source(%212 : memref<1x128xf32, #tpu.memory_space<any>>) target(%214 : memref<1x128xf32, #tpu.memory_space<vmem>>) target_semaphore(%216 : memref<!tpu.dma_semaphore, #tpu.memory_space<semaphore_mem>>)
      %c4 = arith.constant 4 : index
      %217 = memref.load %arg1[%c4] : memref<128xi32, #tpu.memory_space<smem>>
      %c0_i32_177 = arith.constant 0 : i32
      %c0_i32_178 = arith.constant 0 : i32
      %c4_i32_179 = arith.constant 4 : i32
      %c0_i32_180 = arith.constant 0 : i32
      %218 = tpu.memref_slice %arg4[%217, %c0_i32_180] : memref<64x128xf32, #tpu.memory_space<any>> -> memref<1x128xf32, #tpu.memory_space<any>>
      %c4_i32_181 = arith.constant 4 : i32
      %c0_i32_182 = arith.constant 0 : i32
      %219 = tpu.memref_slice %arg8[%c0_i32_177, %c4_i32_181, %c0_i32_182] : memref<2x32x128xf32, #tpu.memory_space<vmem>> -> memref<1x1x128xf32, #tpu.memory_space<vmem>>
      %220 = tpu.memref_squeeze %219 : memref<1x1x128xf32, #tpu.memory_space<vmem>> -> memref<1x128xf32, #tpu.memory_space<vmem>>
      %221 = tpu.memref_slice %arg9[%c0_i32_178, %c4_i32_179] : memref<2x32x!tpu.dma_semaphore, #tpu.memory_space<semaphore_mem>> -> memref<1x1x!tpu.dma_semaphore, #tpu.memory_space<semaphore_mem>>
      %222 = tpu.memref_squeeze %221 : memref<1x1x!tpu.dma_semaphore, #tpu.memory_space<semaphore_mem>> -> memref<!tpu.dma_semaphore, #tpu.memory_space<semaphore_mem>>
      tpu.enqueue_dma source(%218 : memref<1x128xf32, #tpu.memory_space<any>>) target(%220 : memref<1x128xf32, #tpu.memory_space<vmem>>) target_semaphore(%222 : memref<!tpu.dma_semaphore, #tpu.memory_space<semaphore_mem>>)
      %c5 = arith.constant 5 : index
      %223 = memref.load %arg1[%c5] : memref<128xi32, #tpu.memory_space<smem>>
      %c0_i32_183 = arith.constant 0 : i32
      %c0_i32_184 = arith.constant 0 : i32
      %c5_i32_185 = arith.constant 5 : i32
      %c0_i32_186 = arith.constant 0 : i32
      %224 = tpu.memref_slice %arg4[%223, %c0_i32_186] : memref<64x128xf32, #tpu.memory_space<any>> -> memref<1x128xf32, #tpu.memory_space<any>>
      %c5_i32_187 = arith.constant 5 : i32
      %c0_i32_188 = arith.constant 0 : i32
      %225 = tpu.memref_slice %arg8[%c0_i32_183, %c5_i32_187, %c0_i32_188] : memref<2x32x128xf32, #tpu.memory_space<vmem>> -> memref<1x1x128xf32, #tpu.memory_space<vmem>>
      %226 = tpu.memref_squeeze %225 : memref<1x1x128xf32, #tpu.memory_space<vmem>> -> memref<1x128xf32, #tpu.memory_space<vmem>>
      %227 = tpu.memref_slice %arg9[%c0_i32_184, %c5_i32_185] : memref<2x32x!tpu.dma_semaphore, #tpu.memory_space<semaphore_mem>> -> memref<1x1x!tpu.dma_semaphore, #tpu.memory_space<semaphore_mem>>
      %228 = tpu.memref_squeeze %227 : memref<1x1x!tpu.dma_semaphore, #tpu.memory_space<semaphore_mem>> -> memref<!tpu.dma_semaphore, #tpu.memory_space<semaphore_mem>>
      tpu.enqueue_dma source(%224 : memref<1x128xf32, #tpu.memory_space<any>>) target(%226 : memref<1x128xf32, #tpu.memory_space<vmem>>) target_semaphore(%228 : memref<!tpu.dma_semaphore, #tpu.memory_space<semaphore_mem>>)
      %c6 = arith.constant 6 : index
      %229 = memref.load %arg1[%c6] : memref<128xi32, #tpu.memory_space<smem>>
      %c0_i32_189 = arith.constant 0 : i32
      %c0_i32_190 = arith.constant 0 : i32
      %c6_i32_191 = arith.constant 6 : i32
      %c0_i32_192 = arith.constant 0 : i32
      %230 = tpu.memref_slice %arg4[%229, %c0_i32_192] : memref<64x128xf32, #tpu.memory_space<any>> -> memref<1x128xf32, #tpu.memory_space<any>>
      %c6_i32_193 = arith.constant 6 : i32
      %c0_i32_194 = arith.constant 0 : i32
      %231 = tpu.memref_slice %arg8[%c0_i32_189, %c6_i32_193, %c0_i32_194] : memref<2x32x128xf32, #tpu.memory_space<vmem>> -> memref<1x1x128xf32, #tpu.memory_space<vmem>>
      %232 = tpu.memref_squeeze %231 : memref<1x1x128xf32, #tpu.memory_space<vmem>> -> memref<1x128xf32, #tpu.memory_space<vmem>>
      %233 = tpu.memref_slice %arg9[%c0_i32_190, %c6_i32_191] : memref<2x32x!tpu.dma_semaphore, #tpu.memory_space<semaphore_mem>> -> memref<1x1x!tpu.dma_semaphore, #tpu.memory_space<semaphore_mem>>
      %234 = tpu.memref_squeeze %233 : memref<1x1x!tpu.dma_semaphore, #tpu.memory_space<semaphore_mem>> -> memref<!tpu.dma_semaphore, #tpu.memory_space<semaphore_mem>>
      tpu.enqueue_dma source(%230 : memref<1x128xf32, #tpu.memory_space<any>>) target(%232 : memref<1x128xf32, #tpu.memory_space<vmem>>) target_semaphore(%234 : memref<!tpu.dma_semaphore, #tpu.memory_space<semaphore_mem>>)
      %c7 = arith.constant 7 : index
      %235 = memref.load %arg1[%c7] : memref<128xi32, #tpu.memory_space<smem>>
      %c0_i32_195 = arith.constant 0 : i32
      %c0_i32_196 = arith.constant 0 : i32
      %c7_i32_197 = arith.constant 7 : i32
      %c0_i32_198 = arith.constant 0 : i32
      %236 = tpu.memref_slice %arg4[%235, %c0_i32_198] : memref<64x128xf32, #tpu.memory_space<any>> -> memref<1x128xf32, #tpu.memory_space<any>>
      %c7_i32_199 = arith.constant 7 : i32
      %c0_i32_200 = arith.constant 0 : i32
      %237 = tpu.memref_slice %arg8[%c0_i32_195, %c7_i32_199, %c0_i32_200] : memref<2x32x128xf32, #tpu.memory_space<vmem>> -> memref<1x1x128xf32, #tpu.memory_space<vmem>>
      %238 = tpu.memref_squeeze %237 : memref<1x1x128xf32, #tpu.memory_space<vmem>> -> memref<1x128xf32, #tpu.memory_space<vmem>>
      %239 = tpu.memref_slice %arg9[%c0_i32_196, %c7_i32_197] : memref<2x32x!tpu.dma_semaphore, #tpu.memory_space<semaphore_mem>> -> memref<1x1x!tpu.dma_semaphore, #tpu.memory_space<semaphore_mem>>
      %240 = tpu.memref_squeeze %239 : memref<1x1x!tpu.dma_semaphore, #tpu.memory_space<semaphore_mem>> -> memref<!tpu.dma_semaphore, #tpu.memory_space<semaphore_mem>>
      tpu.enqueue_dma source(%236 : memref<1x128xf32, #tpu.memory_space<any>>) target(%238 : memref<1x128xf32, #tpu.memory_space<vmem>>) target_semaphore(%240 : memref<!tpu.dma_semaphore, #tpu.memory_space<semaphore_mem>>)
      %c8 = arith.constant 8 : index
      %241 = memref.load %arg1[%c8] : memref<128xi32, #tpu.memory_space<smem>>
      %c0_i32_201 = arith.constant 0 : i32
      %c0_i32_202 = arith.constant 0 : i32
      %c8_i32_203 = arith.constant 8 : i32
      %c0_i32_204 = arith.constant 0 : i32
      %242 = tpu.memref_slice %arg4[%241, %c0_i32_204] : memref<64x128xf32, #tpu.memory_space<any>> -> memref<1x128xf32, #tpu.memory_space<any>>
      %c8_i32_205 = arith.constant 8 : i32
      %c0_i32_206 = arith.constant 0 : i32
      %243 = tpu.memref_slice %arg8[%c0_i32_201, %c8_i32_205, %c0_i32_206] : memref<2x32x128xf32, #tpu.memory_space<vmem>> -> memref<1x1x128xf32, #tpu.memory_space<vmem>>
      %244 = tpu.memref_squeeze %243 : memref<1x1x128xf32, #tpu.memory_space<vmem>> -> memref<1x128xf32, #tpu.memory_space<vmem>>
      %245 = tpu.memref_slice %arg9[%c0_i32_202, %c8_i32_203] : memref<2x32x!tpu.dma_semaphore, #tpu.memory_space<semaphore_mem>> -> memref<1x1x!tpu.dma_semaphore, #tpu.memory_space<semaphore_mem>>
      %246 = tpu.memref_squeeze %245 : memref<1x1x!tpu.dma_semaphore, #tpu.memory_space<semaphore_mem>> -> memref<!tpu.dma_semaphore, #tpu.memory_space<semaphore_mem>>
      tpu.enqueue_dma source(%242 : memref<1x128xf32, #tpu.memory_space<any>>) target(%244 : memref<1x128xf32, #tpu.memory_space<vmem>>) target_semaphore(%246 : memref<!tpu.dma_semaphore, #tpu.memory_space<semaphore_mem>>)
      %c9 = arith.constant 9 : index
      %247 = memref.load %arg1[%c9] : memref<128xi32, #tpu.memory_space<smem>>
      %c0_i32_207 = arith.constant 0 : i32
      %c0_i32_208 = arith.constant 0 : i32
      %c9_i32_209 = arith.constant 9 : i32
      %c0_i32_210 = arith.constant 0 : i32
      %248 = tpu.memref_slice %arg4[%247, %c0_i32_210] : memref<64x128xf32, #tpu.memory_space<any>> -> memref<1x128xf32, #tpu.memory_space<any>>
      %c9_i32_211 = arith.constant 9 : i32
      %c0_i32_212 = arith.constant 0 : i32
      %249 = tpu.memref_slice %arg8[%c0_i32_207, %c9_i32_211, %c0_i32_212] : memref<2x32x128xf32, #tpu.memory_space<vmem>> -> memref<1x1x128xf32, #tpu.memory_space<vmem>>
      %250 = tpu.memref_squeeze %249 : memref<1x1x128xf32, #tpu.memory_space<vmem>> -> memref<1x128xf32, #tpu.memory_space<vmem>>
      %251 = tpu.memref_slice %arg9[%c0_i32_208, %c9_i32_209] : memref<2x32x!tpu.dma_semaphore, #tpu.memory_space<semaphore_mem>> -> memref<1x1x!tpu.dma_semaphore, #tpu.memory_space<semaphore_mem>>
      %252 = tpu.memref_squeeze %251 : memref<1x1x!tpu.dma_semaphore, #tpu.memory_space<semaphore_mem>> -> memref<!tpu.dma_semaphore, #tpu.memory_space<semaphore_mem>>
      tpu.enqueue_dma source(%248 : memref<1x128xf32, #tpu.memory_space<any>>) target(%250 : memref<1x128xf32, #tpu.memory_space<vmem>>) target_semaphore(%252 : memref<!tpu.dma_semaphore, #tpu.memory_space<semaphore_mem>>)
      %c10 = arith.constant 10 : index
      %253 = memref.load %arg1[%c10] : memref<128xi32, #tpu.memory_space<smem>>
      %c0_i32_213 = arith.constant 0 : i32
      %c0_i32_214 = arith.constant 0 : i32
      %c10_i32_215 = arith.constant 10 : i32
      %c0_i32_216 = arith.constant 0 : i32
      %254 = tpu.memref_slice %arg4[%253, %c0_i32_216] : memref<64x128xf32, #tpu.memory_space<any>> -> memref<1x128xf32, #tpu.memory_space<any>>
      %c10_i32_217 = arith.constant 10 : i32
      %c0_i32_218 = arith.constant 0 : i32
      %255 = tpu.memref_slice %arg8[%c0_i32_213, %c10_i32_217, %c0_i32_218] : memref<2x32x128xf32, #tpu.memory_space<vmem>> -> memref<1x1x128xf32, #tpu.memory_space<vmem>>
      %256 = tpu.memref_squeeze %255 : memref<1x1x128xf32, #tpu.memory_space<vmem>> -> memref<1x128xf32, #tpu.memory_space<vmem>>
      %257 = tpu.memref_slice %arg9[%c0_i32_214, %c10_i32_215] : memref<2x32x!tpu.dma_semaphore, #tpu.memory_space<semaphore_mem>> -> memref<1x1x!tpu.dma_semaphore, #tpu.memory_space<semaphore_mem>>
      %258 = tpu.memref_squeeze %257 : memref<1x1x!tpu.dma_semaphore, #tpu.memory_space<semaphore_mem>> -> memref<!tpu.dma_semaphore, #tpu.memory_space<semaphore_mem>>
      tpu.enqueue_dma source(%254 : memref<1x128xf32, #tpu.memory_space<any>>) target(%256 : memref<1x128xf32, #tpu.memory_space<vmem>>) target_semaphore(%258 : memref<!tpu.dma_semaphore, #tpu.memory_space<semaphore_mem>>)
      %c11 = arith.constant 11 : index
      %259 = memref.load %arg1[%c11] : memref<128xi32, #tpu.memory_space<smem>>
      %c0_i32_219 = arith.constant 0 : i32
      %c0_i32_220 = arith.constant 0 : i32
      %c11_i32_221 = arith.constant 11 : i32
      %c0_i32_222 = arith.constant 0 : i32
      %260 = tpu.memref_slice %arg4[%259, %c0_i32_222] : memref<64x128xf32, #tpu.memory_space<any>> -> memref<1x128xf32, #tpu.memory_space<any>>
      %c11_i32_223 = arith.constant 11 : i32
      %c0_i32_224 = arith.constant 0 : i32
      %261 = tpu.memref_slice %arg8[%c0_i32_219, %c11_i32_223, %c0_i32_224] : memref<2x32x128xf32, #tpu.memory_space<vmem>> -> memref<1x1x128xf32, #tpu.memory_space<vmem>>
      %262 = tpu.memref_squeeze %261 : memref<1x1x128xf32, #tpu.memory_space<vmem>> -> memref<1x128xf32, #tpu.memory_space<vmem>>
      %263 = tpu.memref_slice %arg9[%c0_i32_220, %c11_i32_221] : memref<2x32x!tpu.dma_semaphore, #tpu.memory_space<semaphore_mem>> -> memref<1x1x!tpu.dma_semaphore, #tpu.memory_space<semaphore_mem>>
      %264 = tpu.memref_squeeze %263 : memref<1x1x!tpu.dma_semaphore, #tpu.memory_space<semaphore_mem>> -> memref<!tpu.dma_semaphore, #tpu.memory_space<semaphore_mem>>
      tpu.enqueue_dma source(%260 : memref<1x128xf32, #tpu.memory_space<any>>) target(%262 : memref<1x128xf32, #tpu.memory_space<vmem>>) target_semaphore(%264 : memref<!tpu.dma_semaphore, #tpu.memory_space<semaphore_mem>>)
      %c12 = arith.constant 12 : index
      %265 = memref.load %arg1[%c12] : memref<128xi32, #tpu.memory_space<smem>>
      %c0_i32_225 = arith.constant 0 : i32
      %c0_i32_226 = arith.constant 0 : i32
      %c12_i32_227 = arith.constant 12 : i32
      %c0_i32_228 = arith.constant 0 : i32
      %266 = tpu.memref_slice %arg4[%265, %c0_i32_228] : memref<64x128xf32, #tpu.memory_space<any>> -> memref<1x128xf32, #tpu.memory_space<any>>
      %c12_i32_229 = arith.constant 12 : i32
      %c0_i32_230 = arith.constant 0 : i32
      %267 = tpu.memref_slice %arg8[%c0_i32_225, %c12_i32_229, %c0_i32_230] : memref<2x32x128xf32, #tpu.memory_space<vmem>> -> memref<1x1x128xf32, #tpu.memory_space<vmem>>
      %268 = tpu.memref_squeeze %267 : memref<1x1x128xf32, #tpu.memory_space<vmem>> -> memref<1x128xf32, #tpu.memory_space<vmem>>
      %269 = tpu.memref_slice %arg9[%c0_i32_226, %c12_i32_227] : memref<2x32x!tpu.dma_semaphore, #tpu.memory_space<semaphore_mem>> -> memref<1x1x!tpu.dma_semaphore, #tpu.memory_space<semaphore_mem>>
      %270 = tpu.memref_squeeze %269 : memref<1x1x!tpu.dma_semaphore, #tpu.memory_space<semaphore_mem>> -> memref<!tpu.dma_semaphore, #tpu.memory_space<semaphore_mem>>
      tpu.enqueue_dma source(%266 : memref<1x128xf32, #tpu.memory_space<any>>) target(%268 : memref<1x128xf32, #tpu.memory_space<vmem>>) target_semaphore(%270 : memref<!tpu.dma_semaphore, #tpu.memory_space<semaphore_mem>>)
      %c13 = arith.constant 13 : index
      %271 = memref.load %arg1[%c13] : memref<128xi32, #tpu.memory_space<smem>>
      %c0_i32_231 = arith.constant 0 : i32
      %c0_i32_232 = arith.constant 0 : i32
      %c13_i32_233 = arith.constant 13 : i32
      %c0_i32_234 = arith.constant 0 : i32
      %272 = tpu.memref_slice %arg4[%271, %c0_i32_234] : memref<64x128xf32, #tpu.memory_space<any>> -> memref<1x128xf32, #tpu.memory_space<any>>
      %c13_i32_235 = arith.constant 13 : i32
      %c0_i32_236 = arith.constant 0 : i32
      %273 = tpu.memref_slice %arg8[%c0_i32_231, %c13_i32_235, %c0_i32_236] : memref<2x32x128xf32, #tpu.memory_space<vmem>> -> memref<1x1x128xf32, #tpu.memory_space<vmem>>
      %274 = tpu.memref_squeeze %273 : memref<1x1x128xf32, #tpu.memory_space<vmem>> -> memref<1x128xf32, #tpu.memory_space<vmem>>
      %275 = tpu.memref_slice %arg9[%c0_i32_232, %c13_i32_233] : memref<2x32x!tpu.dma_semaphore, #tpu.memory_space<semaphore_mem>> -> memref<1x1x!tpu.dma_semaphore, #tpu.memory_space<semaphore_mem>>
      %276 = tpu.memref_squeeze %275 : memref<1x1x!tpu.dma_semaphore, #tpu.memory_space<semaphore_mem>> -> memref<!tpu.dma_semaphore, #tpu.memory_space<semaphore_mem>>
      tpu.enqueue_dma source(%272 : memref<1x128xf32, #tpu.memory_space<any>>) target(%274 : memref<1x128xf32, #tpu.memory_space<vmem>>) target_semaphore(%276 : memref<!tpu.dma_semaphore, #tpu.memory_space<semaphore_mem>>)
      %c14 = arith.constant 14 : index
      %277 = memref.load %arg1[%c14] : memref<128xi32, #tpu.memory_space<smem>>
      %c0_i32_237 = arith.constant 0 : i32
      %c0_i32_238 = arith.constant 0 : i32
      %c14_i32_239 = arith.constant 14 : i32
      %c0_i32_240 = arith.constant 0 : i32
      %278 = tpu.memref_slice %arg4[%277, %c0_i32_240] : memref<64x128xf32, #tpu.memory_space<any>> -> memref<1x128xf32, #tpu.memory_space<any>>
      %c14_i32_241 = arith.constant 14 : i32
      %c0_i32_242 = arith.constant 0 : i32
      %279 = tpu.memref_slice %arg8[%c0_i32_237, %c14_i32_241, %c0_i32_242] : memref<2x32x128xf32, #tpu.memory_space<vmem>> -> memref<1x1x128xf32, #tpu.memory_space<vmem>>
      %280 = tpu.memref_squeeze %279 : memref<1x1x128xf32, #tpu.memory_space<vmem>> -> memref<1x128xf32, #tpu.memory_space<vmem>>
      %281 = tpu.memref_slice %arg9[%c0_i32_238, %c14_i32_239] : memref<2x32x!tpu.dma_semaphore, #tpu.memory_space<semaphore_mem>> -> memref<1x1x!tpu.dma_semaphore, #tpu.memory_space<semaphore_mem>>
      %282 = tpu.memref_squeeze %281 : memref<1x1x!tpu.dma_semaphore, #tpu.memory_space<semaphore_mem>> -> memref<!tpu.dma_semaphore, #tpu.memory_space<semaphore_mem>>
      tpu.enqueue_dma source(%278 : memref<1x128xf32, #tpu.memory_space<any>>) target(%280 : memref<1x128xf32, #tpu.memory_space<vmem>>) target_semaphore(%282 : memref<!tpu.dma_semaphore, #tpu.memory_space<semaphore_mem>>)
      %c15 = arith.constant 15 : index
      %283 = memref.load %arg1[%c15] : memref<128xi32, #tpu.memory_space<smem>>
      %c0_i32_243 = arith.constant 0 : i32
      %c0_i32_244 = arith.constant 0 : i32
      %c15_i32_245 = arith.constant 15 : i32
      %c0_i32_246 = arith.constant 0 : i32
      %284 = tpu.memref_slice %arg4[%283, %c0_i32_246] : memref<64x128xf32, #tpu.memory_space<any>> -> memref<1x128xf32, #tpu.memory_space<any>>
      %c15_i32_247 = arith.constant 15 : i32
      %c0_i32_248 = arith.constant 0 : i32
      %285 = tpu.memref_slice %arg8[%c0_i32_243, %c15_i32_247, %c0_i32_248] : memref<2x32x128xf32, #tpu.memory_space<vmem>> -> memref<1x1x128xf32, #tpu.memory_space<vmem>>
      %286 = tpu.memref_squeeze %285 : memref<1x1x128xf32, #tpu.memory_space<vmem>> -> memref<1x128xf32, #tpu.memory_space<vmem>>
      %287 = tpu.memref_slice %arg9[%c0_i32_244, %c15_i32_245] : memref<2x32x!tpu.dma_semaphore, #tpu.memory_space<semaphore_mem>> -> memref<1x1x!tpu.dma_semaphore, #tpu.memory_space<semaphore_mem>>
      %288 = tpu.memref_squeeze %287 : memref<1x1x!tpu.dma_semaphore, #tpu.memory_space<semaphore_mem>> -> memref<!tpu.dma_semaphore, #tpu.memory_space<semaphore_mem>>
      tpu.enqueue_dma source(%284 : memref<1x128xf32, #tpu.memory_space<any>>) target(%286 : memref<1x128xf32, #tpu.memory_space<vmem>>) target_semaphore(%288 : memref<!tpu.dma_semaphore, #tpu.memory_space<semaphore_mem>>)
      %c16 = arith.constant 16 : index
      %289 = memref.load %arg1[%c16] : memref<128xi32, #tpu.memory_space<smem>>
      %c0_i32_249 = arith.constant 0 : i32
      %c0_i32_250 = arith.constant 0 : i32
      %c16_i32_251 = arith.constant 16 : i32
      %c0_i32_252 = arith.constant 0 : i32
      %290 = tpu.memref_slice %arg4[%289, %c0_i32_252] : memref<64x128xf32, #tpu.memory_space<any>> -> memref<1x128xf32, #tpu.memory_space<any>>
      %c16_i32_253 = arith.constant 16 : i32
      %c0_i32_254 = arith.constant 0 : i32
      %291 = tpu.memref_slice %arg8[%c0_i32_249, %c16_i32_253, %c0_i32_254] : memref<2x32x128xf32, #tpu.memory_space<vmem>> -> memref<1x1x128xf32, #tpu.memory_space<vmem>>
      %292 = tpu.memref_squeeze %291 : memref<1x1x128xf32, #tpu.memory_space<vmem>> -> memref<1x128xf32, #tpu.memory_space<vmem>>
      %293 = tpu.memref_slice %arg9[%c0_i32_250, %c16_i32_251] : memref<2x32x!tpu.dma_semaphore, #tpu.memory_space<semaphore_mem>> -> memref<1x1x!tpu.dma_semaphore, #tpu.memory_space<semaphore_mem>>
      %294 = tpu.memref_squeeze %293 : memref<1x1x!tpu.dma_semaphore, #tpu.memory_space<semaphore_mem>> -> memref<!tpu.dma_semaphore, #tpu.memory_space<semaphore_mem>>
      tpu.enqueue_dma source(%290 : memref<1x128xf32, #tpu.memory_space<any>>) target(%292 : memref<1x128xf32, #tpu.memory_space<vmem>>) target_semaphore(%294 : memref<!tpu.dma_semaphore, #tpu.memory_space<semaphore_mem>>)
      %c17 = arith.constant 17 : index
      %295 = memref.load %arg1[%c17] : memref<128xi32, #tpu.memory_space<smem>>
      %c0_i32_255 = arith.constant 0 : i32
      %c0_i32_256 = arith.constant 0 : i32
      %c17_i32_257 = arith.constant 17 : i32
      %c0_i32_258 = arith.constant 0 : i32
      %296 = tpu.memref_slice %arg4[%295, %c0_i32_258] : memref<64x128xf32, #tpu.memory_space<any>> -> memref<1x128xf32, #tpu.memory_space<any>>
      %c17_i32_259 = arith.constant 17 : i32
      %c0_i32_260 = arith.constant 0 : i32
      %297 = tpu.memref_slice %arg8[%c0_i32_255, %c17_i32_259, %c0_i32_260] : memref<2x32x128xf32, #tpu.memory_space<vmem>> -> memref<1x1x128xf32, #tpu.memory_space<vmem>>
      %298 = tpu.memref_squeeze %297 : memref<1x1x128xf32, #tpu.memory_space<vmem>> -> memref<1x128xf32, #tpu.memory_space<vmem>>
      %299 = tpu.memref_slice %arg9[%c0_i32_256, %c17_i32_257] : memref<2x32x!tpu.dma_semaphore, #tpu.memory_space<semaphore_mem>> -> memref<1x1x!tpu.dma_semaphore, #tpu.memory_space<semaphore_mem>>
      %300 = tpu.memref_squeeze %299 : memref<1x1x!tpu.dma_semaphore, #tpu.memory_space<semaphore_mem>> -> memref<!tpu.dma_semaphore, #tpu.memory_space<semaphore_mem>>
      tpu.enqueue_dma source(%296 : memref<1x128xf32, #tpu.memory_space<any>>) target(%298 : memref<1x128xf32, #tpu.memory_space<vmem>>) target_semaphore(%300 : memref<!tpu.dma_semaphore, #tpu.memory_space<semaphore_mem>>)
      %c18 = arith.constant 18 : index
      %301 = memref.load %arg1[%c18] : memref<128xi32, #tpu.memory_space<smem>>
      %c0_i32_261 = arith.constant 0 : i32
      %c0_i32_262 = arith.constant 0 : i32
      %c18_i32_263 = arith.constant 18 : i32
      %c0_i32_264 = arith.constant 0 : i32
      %302 = tpu.memref_slice %arg4[%301, %c0_i32_264] : memref<64x128xf32, #tpu.memory_space<any>> -> memref<1x128xf32, #tpu.memory_space<any>>
      %c18_i32_265 = arith.constant 18 : i32
      %c0_i32_266 = arith.constant 0 : i32
      %303 = tpu.memref_slice %arg8[%c0_i32_261, %c18_i32_265, %c0_i32_266] : memref<2x32x128xf32, #tpu.memory_space<vmem>> -> memref<1x1x128xf32, #tpu.memory_space<vmem>>
      %304 = tpu.memref_squeeze %303 : memref<1x1x128xf32, #tpu.memory_space<vmem>> -> memref<1x128xf32, #tpu.memory_space<vmem>>
      %305 = tpu.memref_slice %arg9[%c0_i32_262, %c18_i32_263] : memref<2x32x!tpu.dma_semaphore, #tpu.memory_space<semaphore_mem>> -> memref<1x1x!tpu.dma_semaphore, #tpu.memory_space<semaphore_mem>>
      %306 = tpu.memref_squeeze %305 : memref<1x1x!tpu.dma_semaphore, #tpu.memory_space<semaphore_mem>> -> memref<!tpu.dma_semaphore, #tpu.memory_space<semaphore_mem>>
      tpu.enqueue_dma source(%302 : memref<1x128xf32, #tpu.memory_space<any>>) target(%304 : memref<1x128xf32, #tpu.memory_space<vmem>>) target_semaphore(%306 : memref<!tpu.dma_semaphore, #tpu.memory_space<semaphore_mem>>)
      %c19 = arith.constant 19 : index
      %307 = memref.load %arg1[%c19] : memref<128xi32, #tpu.memory_space<smem>>
      %c0_i32_267 = arith.constant 0 : i32
      %c0_i32_268 = arith.constant 0 : i32
      %c19_i32_269 = arith.constant 19 : i32
      %c0_i32_270 = arith.constant 0 : i32
      %308 = tpu.memref_slice %arg4[%307, %c0_i32_270] : memref<64x128xf32, #tpu.memory_space<any>> -> memref<1x128xf32, #tpu.memory_space<any>>
      %c19_i32_271 = arith.constant 19 : i32
      %c0_i32_272 = arith.constant 0 : i32
      %309 = tpu.memref_slice %arg8[%c0_i32_267, %c19_i32_271, %c0_i32_272] : memref<2x32x128xf32, #tpu.memory_space<vmem>> -> memref<1x1x128xf32, #tpu.memory_space<vmem>>
      %310 = tpu.memref_squeeze %309 : memref<1x1x128xf32, #tpu.memory_space<vmem>> -> memref<1x128xf32, #tpu.memory_space<vmem>>
      %311 = tpu.memref_slice %arg9[%c0_i32_268, %c19_i32_269] : memref<2x32x!tpu.dma_semaphore, #tpu.memory_space<semaphore_mem>> -> memref<1x1x!tpu.dma_semaphore, #tpu.memory_space<semaphore_mem>>
      %312 = tpu.memref_squeeze %311 : memref<1x1x!tpu.dma_semaphore, #tpu.memory_space<semaphore_mem>> -> memref<!tpu.dma_semaphore, #tpu.memory_space<semaphore_mem>>
      tpu.enqueue_dma source(%308 : memref<1x128xf32, #tpu.memory_space<any>>) target(%310 : memref<1x128xf32, #tpu.memory_space<vmem>>) target_semaphore(%312 : memref<!tpu.dma_semaphore, #tpu.memory_space<semaphore_mem>>)
      %c20 = arith.constant 20 : index
      %313 = memref.load %arg1[%c20] : memref<128xi32, #tpu.memory_space<smem>>
      %c0_i32_273 = arith.constant 0 : i32
      %c0_i32_274 = arith.constant 0 : i32
      %c20_i32_275 = arith.constant 20 : i32
      %c0_i32_276 = arith.constant 0 : i32
      %314 = tpu.memref_slice %arg4[%313, %c0_i32_276] : memref<64x128xf32, #tpu.memory_space<any>> -> memref<1x128xf32, #tpu.memory_space<any>>
      %c20_i32_277 = arith.constant 20 : i32
      %c0_i32_278 = arith.constant 0 : i32
      %315 = tpu.memref_slice %arg8[%c0_i32_273, %c20_i32_277, %c0_i32_278] : memref<2x32x128xf32, #tpu.memory_space<vmem>> -> memref<1x1x128xf32, #tpu.memory_space<vmem>>
      %316 = tpu.memref_squeeze %315 : memref<1x1x128xf32, #tpu.memory_space<vmem>> -> memref<1x128xf32, #tpu.memory_space<vmem>>
      %317 = tpu.memref_slice %arg9[%c0_i32_274, %c20_i32_275] : memref<2x32x!tpu.dma_semaphore, #tpu.memory_space<semaphore_mem>> -> memref<1x1x!tpu.dma_semaphore, #tpu.memory_space<semaphore_mem>>
      %318 = tpu.memref_squeeze %317 : memref<1x1x!tpu.dma_semaphore, #tpu.memory_space<semaphore_mem>> -> memref<!tpu.dma_semaphore, #tpu.memory_space<semaphore_mem>>
      tpu.enqueue_dma source(%314 : memref<1x128xf32, #tpu.memory_space<any>>) target(%316 : memref<1x128xf32, #tpu.memory_space<vmem>>) target_semaphore(%318 : memref<!tpu.dma_semaphore, #tpu.memory_space<semaphore_mem>>)
      %c21 = arith.constant 21 : index
      %319 = memref.load %arg1[%c21] : memref<128xi32, #tpu.memory_space<smem>>
      %c0_i32_279 = arith.constant 0 : i32
      %c0_i32_280 = arith.constant 0 : i32
      %c21_i32_281 = arith.constant 21 : i32
      %c0_i32_282 = arith.constant 0 : i32
      %320 = tpu.memref_slice %arg4[%319, %c0_i32_282] : memref<64x128xf32, #tpu.memory_space<any>> -> memref<1x128xf32, #tpu.memory_space<any>>
      %c21_i32_283 = arith.constant 21 : i32
      %c0_i32_284 = arith.constant 0 : i32
      %321 = tpu.memref_slice %arg8[%c0_i32_279, %c21_i32_283, %c0_i32_284] : memref<2x32x128xf32, #tpu.memory_space<vmem>> -> memref<1x1x128xf32, #tpu.memory_space<vmem>>
      %322 = tpu.memref_squeeze %321 : memref<1x1x128xf32, #tpu.memory_space<vmem>> -> memref<1x128xf32, #tpu.memory_space<vmem>>
      %323 = tpu.memref_slice %arg9[%c0_i32_280, %c21_i32_281] : memref<2x32x!tpu.dma_semaphore, #tpu.memory_space<semaphore_mem>> -> memref<1x1x!tpu.dma_semaphore, #tpu.memory_space<semaphore_mem>>
      %324 = tpu.memref_squeeze %323 : memref<1x1x!tpu.dma_semaphore, #tpu.memory_space<semaphore_mem>> -> memref<!tpu.dma_semaphore, #tpu.memory_space<semaphore_mem>>
      tpu.enqueue_dma source(%320 : memref<1x128xf32, #tpu.memory_space<any>>) target(%322 : memref<1x128xf32, #tpu.memory_space<vmem>>) target_semaphore(%324 : memref<!tpu.dma_semaphore, #tpu.memory_space<semaphore_mem>>)
      %c22 = arith.constant 22 : index
      %325 = memref.load %arg1[%c22] : memref<128xi32, #tpu.memory_space<smem>>
      %c0_i32_285 = arith.constant 0 : i32
      %c0_i32_286 = arith.constant 0 : i32
      %c22_i32_287 = arith.constant 22 : i32
      %c0_i32_288 = arith.constant 0 : i32
      %326 = tpu.memref_slice %arg4[%325, %c0_i32_288] : memref<64x128xf32, #tpu.memory_space<any>> -> memref<1x128xf32, #tpu.memory_space<any>>
      %c22_i32_289 = arith.constant 22 : i32
      %c0_i32_290 = arith.constant 0 : i32
      %327 = tpu.memref_slice %arg8[%c0_i32_285, %c22_i32_289, %c0_i32_290] : memref<2x32x128xf32, #tpu.memory_space<vmem>> -> memref<1x1x128xf32, #tpu.memory_space<vmem>>
      %328 = tpu.memref_squeeze %327 : memref<1x1x128xf32, #tpu.memory_space<vmem>> -> memref<1x128xf32, #tpu.memory_space<vmem>>
      %329 = tpu.memref_slice %arg9[%c0_i32_286, %c22_i32_287] : memref<2x32x!tpu.dma_semaphore, #tpu.memory_space<semaphore_mem>> -> memref<1x1x!tpu.dma_semaphore, #tpu.memory_space<semaphore_mem>>
      %330 = tpu.memref_squeeze %329 : memref<1x1x!tpu.dma_semaphore, #tpu.memory_space<semaphore_mem>> -> memref<!tpu.dma_semaphore, #tpu.memory_space<semaphore_mem>>
      tpu.enqueue_dma source(%326 : memref<1x128xf32, #tpu.memory_space<any>>) target(%328 : memref<1x128xf32, #tpu.memory_space<vmem>>) target_semaphore(%330 : memref<!tpu.dma_semaphore, #tpu.memory_space<semaphore_mem>>)
      %c23 = arith.constant 23 : index
      %331 = memref.load %arg1[%c23] : memref<128xi32, #tpu.memory_space<smem>>
      %c0_i32_291 = arith.constant 0 : i32
      %c0_i32_292 = arith.constant 0 : i32
      %c23_i32_293 = arith.constant 23 : i32
      %c0_i32_294 = arith.constant 0 : i32
      %332 = tpu.memref_slice %arg4[%331, %c0_i32_294] : memref<64x128xf32, #tpu.memory_space<any>> -> memref<1x128xf32, #tpu.memory_space<any>>
      %c23_i32_295 = arith.constant 23 : i32
      %c0_i32_296 = arith.constant 0 : i32
      %333 = tpu.memref_slice %arg8[%c0_i32_291, %c23_i32_295, %c0_i32_296] : memref<2x32x128xf32, #tpu.memory_space<vmem>> -> memref<1x1x128xf32, #tpu.memory_space<vmem>>
      %334 = tpu.memref_squeeze %333 : memref<1x1x128xf32, #tpu.memory_space<vmem>> -> memref<1x128xf32, #tpu.memory_space<vmem>>
      %335 = tpu.memref_slice %arg9[%c0_i32_292, %c23_i32_293] : memref<2x32x!tpu.dma_semaphore, #tpu.memory_space<semaphore_mem>> -> memref<1x1x!tpu.dma_semaphore, #tpu.memory_space<semaphore_mem>>
      %336 = tpu.memref_squeeze %335 : memref<1x1x!tpu.dma_semaphore, #tpu.memory_space<semaphore_mem>> -> memref<!tpu.dma_semaphore, #tpu.memory_space<semaphore_mem>>
      tpu.enqueue_dma source(%332 : memref<1x128xf32, #tpu.memory_space<any>>) target(%334 : memref<1x128xf32, #tpu.memory_space<vmem>>) target_semaphore(%336 : memref<!tpu.dma_semaphore, #tpu.memory_space<semaphore_mem>>)
      %c24 = arith.constant 24 : index
      %337 = memref.load %arg1[%c24] : memref<128xi32, #tpu.memory_space<smem>>
      %c0_i32_297 = arith.constant 0 : i32
      %c0_i32_298 = arith.constant 0 : i32
      %c24_i32_299 = arith.constant 24 : i32
      %c0_i32_300 = arith.constant 0 : i32
      %338 = tpu.memref_slice %arg4[%337, %c0_i32_300] : memref<64x128xf32, #tpu.memory_space<any>> -> memref<1x128xf32, #tpu.memory_space<any>>
      %c24_i32_301 = arith.constant 24 : i32
      %c0_i32_302 = arith.constant 0 : i32
      %339 = tpu.memref_slice %arg8[%c0_i32_297, %c24_i32_301, %c0_i32_302] : memref<2x32x128xf32, #tpu.memory_space<vmem>> -> memref<1x1x128xf32, #tpu.memory_space<vmem>>
      %340 = tpu.memref_squeeze %339 : memref<1x1x128xf32, #tpu.memory_space<vmem>> -> memref<1x128xf32, #tpu.memory_space<vmem>>
      %341 = tpu.memref_slice %arg9[%c0_i32_298, %c24_i32_299] : memref<2x32x!tpu.dma_semaphore, #tpu.memory_space<semaphore_mem>> -> memref<1x1x!tpu.dma_semaphore, #tpu.memory_space<semaphore_mem>>
      %342 = tpu.memref_squeeze %341 : memref<1x1x!tpu.dma_semaphore, #tpu.memory_space<semaphore_mem>> -> memref<!tpu.dma_semaphore, #tpu.memory_space<semaphore_mem>>
      tpu.enqueue_dma source(%338 : memref<1x128xf32, #tpu.memory_space<any>>) target(%340 : memref<1x128xf32, #tpu.memory_space<vmem>>) target_semaphore(%342 : memref<!tpu.dma_semaphore, #tpu.memory_space<semaphore_mem>>)
      %c25 = arith.constant 25 : index
      %343 = memref.load %arg1[%c25] : memref<128xi32, #tpu.memory_space<smem>>
      %c0_i32_303 = arith.constant 0 : i32
      %c0_i32_304 = arith.constant 0 : i32
      %c25_i32_305 = arith.constant 25 : i32
      %c0_i32_306 = arith.constant 0 : i32
      %344 = tpu.memref_slice %arg4[%343, %c0_i32_306] : memref<64x128xf32, #tpu.memory_space<any>> -> memref<1x128xf32, #tpu.memory_space<any>>
      %c25_i32_307 = arith.constant 25 : i32
      %c0_i32_308 = arith.constant 0 : i32
      %345 = tpu.memref_slice %arg8[%c0_i32_303, %c25_i32_307, %c0_i32_308] : memref<2x32x128xf32, #tpu.memory_space<vmem>> -> memref<1x1x128xf32, #tpu.memory_space<vmem>>
      %346 = tpu.memref_squeeze %345 : memref<1x1x128xf32, #tpu.memory_space<vmem>> -> memref<1x128xf32, #tpu.memory_space<vmem>>
      %347 = tpu.memref_slice %arg9[%c0_i32_304, %c25_i32_305] : memref<2x32x!tpu.dma_semaphore, #tpu.memory_space<semaphore_mem>> -> memref<1x1x!tpu.dma_semaphore, #tpu.memory_space<semaphore_mem>>
      %348 = tpu.memref_squeeze %347 : memref<1x1x!tpu.dma_semaphore, #tpu.memory_space<semaphore_mem>> -> memref<!tpu.dma_semaphore, #tpu.memory_space<semaphore_mem>>
      tpu.enqueue_dma source(%344 : memref<1x128xf32, #tpu.memory_space<any>>) target(%346 : memref<1x128xf32, #tpu.memory_space<vmem>>) target_semaphore(%348 : memref<!tpu.dma_semaphore, #tpu.memory_space<semaphore_mem>>)
      %c26 = arith.constant 26 : index
      %349 = memref.load %arg1[%c26] : memref<128xi32, #tpu.memory_space<smem>>
      %c0_i32_309 = arith.constant 0 : i32
      %c0_i32_310 = arith.constant 0 : i32
      %c26_i32_311 = arith.constant 26 : i32
      %c0_i32_312 = arith.constant 0 : i32
      %350 = tpu.memref_slice %arg4[%349, %c0_i32_312] : memref<64x128xf32, #tpu.memory_space<any>> -> memref<1x128xf32, #tpu.memory_space<any>>
      %c26_i32_313 = arith.constant 26 : i32
      %c0_i32_314 = arith.constant 0 : i32
      %351 = tpu.memref_slice %arg8[%c0_i32_309, %c26_i32_313, %c0_i32_314] : memref<2x32x128xf32, #tpu.memory_space<vmem>> -> memref<1x1x128xf32, #tpu.memory_space<vmem>>
      %352 = tpu.memref_squeeze %351 : memref<1x1x128xf32, #tpu.memory_space<vmem>> -> memref<1x128xf32, #tpu.memory_space<vmem>>
      %353 = tpu.memref_slice %arg9[%c0_i32_310, %c26_i32_311] : memref<2x32x!tpu.dma_semaphore, #tpu.memory_space<semaphore_mem>> -> memref<1x1x!tpu.dma_semaphore, #tpu.memory_space<semaphore_mem>>
      %354 = tpu.memref_squeeze %353 : memref<1x1x!tpu.dma_semaphore, #tpu.memory_space<semaphore_mem>> -> memref<!tpu.dma_semaphore, #tpu.memory_space<semaphore_mem>>
      tpu.enqueue_dma source(%350 : memref<1x128xf32, #tpu.memory_space<any>>) target(%352 : memref<1x128xf32, #tpu.memory_space<vmem>>) target_semaphore(%354 : memref<!tpu.dma_semaphore, #tpu.memory_space<semaphore_mem>>)
      %c27 = arith.constant 27 : index
      %355 = memref.load %arg1[%c27] : memref<128xi32, #tpu.memory_space<smem>>
      %c0_i32_315 = arith.constant 0 : i32
      %c0_i32_316 = arith.constant 0 : i32
      %c27_i32_317 = arith.constant 27 : i32
      %c0_i32_318 = arith.constant 0 : i32
      %356 = tpu.memref_slice %arg4[%355, %c0_i32_318] : memref<64x128xf32, #tpu.memory_space<any>> -> memref<1x128xf32, #tpu.memory_space<any>>
      %c27_i32_319 = arith.constant 27 : i32
      %c0_i32_320 = arith.constant 0 : i32
      %357 = tpu.memref_slice %arg8[%c0_i32_315, %c27_i32_319, %c0_i32_320] : memref<2x32x128xf32, #tpu.memory_space<vmem>> -> memref<1x1x128xf32, #tpu.memory_space<vmem>>
      %358 = tpu.memref_squeeze %357 : memref<1x1x128xf32, #tpu.memory_space<vmem>> -> memref<1x128xf32, #tpu.memory_space<vmem>>
      %359 = tpu.memref_slice %arg9[%c0_i32_316, %c27_i32_317] : memref<2x32x!tpu.dma_semaphore, #tpu.memory_space<semaphore_mem>> -> memref<1x1x!tpu.dma_semaphore, #tpu.memory_space<semaphore_mem>>
      %360 = tpu.memref_squeeze %359 : memref<1x1x!tpu.dma_semaphore, #tpu.memory_space<semaphore_mem>> -> memref<!tpu.dma_semaphore, #tpu.memory_space<semaphore_mem>>
      tpu.enqueue_dma source(%356 : memref<1x128xf32, #tpu.memory_space<any>>) target(%358 : memref<1x128xf32, #tpu.memory_space<vmem>>) target_semaphore(%360 : memref<!tpu.dma_semaphore, #tpu.memory_space<semaphore_mem>>)
      %c28 = arith.constant 28 : index
      %361 = memref.load %arg1[%c28] : memref<128xi32, #tpu.memory_space<smem>>
      %c0_i32_321 = arith.constant 0 : i32
      %c0_i32_322 = arith.constant 0 : i32
      %c28_i32_323 = arith.constant 28 : i32
      %c0_i32_324 = arith.constant 0 : i32
      %362 = tpu.memref_slice %arg4[%361, %c0_i32_324] : memref<64x128xf32, #tpu.memory_space<any>> -> memref<1x128xf32, #tpu.memory_space<any>>
      %c28_i32_325 = arith.constant 28 : i32
      %c0_i32_326 = arith.constant 0 : i32
      %363 = tpu.memref_slice %arg8[%c0_i32_321, %c28_i32_325, %c0_i32_326] : memref<2x32x128xf32, #tpu.memory_space<vmem>> -> memref<1x1x128xf32, #tpu.memory_space<vmem>>
      %364 = tpu.memref_squeeze %363 : memref<1x1x128xf32, #tpu.memory_space<vmem>> -> memref<1x128xf32, #tpu.memory_space<vmem>>
      %365 = tpu.memref_slice %arg9[%c0_i32_322, %c28_i32_323] : memref<2x32x!tpu.dma_semaphore, #tpu.memory_space<semaphore_mem>> -> memref<1x1x!tpu.dma_semaphore, #tpu.memory_space<semaphore_mem>>
      %366 = tpu.memref_squeeze %365 : memref<1x1x!tpu.dma_semaphore, #tpu.memory_space<semaphore_mem>> -> memref<!tpu.dma_semaphore, #tpu.memory_space<semaphore_mem>>
      tpu.enqueue_dma source(%362 : memref<1x128xf32, #tpu.memory_space<any>>) target(%364 : memref<1x128xf32, #tpu.memory_space<vmem>>) target_semaphore(%366 : memref<!tpu.dma_semaphore, #tpu.memory_space<semaphore_mem>>)
      %c29 = arith.constant 29 : index
      %367 = memref.load %arg1[%c29] : memref<128xi32, #tpu.memory_space<smem>>
      %c0_i32_327 = arith.constant 0 : i32
      %c0_i32_328 = arith.constant 0 : i32
      %c29_i32_329 = arith.constant 29 : i32
      %c0_i32_330 = arith.constant 0 : i32
      %368 = tpu.memref_slice %arg4[%367, %c0_i32_330] : memref<64x128xf32, #tpu.memory_space<any>> -> memref<1x128xf32, #tpu.memory_space<any>>
      %c29_i32_331 = arith.constant 29 : i32
      %c0_i32_332 = arith.constant 0 : i32
      %369 = tpu.memref_slice %arg8[%c0_i32_327, %c29_i32_331, %c0_i32_332] : memref<2x32x128xf32, #tpu.memory_space<vmem>> -> memref<1x1x128xf32, #tpu.memory_space<vmem>>
      %370 = tpu.memref_squeeze %369 : memref<1x1x128xf32, #tpu.memory_space<vmem>> -> memref<1x128xf32, #tpu.memory_space<vmem>>
      %371 = tpu.memref_slice %arg9[%c0_i32_328, %c29_i32_329] : memref<2x32x!tpu.dma_semaphore, #tpu.memory_space<semaphore_mem>> -> memref<1x1x!tpu.dma_semaphore, #tpu.memory_space<semaphore_mem>>
      %372 = tpu.memref_squeeze %371 : memref<1x1x!tpu.dma_semaphore, #tpu.memory_space<semaphore_mem>> -> memref<!tpu.dma_semaphore, #tpu.memory_space<semaphore_mem>>
      tpu.enqueue_dma source(%368 : memref<1x128xf32, #tpu.memory_space<any>>) target(%370 : memref<1x128xf32, #tpu.memory_space<vmem>>) target_semaphore(%372 : memref<!tpu.dma_semaphore, #tpu.memory_space<semaphore_mem>>)
      %c30 = arith.constant 30 : index
      %373 = memref.load %arg1[%c30] : memref<128xi32, #tpu.memory_space<smem>>
      %c0_i32_333 = arith.constant 0 : i32
      %c0_i32_334 = arith.constant 0 : i32
      %c30_i32_335 = arith.constant 30 : i32
      %c0_i32_336 = arith.constant 0 : i32
      %374 = tpu.memref_slice %arg4[%373, %c0_i32_336] : memref<64x128xf32, #tpu.memory_space<any>> -> memref<1x128xf32, #tpu.memory_space<any>>
      %c30_i32_337 = arith.constant 30 : i32
      %c0_i32_338 = arith.constant 0 : i32
      %375 = tpu.memref_slice %arg8[%c0_i32_333, %c30_i32_337, %c0_i32_338] : memref<2x32x128xf32, #tpu.memory_space<vmem>> -> memref<1x1x128xf32, #tpu.memory_space<vmem>>
      %376 = tpu.memref_squeeze %375 : memref<1x1x128xf32, #tpu.memory_space<vmem>> -> memref<1x128xf32, #tpu.memory_space<vmem>>
      %377 = tpu.memref_slice %arg9[%c0_i32_334, %c30_i32_335] : memref<2x32x!tpu.dma_semaphore, #tpu.memory_space<semaphore_mem>> -> memref<1x1x!tpu.dma_semaphore, #tpu.memory_space<semaphore_mem>>
      %378 = tpu.memref_squeeze %377 : memref<1x1x!tpu.dma_semaphore, #tpu.memory_space<semaphore_mem>> -> memref<!tpu.dma_semaphore, #tpu.memory_space<semaphore_mem>>
      tpu.enqueue_dma source(%374 : memref<1x128xf32, #tpu.memory_space<any>>) target(%376 : memref<1x128xf32, #tpu.memory_space<vmem>>) target_semaphore(%378 : memref<!tpu.dma_semaphore, #tpu.memory_space<semaphore_mem>>)
      %c31 = arith.constant 31 : index
      %379 = memref.load %arg1[%c31] : memref<128xi32, #tpu.memory_space<smem>>
      %c0_i32_339 = arith.constant 0 : i32
      %c0_i32_340 = arith.constant 0 : i32
      %c31_i32_341 = arith.constant 31 : i32
      %c0_i32_342 = arith.constant 0 : i32
      %380 = tpu.memref_slice %arg4[%379, %c0_i32_342] : memref<64x128xf32, #tpu.memory_space<any>> -> memref<1x128xf32, #tpu.memory_space<any>>
      %c31_i32_343 = arith.constant 31 : i32
      %c0_i32_344 = arith.constant 0 : i32
      %381 = tpu.memref_slice %arg8[%c0_i32_339, %c31_i32_343, %c0_i32_344] : memref<2x32x128xf32, #tpu.memory_space<vmem>> -> memref<1x1x128xf32, #tpu.memory_space<vmem>>
      %382 = tpu.memref_squeeze %381 : memref<1x1x128xf32, #tpu.memory_space<vmem>> -> memref<1x128xf32, #tpu.memory_space<vmem>>
      %383 = tpu.memref_slice %arg9[%c0_i32_340, %c31_i32_341] : memref<2x32x!tpu.dma_semaphore, #tpu.memory_space<semaphore_mem>> -> memref<1x1x!tpu.dma_semaphore, #tpu.memory_space<semaphore_mem>>
      %384 = tpu.memref_squeeze %383 : memref<1x1x!tpu.dma_semaphore, #tpu.memory_space<semaphore_mem>> -> memref<!tpu.dma_semaphore, #tpu.memory_space<semaphore_mem>>
      tpu.enqueue_dma source(%380 : memref<1x128xf32, #tpu.memory_space<any>>) target(%382 : memref<1x128xf32, #tpu.memory_space<vmem>>) target_semaphore(%384 : memref<!tpu.dma_semaphore, #tpu.memory_space<semaphore_mem>>)
    } else {
    }
    %c1_i32 = arith.constant 1 : i32
    %3 = arith.andi %arg0, %c1_i32 : i32
    %c1_i32_1 = arith.constant 1 : i32
    %4 = arith.addi %arg0, %c1_i32_1 : i32
    %c4_i32 = arith.constant 4 : i32
    %5 = arith.cmpi slt, %4, %c4_i32 : i32
    %6 = arith.extui %5 : i1 to i32
    %c0_i32_2 = arith.constant 0 : i32
    %7 = arith.cmpi ne, %6, %c0_i32_2 : i32
    scf.if %7 {
      %c1_i32_148 = arith.constant 1 : i32
      %189 = arith.addi %arg0, %c1_i32_148 : i32
      %c1_i32_149 = arith.constant 1 : i32
      %190 = arith.subi %c1_i32_149, %3 : i32
      %c32_i32 = arith.constant 32 : i32
      %191 = arith.muli %189, %c32_i32 : i32
      %c0_i32_150 = arith.constant 0 : i32
      %192 = arith.addi %191, %c0_i32_150 : i32
      %193 = arith.index_cast %192 : i32 to index
      %194 = memref.load %arg1[%193] : memref<128xi32, #tpu.memory_space<smem>>
      %c0_i32_151 = arith.constant 0 : i32
      %c0_i32_152 = arith.constant 0 : i32
      %195 = tpu.memref_slice %arg4[%194, %c0_i32_152] : memref<64x128xf32, #tpu.memory_space<any>> -> memref<1x128xf32, #tpu.memory_space<any>>
      %c0_i32_153 = arith.constant 0 : i32
      %c0_i32_154 = arith.constant 0 : i32
      %196 = tpu.memref_slice %arg8[%190, %c0_i32_153, %c0_i32_154] : memref<2x32x128xf32, #tpu.memory_space<vmem>> -> memref<1x1x128xf32, #tpu.memory_space<vmem>>
      %197 = tpu.memref_squeeze %196 : memref<1x1x128xf32, #tpu.memory_space<vmem>> -> memref<1x128xf32, #tpu.memory_space<vmem>>
      %198 = tpu.memref_slice %arg9[%190, %c0_i32_151] : memref<2x32x!tpu.dma_semaphore, #tpu.memory_space<semaphore_mem>> -> memref<1x1x!tpu.dma_semaphore, #tpu.memory_space<semaphore_mem>>
      %199 = tpu.memref_squeeze %198 : memref<1x1x!tpu.dma_semaphore, #tpu.memory_space<semaphore_mem>> -> memref<!tpu.dma_semaphore, #tpu.memory_space<semaphore_mem>>
      tpu.enqueue_dma source(%195 : memref<1x128xf32, #tpu.memory_space<any>>) target(%197 : memref<1x128xf32, #tpu.memory_space<vmem>>) target_semaphore(%199 : memref<!tpu.dma_semaphore, #tpu.memory_space<semaphore_mem>>)
      %c1_i32_155 = arith.constant 1 : i32
      %200 = arith.addi %191, %c1_i32_155 : i32
      %201 = arith.index_cast %200 : i32 to index
      %202 = memref.load %arg1[%201] : memref<128xi32, #tpu.memory_space<smem>>
      %c1_i32_156 = arith.constant 1 : i32
      %c0_i32_157 = arith.constant 0 : i32
      %203 = tpu.memref_slice %arg4[%202, %c0_i32_157] : memref<64x128xf32, #tpu.memory_space<any>> -> memref<1x128xf32, #tpu.memory_space<any>>
      %c1_i32_158 = arith.constant 1 : i32
      %c0_i32_159 = arith.constant 0 : i32
      %204 = tpu.memref_slice %arg8[%190, %c1_i32_158, %c0_i32_159] : memref<2x32x128xf32, #tpu.memory_space<vmem>> -> memref<1x1x128xf32, #tpu.memory_space<vmem>>
      %205 = tpu.memref_squeeze %204 : memref<1x1x128xf32, #tpu.memory_space<vmem>> -> memref<1x128xf32, #tpu.memory_space<vmem>>
      %206 = tpu.memref_slice %arg9[%190, %c1_i32_156] : memref<2x32x!tpu.dma_semaphore, #tpu.memory_space<semaphore_mem>> -> memref<1x1x!tpu.dma_semaphore, #tpu.memory_space<semaphore_mem>>
      %207 = tpu.memref_squeeze %206 : memref<1x1x!tpu.dma_semaphore, #tpu.memory_space<semaphore_mem>> -> memref<!tpu.dma_semaphore, #tpu.memory_space<semaphore_mem>>
      tpu.enqueue_dma source(%203 : memref<1x128xf32, #tpu.memory_space<any>>) target(%205 : memref<1x128xf32, #tpu.memory_space<vmem>>) target_semaphore(%207 : memref<!tpu.dma_semaphore, #tpu.memory_space<semaphore_mem>>)
      %c2_i32_160 = arith.constant 2 : i32
      %208 = arith.addi %191, %c2_i32_160 : i32
      %209 = arith.index_cast %208 : i32 to index
      %210 = memref.load %arg1[%209] : memref<128xi32, #tpu.memory_space<smem>>
      %c2_i32_161 = arith.constant 2 : i32
      %c0_i32_162 = arith.constant 0 : i32
      %211 = tpu.memref_slice %arg4[%210, %c0_i32_162] : memref<64x128xf32, #tpu.memory_space<any>> -> memref<1x128xf32, #tpu.memory_space<any>>
      %c2_i32_163 = arith.constant 2 : i32
      %c0_i32_164 = arith.constant 0 : i32
      %212 = tpu.memref_slice %arg8[%190, %c2_i32_163, %c0_i32_164] : memref<2x32x128xf32, #tpu.memory_space<vmem>> -> memref<1x1x128xf32, #tpu.memory_space<vmem>>
      %213 = tpu.memref_squeeze %212 : memref<1x1x128xf32, #tpu.memory_space<vmem>> -> memref<1x128xf32, #tpu.memory_space<vmem>>
      %214 = tpu.memref_slice %arg9[%190, %c2_i32_161] : memref<2x32x!tpu.dma_semaphore, #tpu.memory_space<semaphore_mem>> -> memref<1x1x!tpu.dma_semaphore, #tpu.memory_space<semaphore_mem>>
      %215 = tpu.memref_squeeze %214 : memref<1x1x!tpu.dma_semaphore, #tpu.memory_space<semaphore_mem>> -> memref<!tpu.dma_semaphore, #tpu.memory_space<semaphore_mem>>
      tpu.enqueue_dma source(%211 : memref<1x128xf32, #tpu.memory_space<any>>) target(%213 : memref<1x128xf32, #tpu.memory_space<vmem>>) target_semaphore(%215 : memref<!tpu.dma_semaphore, #tpu.memory_space<semaphore_mem>>)
      %c3_i32_165 = arith.constant 3 : i32
      %216 = arith.addi %191, %c3_i32_165 : i32
      %217 = arith.index_cast %216 : i32 to index
      %218 = memref.load %arg1[%217] : memref<128xi32, #tpu.memory_space<smem>>
      %c3_i32_166 = arith.constant 3 : i32
      %c0_i32_167 = arith.constant 0 : i32
      %219 = tpu.memref_slice %arg4[%218, %c0_i32_167] : memref<64x128xf32, #tpu.memory_space<any>> -> memref<1x128xf32, #tpu.memory_space<any>>
      %c3_i32_168 = arith.constant 3 : i32
      %c0_i32_169 = arith.constant 0 : i32
      %220 = tpu.memref_slice %arg8[%190, %c3_i32_168, %c0_i32_169] : memref<2x32x128xf32, #tpu.memory_space<vmem>> -> memref<1x1x128xf32, #tpu.memory_space<vmem>>
      %221 = tpu.memref_squeeze %220 : memref<1x1x128xf32, #tpu.memory_space<vmem>> -> memref<1x128xf32, #tpu.memory_space<vmem>>
      %222 = tpu.memref_slice %arg9[%190, %c3_i32_166] : memref<2x32x!tpu.dma_semaphore, #tpu.memory_space<semaphore_mem>> -> memref<1x1x!tpu.dma_semaphore, #tpu.memory_space<semaphore_mem>>
      %223 = tpu.memref_squeeze %222 : memref<1x1x!tpu.dma_semaphore, #tpu.memory_space<semaphore_mem>> -> memref<!tpu.dma_semaphore, #tpu.memory_space<semaphore_mem>>
      tpu.enqueue_dma source(%219 : memref<1x128xf32, #tpu.memory_space<any>>) target(%221 : memref<1x128xf32, #tpu.memory_space<vmem>>) target_semaphore(%223 : memref<!tpu.dma_semaphore, #tpu.memory_space<semaphore_mem>>)
      %c4_i32_170 = arith.constant 4 : i32
      %224 = arith.addi %191, %c4_i32_170 : i32
      %225 = arith.index_cast %224 : i32 to index
      %226 = memref.load %arg1[%225] : memref<128xi32, #tpu.memory_space<smem>>
      %c4_i32_171 = arith.constant 4 : i32
      %c0_i32_172 = arith.constant 0 : i32
      %227 = tpu.memref_slice %arg4[%226, %c0_i32_172] : memref<64x128xf32, #tpu.memory_space<any>> -> memref<1x128xf32, #tpu.memory_space<any>>
      %c4_i32_173 = arith.constant 4 : i32
      %c0_i32_174 = arith.constant 0 : i32
      %228 = tpu.memref_slice %arg8[%190, %c4_i32_173, %c0_i32_174] : memref<2x32x128xf32, #tpu.memory_space<vmem>> -> memref<1x1x128xf32, #tpu.memory_space<vmem>>
      %229 = tpu.memref_squeeze %228 : memref<1x1x128xf32, #tpu.memory_space<vmem>> -> memref<1x128xf32, #tpu.memory_space<vmem>>
      %230 = tpu.memref_slice %arg9[%190, %c4_i32_171] : memref<2x32x!tpu.dma_semaphore, #tpu.memory_space<semaphore_mem>> -> memref<1x1x!tpu.dma_semaphore, #tpu.memory_space<semaphore_mem>>
      %231 = tpu.memref_squeeze %230 : memref<1x1x!tpu.dma_semaphore, #tpu.memory_space<semaphore_mem>> -> memref<!tpu.dma_semaphore, #tpu.memory_space<semaphore_mem>>
      tpu.enqueue_dma source(%227 : memref<1x128xf32, #tpu.memory_space<any>>) target(%229 : memref<1x128xf32, #tpu.memory_space<vmem>>) target_semaphore(%231 : memref<!tpu.dma_semaphore, #tpu.memory_space<semaphore_mem>>)
      %c5_i32_175 = arith.constant 5 : i32
      %232 = arith.addi %191, %c5_i32_175 : i32
      %233 = arith.index_cast %232 : i32 to index
      %234 = memref.load %arg1[%233] : memref<128xi32, #tpu.memory_space<smem>>
      %c5_i32_176 = arith.constant 5 : i32
      %c0_i32_177 = arith.constant 0 : i32
      %235 = tpu.memref_slice %arg4[%234, %c0_i32_177] : memref<64x128xf32, #tpu.memory_space<any>> -> memref<1x128xf32, #tpu.memory_space<any>>
      %c5_i32_178 = arith.constant 5 : i32
      %c0_i32_179 = arith.constant 0 : i32
      %236 = tpu.memref_slice %arg8[%190, %c5_i32_178, %c0_i32_179] : memref<2x32x128xf32, #tpu.memory_space<vmem>> -> memref<1x1x128xf32, #tpu.memory_space<vmem>>
      %237 = tpu.memref_squeeze %236 : memref<1x1x128xf32, #tpu.memory_space<vmem>> -> memref<1x128xf32, #tpu.memory_space<vmem>>
      %238 = tpu.memref_slice %arg9[%190, %c5_i32_176] : memref<2x32x!tpu.dma_semaphore, #tpu.memory_space<semaphore_mem>> -> memref<1x1x!tpu.dma_semaphore, #tpu.memory_space<semaphore_mem>>
      %239 = tpu.memref_squeeze %238 : memref<1x1x!tpu.dma_semaphore, #tpu.memory_space<semaphore_mem>> -> memref<!tpu.dma_semaphore, #tpu.memory_space<semaphore_mem>>
      tpu.enqueue_dma source(%235 : memref<1x128xf32, #tpu.memory_space<any>>) target(%237 : memref<1x128xf32, #tpu.memory_space<vmem>>) target_semaphore(%239 : memref<!tpu.dma_semaphore, #tpu.memory_space<semaphore_mem>>)
      %c6_i32_180 = arith.constant 6 : i32
      %240 = arith.addi %191, %c6_i32_180 : i32
      %241 = arith.index_cast %240 : i32 to index
      %242 = memref.load %arg1[%241] : memref<128xi32, #tpu.memory_space<smem>>
      %c6_i32_181 = arith.constant 6 : i32
      %c0_i32_182 = arith.constant 0 : i32
      %243 = tpu.memref_slice %arg4[%242, %c0_i32_182] : memref<64x128xf32, #tpu.memory_space<any>> -> memref<1x128xf32, #tpu.memory_space<any>>
      %c6_i32_183 = arith.constant 6 : i32
      %c0_i32_184 = arith.constant 0 : i32
      %244 = tpu.memref_slice %arg8[%190, %c6_i32_183, %c0_i32_184] : memref<2x32x128xf32, #tpu.memory_space<vmem>> -> memref<1x1x128xf32, #tpu.memory_space<vmem>>
      %245 = tpu.memref_squeeze %244 : memref<1x1x128xf32, #tpu.memory_space<vmem>> -> memref<1x128xf32, #tpu.memory_space<vmem>>
      %246 = tpu.memref_slice %arg9[%190, %c6_i32_181] : memref<2x32x!tpu.dma_semaphore, #tpu.memory_space<semaphore_mem>> -> memref<1x1x!tpu.dma_semaphore, #tpu.memory_space<semaphore_mem>>
      %247 = tpu.memref_squeeze %246 : memref<1x1x!tpu.dma_semaphore, #tpu.memory_space<semaphore_mem>> -> memref<!tpu.dma_semaphore, #tpu.memory_space<semaphore_mem>>
      tpu.enqueue_dma source(%243 : memref<1x128xf32, #tpu.memory_space<any>>) target(%245 : memref<1x128xf32, #tpu.memory_space<vmem>>) target_semaphore(%247 : memref<!tpu.dma_semaphore, #tpu.memory_space<semaphore_mem>>)
      %c7_i32_185 = arith.constant 7 : i32
      %248 = arith.addi %191, %c7_i32_185 : i32
      %249 = arith.index_cast %248 : i32 to index
      %250 = memref.load %arg1[%249] : memref<128xi32, #tpu.memory_space<smem>>
      %c7_i32_186 = arith.constant 7 : i32
      %c0_i32_187 = arith.constant 0 : i32
      %251 = tpu.memref_slice %arg4[%250, %c0_i32_187] : memref<64x128xf32, #tpu.memory_space<any>> -> memref<1x128xf32, #tpu.memory_space<any>>
      %c7_i32_188 = arith.constant 7 : i32
      %c0_i32_189 = arith.constant 0 : i32
      %252 = tpu.memref_slice %arg8[%190, %c7_i32_188, %c0_i32_189] : memref<2x32x128xf32, #tpu.memory_space<vmem>> -> memref<1x1x128xf32, #tpu.memory_space<vmem>>
      %253 = tpu.memref_squeeze %252 : memref<1x1x128xf32, #tpu.memory_space<vmem>> -> memref<1x128xf32, #tpu.memory_space<vmem>>
      %254 = tpu.memref_slice %arg9[%190, %c7_i32_186] : memref<2x32x!tpu.dma_semaphore, #tpu.memory_space<semaphore_mem>> -> memref<1x1x!tpu.dma_semaphore, #tpu.memory_space<semaphore_mem>>
      %255 = tpu.memref_squeeze %254 : memref<1x1x!tpu.dma_semaphore, #tpu.memory_space<semaphore_mem>> -> memref<!tpu.dma_semaphore, #tpu.memory_space<semaphore_mem>>
      tpu.enqueue_dma source(%251 : memref<1x128xf32, #tpu.memory_space<any>>) target(%253 : memref<1x128xf32, #tpu.memory_space<vmem>>) target_semaphore(%255 : memref<!tpu.dma_semaphore, #tpu.memory_space<semaphore_mem>>)
      %c8_i32_190 = arith.constant 8 : i32
      %256 = arith.addi %191, %c8_i32_190 : i32
      %257 = arith.index_cast %256 : i32 to index
      %258 = memref.load %arg1[%257] : memref<128xi32, #tpu.memory_space<smem>>
      %c8_i32_191 = arith.constant 8 : i32
      %c0_i32_192 = arith.constant 0 : i32
      %259 = tpu.memref_slice %arg4[%258, %c0_i32_192] : memref<64x128xf32, #tpu.memory_space<any>> -> memref<1x128xf32, #tpu.memory_space<any>>
      %c8_i32_193 = arith.constant 8 : i32
      %c0_i32_194 = arith.constant 0 : i32
      %260 = tpu.memref_slice %arg8[%190, %c8_i32_193, %c0_i32_194] : memref<2x32x128xf32, #tpu.memory_space<vmem>> -> memref<1x1x128xf32, #tpu.memory_space<vmem>>
      %261 = tpu.memref_squeeze %260 : memref<1x1x128xf32, #tpu.memory_space<vmem>> -> memref<1x128xf32, #tpu.memory_space<vmem>>
      %262 = tpu.memref_slice %arg9[%190, %c8_i32_191] : memref<2x32x!tpu.dma_semaphore, #tpu.memory_space<semaphore_mem>> -> memref<1x1x!tpu.dma_semaphore, #tpu.memory_space<semaphore_mem>>
      %263 = tpu.memref_squeeze %262 : memref<1x1x!tpu.dma_semaphore, #tpu.memory_space<semaphore_mem>> -> memref<!tpu.dma_semaphore, #tpu.memory_space<semaphore_mem>>
      tpu.enqueue_dma source(%259 : memref<1x128xf32, #tpu.memory_space<any>>) target(%261 : memref<1x128xf32, #tpu.memory_space<vmem>>) target_semaphore(%263 : memref<!tpu.dma_semaphore, #tpu.memory_space<semaphore_mem>>)
      %c9_i32_195 = arith.constant 9 : i32
      %264 = arith.addi %191, %c9_i32_195 : i32
      %265 = arith.index_cast %264 : i32 to index
      %266 = memref.load %arg1[%265] : memref<128xi32, #tpu.memory_space<smem>>
      %c9_i32_196 = arith.constant 9 : i32
      %c0_i32_197 = arith.constant 0 : i32
      %267 = tpu.memref_slice %arg4[%266, %c0_i32_197] : memref<64x128xf32, #tpu.memory_space<any>> -> memref<1x128xf32, #tpu.memory_space<any>>
      %c9_i32_198 = arith.constant 9 : i32
      %c0_i32_199 = arith.constant 0 : i32
      %268 = tpu.memref_slice %arg8[%190, %c9_i32_198, %c0_i32_199] : memref<2x32x128xf32, #tpu.memory_space<vmem>> -> memref<1x1x128xf32, #tpu.memory_space<vmem>>
      %269 = tpu.memref_squeeze %268 : memref<1x1x128xf32, #tpu.memory_space<vmem>> -> memref<1x128xf32, #tpu.memory_space<vmem>>
      %270 = tpu.memref_slice %arg9[%190, %c9_i32_196] : memref<2x32x!tpu.dma_semaphore, #tpu.memory_space<semaphore_mem>> -> memref<1x1x!tpu.dma_semaphore, #tpu.memory_space<semaphore_mem>>
      %271 = tpu.memref_squeeze %270 : memref<1x1x!tpu.dma_semaphore, #tpu.memory_space<semaphore_mem>> -> memref<!tpu.dma_semaphore, #tpu.memory_space<semaphore_mem>>
      tpu.enqueue_dma source(%267 : memref<1x128xf32, #tpu.memory_space<any>>) target(%269 : memref<1x128xf32, #tpu.memory_space<vmem>>) target_semaphore(%271 : memref<!tpu.dma_semaphore, #tpu.memory_space<semaphore_mem>>)
      %c10_i32_200 = arith.constant 10 : i32
      %272 = arith.addi %191, %c10_i32_200 : i32
      %273 = arith.index_cast %272 : i32 to index
      %274 = memref.load %arg1[%273] : memref<128xi32, #tpu.memory_space<smem>>
      %c10_i32_201 = arith.constant 10 : i32
      %c0_i32_202 = arith.constant 0 : i32
      %275 = tpu.memref_slice %arg4[%274, %c0_i32_202] : memref<64x128xf32, #tpu.memory_space<any>> -> memref<1x128xf32, #tpu.memory_space<any>>
      %c10_i32_203 = arith.constant 10 : i32
      %c0_i32_204 = arith.constant 0 : i32
      %276 = tpu.memref_slice %arg8[%190, %c10_i32_203, %c0_i32_204] : memref<2x32x128xf32, #tpu.memory_space<vmem>> -> memref<1x1x128xf32, #tpu.memory_space<vmem>>
      %277 = tpu.memref_squeeze %276 : memref<1x1x128xf32, #tpu.memory_space<vmem>> -> memref<1x128xf32, #tpu.memory_space<vmem>>
      %278 = tpu.memref_slice %arg9[%190, %c10_i32_201] : memref<2x32x!tpu.dma_semaphore, #tpu.memory_space<semaphore_mem>> -> memref<1x1x!tpu.dma_semaphore, #tpu.memory_space<semaphore_mem>>
      %279 = tpu.memref_squeeze %278 : memref<1x1x!tpu.dma_semaphore, #tpu.memory_space<semaphore_mem>> -> memref<!tpu.dma_semaphore, #tpu.memory_space<semaphore_mem>>
      tpu.enqueue_dma source(%275 : memref<1x128xf32, #tpu.memory_space<any>>) target(%277 : memref<1x128xf32, #tpu.memory_space<vmem>>) target_semaphore(%279 : memref<!tpu.dma_semaphore, #tpu.memory_space<semaphore_mem>>)
      %c11_i32_205 = arith.constant 11 : i32
      %280 = arith.addi %191, %c11_i32_205 : i32
      %281 = arith.index_cast %280 : i32 to index
      %282 = memref.load %arg1[%281] : memref<128xi32, #tpu.memory_space<smem>>
      %c11_i32_206 = arith.constant 11 : i32
      %c0_i32_207 = arith.constant 0 : i32
      %283 = tpu.memref_slice %arg4[%282, %c0_i32_207] : memref<64x128xf32, #tpu.memory_space<any>> -> memref<1x128xf32, #tpu.memory_space<any>>
      %c11_i32_208 = arith.constant 11 : i32
      %c0_i32_209 = arith.constant 0 : i32
      %284 = tpu.memref_slice %arg8[%190, %c11_i32_208, %c0_i32_209] : memref<2x32x128xf32, #tpu.memory_space<vmem>> -> memref<1x1x128xf32, #tpu.memory_space<vmem>>
      %285 = tpu.memref_squeeze %284 : memref<1x1x128xf32, #tpu.memory_space<vmem>> -> memref<1x128xf32, #tpu.memory_space<vmem>>
      %286 = tpu.memref_slice %arg9[%190, %c11_i32_206] : memref<2x32x!tpu.dma_semaphore, #tpu.memory_space<semaphore_mem>> -> memref<1x1x!tpu.dma_semaphore, #tpu.memory_space<semaphore_mem>>
      %287 = tpu.memref_squeeze %286 : memref<1x1x!tpu.dma_semaphore, #tpu.memory_space<semaphore_mem>> -> memref<!tpu.dma_semaphore, #tpu.memory_space<semaphore_mem>>
      tpu.enqueue_dma source(%283 : memref<1x128xf32, #tpu.memory_space<any>>) target(%285 : memref<1x128xf32, #tpu.memory_space<vmem>>) target_semaphore(%287 : memref<!tpu.dma_semaphore, #tpu.memory_space<semaphore_mem>>)
      %c12_i32_210 = arith.constant 12 : i32
      %288 = arith.addi %191, %c12_i32_210 : i32
      %289 = arith.index_cast %288 : i32 to index
      %290 = memref.load %arg1[%289] : memref<128xi32, #tpu.memory_space<smem>>
      %c12_i32_211 = arith.constant 12 : i32
      %c0_i32_212 = arith.constant 0 : i32
      %291 = tpu.memref_slice %arg4[%290, %c0_i32_212] : memref<64x128xf32, #tpu.memory_space<any>> -> memref<1x128xf32, #tpu.memory_space<any>>
      %c12_i32_213 = arith.constant 12 : i32
      %c0_i32_214 = arith.constant 0 : i32
      %292 = tpu.memref_slice %arg8[%190, %c12_i32_213, %c0_i32_214] : memref<2x32x128xf32, #tpu.memory_space<vmem>> -> memref<1x1x128xf32, #tpu.memory_space<vmem>>
      %293 = tpu.memref_squeeze %292 : memref<1x1x128xf32, #tpu.memory_space<vmem>> -> memref<1x128xf32, #tpu.memory_space<vmem>>
      %294 = tpu.memref_slice %arg9[%190, %c12_i32_211] : memref<2x32x!tpu.dma_semaphore, #tpu.memory_space<semaphore_mem>> -> memref<1x1x!tpu.dma_semaphore, #tpu.memory_space<semaphore_mem>>
      %295 = tpu.memref_squeeze %294 : memref<1x1x!tpu.dma_semaphore, #tpu.memory_space<semaphore_mem>> -> memref<!tpu.dma_semaphore, #tpu.memory_space<semaphore_mem>>
      tpu.enqueue_dma source(%291 : memref<1x128xf32, #tpu.memory_space<any>>) target(%293 : memref<1x128xf32, #tpu.memory_space<vmem>>) target_semaphore(%295 : memref<!tpu.dma_semaphore, #tpu.memory_space<semaphore_mem>>)
      %c13_i32_215 = arith.constant 13 : i32
      %296 = arith.addi %191, %c13_i32_215 : i32
      %297 = arith.index_cast %296 : i32 to index
      %298 = memref.load %arg1[%297] : memref<128xi32, #tpu.memory_space<smem>>
      %c13_i32_216 = arith.constant 13 : i32
      %c0_i32_217 = arith.constant 0 : i32
      %299 = tpu.memref_slice %arg4[%298, %c0_i32_217] : memref<64x128xf32, #tpu.memory_space<any>> -> memref<1x128xf32, #tpu.memory_space<any>>
      %c13_i32_218 = arith.constant 13 : i32
      %c0_i32_219 = arith.constant 0 : i32
      %300 = tpu.memref_slice %arg8[%190, %c13_i32_218, %c0_i32_219] : memref<2x32x128xf32, #tpu.memory_space<vmem>> -> memref<1x1x128xf32, #tpu.memory_space<vmem>>
      %301 = tpu.memref_squeeze %300 : memref<1x1x128xf32, #tpu.memory_space<vmem>> -> memref<1x128xf32, #tpu.memory_space<vmem>>
      %302 = tpu.memref_slice %arg9[%190, %c13_i32_216] : memref<2x32x!tpu.dma_semaphore, #tpu.memory_space<semaphore_mem>> -> memref<1x1x!tpu.dma_semaphore, #tpu.memory_space<semaphore_mem>>
      %303 = tpu.memref_squeeze %302 : memref<1x1x!tpu.dma_semaphore, #tpu.memory_space<semaphore_mem>> -> memref<!tpu.dma_semaphore, #tpu.memory_space<semaphore_mem>>
      tpu.enqueue_dma source(%299 : memref<1x128xf32, #tpu.memory_space<any>>) target(%301 : memref<1x128xf32, #tpu.memory_space<vmem>>) target_semaphore(%303 : memref<!tpu.dma_semaphore, #tpu.memory_space<semaphore_mem>>)
      %c14_i32_220 = arith.constant 14 : i32
      %304 = arith.addi %191, %c14_i32_220 : i32
      %305 = arith.index_cast %304 : i32 to index
      %306 = memref.load %arg1[%305] : memref<128xi32, #tpu.memory_space<smem>>
      %c14_i32_221 = arith.constant 14 : i32
      %c0_i32_222 = arith.constant 0 : i32
      %307 = tpu.memref_slice %arg4[%306, %c0_i32_222] : memref<64x128xf32, #tpu.memory_space<any>> -> memref<1x128xf32, #tpu.memory_space<any>>
      %c14_i32_223 = arith.constant 14 : i32
      %c0_i32_224 = arith.constant 0 : i32
      %308 = tpu.memref_slice %arg8[%190, %c14_i32_223, %c0_i32_224] : memref<2x32x128xf32, #tpu.memory_space<vmem>> -> memref<1x1x128xf32, #tpu.memory_space<vmem>>
      %309 = tpu.memref_squeeze %308 : memref<1x1x128xf32, #tpu.memory_space<vmem>> -> memref<1x128xf32, #tpu.memory_space<vmem>>
      %310 = tpu.memref_slice %arg9[%190, %c14_i32_221] : memref<2x32x!tpu.dma_semaphore, #tpu.memory_space<semaphore_mem>> -> memref<1x1x!tpu.dma_semaphore, #tpu.memory_space<semaphore_mem>>
      %311 = tpu.memref_squeeze %310 : memref<1x1x!tpu.dma_semaphore, #tpu.memory_space<semaphore_mem>> -> memref<!tpu.dma_semaphore, #tpu.memory_space<semaphore_mem>>
      tpu.enqueue_dma source(%307 : memref<1x128xf32, #tpu.memory_space<any>>) target(%309 : memref<1x128xf32, #tpu.memory_space<vmem>>) target_semaphore(%311 : memref<!tpu.dma_semaphore, #tpu.memory_space<semaphore_mem>>)
      %c15_i32_225 = arith.constant 15 : i32
      %312 = arith.addi %191, %c15_i32_225 : i32
      %313 = arith.index_cast %312 : i32 to index
      %314 = memref.load %arg1[%313] : memref<128xi32, #tpu.memory_space<smem>>
      %c15_i32_226 = arith.constant 15 : i32
      %c0_i32_227 = arith.constant 0 : i32
      %315 = tpu.memref_slice %arg4[%314, %c0_i32_227] : memref<64x128xf32, #tpu.memory_space<any>> -> memref<1x128xf32, #tpu.memory_space<any>>
      %c15_i32_228 = arith.constant 15 : i32
      %c0_i32_229 = arith.constant 0 : i32
      %316 = tpu.memref_slice %arg8[%190, %c15_i32_228, %c0_i32_229] : memref<2x32x128xf32, #tpu.memory_space<vmem>> -> memref<1x1x128xf32, #tpu.memory_space<vmem>>
      %317 = tpu.memref_squeeze %316 : memref<1x1x128xf32, #tpu.memory_space<vmem>> -> memref<1x128xf32, #tpu.memory_space<vmem>>
      %318 = tpu.memref_slice %arg9[%190, %c15_i32_226] : memref<2x32x!tpu.dma_semaphore, #tpu.memory_space<semaphore_mem>> -> memref<1x1x!tpu.dma_semaphore, #tpu.memory_space<semaphore_mem>>
      %319 = tpu.memref_squeeze %318 : memref<1x1x!tpu.dma_semaphore, #tpu.memory_space<semaphore_mem>> -> memref<!tpu.dma_semaphore, #tpu.memory_space<semaphore_mem>>
      tpu.enqueue_dma source(%315 : memref<1x128xf32, #tpu.memory_space<any>>) target(%317 : memref<1x128xf32, #tpu.memory_space<vmem>>) target_semaphore(%319 : memref<!tpu.dma_semaphore, #tpu.memory_space<semaphore_mem>>)
      %c16_i32_230 = arith.constant 16 : i32
      %320 = arith.addi %191, %c16_i32_230 : i32
      %321 = arith.index_cast %320 : i32 to index
      %322 = memref.load %arg1[%321] : memref<128xi32, #tpu.memory_space<smem>>
      %c16_i32_231 = arith.constant 16 : i32
      %c0_i32_232 = arith.constant 0 : i32
      %323 = tpu.memref_slice %arg4[%322, %c0_i32_232] : memref<64x128xf32, #tpu.memory_space<any>> -> memref<1x128xf32, #tpu.memory_space<any>>
      %c16_i32_233 = arith.constant 16 : i32
      %c0_i32_234 = arith.constant 0 : i32
      %324 = tpu.memref_slice %arg8[%190, %c16_i32_233, %c0_i32_234] : memref<2x32x128xf32, #tpu.memory_space<vmem>> -> memref<1x1x128xf32, #tpu.memory_space<vmem>>
      %325 = tpu.memref_squeeze %324 : memref<1x1x128xf32, #tpu.memory_space<vmem>> -> memref<1x128xf32, #tpu.memory_space<vmem>>
      %326 = tpu.memref_slice %arg9[%190, %c16_i32_231] : memref<2x32x!tpu.dma_semaphore, #tpu.memory_space<semaphore_mem>> -> memref<1x1x!tpu.dma_semaphore, #tpu.memory_space<semaphore_mem>>
      %327 = tpu.memref_squeeze %326 : memref<1x1x!tpu.dma_semaphore, #tpu.memory_space<semaphore_mem>> -> memref<!tpu.dma_semaphore, #tpu.memory_space<semaphore_mem>>
      tpu.enqueue_dma source(%323 : memref<1x128xf32, #tpu.memory_space<any>>) target(%325 : memref<1x128xf32, #tpu.memory_space<vmem>>) target_semaphore(%327 : memref<!tpu.dma_semaphore, #tpu.memory_space<semaphore_mem>>)
      %c17_i32_235 = arith.constant 17 : i32
      %328 = arith.addi %191, %c17_i32_235 : i32
      %329 = arith.index_cast %328 : i32 to index
      %330 = memref.load %arg1[%329] : memref<128xi32, #tpu.memory_space<smem>>
      %c17_i32_236 = arith.constant 17 : i32
      %c0_i32_237 = arith.constant 0 : i32
      %331 = tpu.memref_slice %arg4[%330, %c0_i32_237] : memref<64x128xf32, #tpu.memory_space<any>> -> memref<1x128xf32, #tpu.memory_space<any>>
      %c17_i32_238 = arith.constant 17 : i32
      %c0_i32_239 = arith.constant 0 : i32
      %332 = tpu.memref_slice %arg8[%190, %c17_i32_238, %c0_i32_239] : memref<2x32x128xf32, #tpu.memory_space<vmem>> -> memref<1x1x128xf32, #tpu.memory_space<vmem>>
      %333 = tpu.memref_squeeze %332 : memref<1x1x128xf32, #tpu.memory_space<vmem>> -> memref<1x128xf32, #tpu.memory_space<vmem>>
      %334 = tpu.memref_slice %arg9[%190, %c17_i32_236] : memref<2x32x!tpu.dma_semaphore, #tpu.memory_space<semaphore_mem>> -> memref<1x1x!tpu.dma_semaphore, #tpu.memory_space<semaphore_mem>>
      %335 = tpu.memref_squeeze %334 : memref<1x1x!tpu.dma_semaphore, #tpu.memory_space<semaphore_mem>> -> memref<!tpu.dma_semaphore, #tpu.memory_space<semaphore_mem>>
      tpu.enqueue_dma source(%331 : memref<1x128xf32, #tpu.memory_space<any>>) target(%333 : memref<1x128xf32, #tpu.memory_space<vmem>>) target_semaphore(%335 : memref<!tpu.dma_semaphore, #tpu.memory_space<semaphore_mem>>)
      %c18_i32_240 = arith.constant 18 : i32
      %336 = arith.addi %191, %c18_i32_240 : i32
      %337 = arith.index_cast %336 : i32 to index
      %338 = memref.load %arg1[%337] : memref<128xi32, #tpu.memory_space<smem>>
      %c18_i32_241 = arith.constant 18 : i32
      %c0_i32_242 = arith.constant 0 : i32
      %339 = tpu.memref_slice %arg4[%338, %c0_i32_242] : memref<64x128xf32, #tpu.memory_space<any>> -> memref<1x128xf32, #tpu.memory_space<any>>
      %c18_i32_243 = arith.constant 18 : i32
      %c0_i32_244 = arith.constant 0 : i32
      %340 = tpu.memref_slice %arg8[%190, %c18_i32_243, %c0_i32_244] : memref<2x32x128xf32, #tpu.memory_space<vmem>> -> memref<1x1x128xf32, #tpu.memory_space<vmem>>
      %341 = tpu.memref_squeeze %340 : memref<1x1x128xf32, #tpu.memory_space<vmem>> -> memref<1x128xf32, #tpu.memory_space<vmem>>
      %342 = tpu.memref_slice %arg9[%190, %c18_i32_241] : memref<2x32x!tpu.dma_semaphore, #tpu.memory_space<semaphore_mem>> -> memref<1x1x!tpu.dma_semaphore, #tpu.memory_space<semaphore_mem>>
      %343 = tpu.memref_squeeze %342 : memref<1x1x!tpu.dma_semaphore, #tpu.memory_space<semaphore_mem>> -> memref<!tpu.dma_semaphore, #tpu.memory_space<semaphore_mem>>
      tpu.enqueue_dma source(%339 : memref<1x128xf32, #tpu.memory_space<any>>) target(%341 : memref<1x128xf32, #tpu.memory_space<vmem>>) target_semaphore(%343 : memref<!tpu.dma_semaphore, #tpu.memory_space<semaphore_mem>>)
      %c19_i32_245 = arith.constant 19 : i32
      %344 = arith.addi %191, %c19_i32_245 : i32
      %345 = arith.index_cast %344 : i32 to index
      %346 = memref.load %arg1[%345] : memref<128xi32, #tpu.memory_space<smem>>
      %c19_i32_246 = arith.constant 19 : i32
      %c0_i32_247 = arith.constant 0 : i32
      %347 = tpu.memref_slice %arg4[%346, %c0_i32_247] : memref<64x128xf32, #tpu.memory_space<any>> -> memref<1x128xf32, #tpu.memory_space<any>>
      %c19_i32_248 = arith.constant 19 : i32
      %c0_i32_249 = arith.constant 0 : i32
      %348 = tpu.memref_slice %arg8[%190, %c19_i32_248, %c0_i32_249] : memref<2x32x128xf32, #tpu.memory_space<vmem>> -> memref<1x1x128xf32, #tpu.memory_space<vmem>>
      %349 = tpu.memref_squeeze %348 : memref<1x1x128xf32, #tpu.memory_space<vmem>> -> memref<1x128xf32, #tpu.memory_space<vmem>>
      %350 = tpu.memref_slice %arg9[%190, %c19_i32_246] : memref<2x32x!tpu.dma_semaphore, #tpu.memory_space<semaphore_mem>> -> memref<1x1x!tpu.dma_semaphore, #tpu.memory_space<semaphore_mem>>
      %351 = tpu.memref_squeeze %350 : memref<1x1x!tpu.dma_semaphore, #tpu.memory_space<semaphore_mem>> -> memref<!tpu.dma_semaphore, #tpu.memory_space<semaphore_mem>>
      tpu.enqueue_dma source(%347 : memref<1x128xf32, #tpu.memory_space<any>>) target(%349 : memref<1x128xf32, #tpu.memory_space<vmem>>) target_semaphore(%351 : memref<!tpu.dma_semaphore, #tpu.memory_space<semaphore_mem>>)
      %c20_i32_250 = arith.constant 20 : i32
      %352 = arith.addi %191, %c20_i32_250 : i32
      %353 = arith.index_cast %352 : i32 to index
      %354 = memref.load %arg1[%353] : memref<128xi32, #tpu.memory_space<smem>>
      %c20_i32_251 = arith.constant 20 : i32
      %c0_i32_252 = arith.constant 0 : i32
      %355 = tpu.memref_slice %arg4[%354, %c0_i32_252] : memref<64x128xf32, #tpu.memory_space<any>> -> memref<1x128xf32, #tpu.memory_space<any>>
      %c20_i32_253 = arith.constant 20 : i32
      %c0_i32_254 = arith.constant 0 : i32
      %356 = tpu.memref_slice %arg8[%190, %c20_i32_253, %c0_i32_254] : memref<2x32x128xf32, #tpu.memory_space<vmem>> -> memref<1x1x128xf32, #tpu.memory_space<vmem>>
      %357 = tpu.memref_squeeze %356 : memref<1x1x128xf32, #tpu.memory_space<vmem>> -> memref<1x128xf32, #tpu.memory_space<vmem>>
      %358 = tpu.memref_slice %arg9[%190, %c20_i32_251] : memref<2x32x!tpu.dma_semaphore, #tpu.memory_space<semaphore_mem>> -> memref<1x1x!tpu.dma_semaphore, #tpu.memory_space<semaphore_mem>>
      %359 = tpu.memref_squeeze %358 : memref<1x1x!tpu.dma_semaphore, #tpu.memory_space<semaphore_mem>> -> memref<!tpu.dma_semaphore, #tpu.memory_space<semaphore_mem>>
      tpu.enqueue_dma source(%355 : memref<1x128xf32, #tpu.memory_space<any>>) target(%357 : memref<1x128xf32, #tpu.memory_space<vmem>>) target_semaphore(%359 : memref<!tpu.dma_semaphore, #tpu.memory_space<semaphore_mem>>)
      %c21_i32_255 = arith.constant 21 : i32
      %360 = arith.addi %191, %c21_i32_255 : i32
      %361 = arith.index_cast %360 : i32 to index
      %362 = memref.load %arg1[%361] : memref<128xi32, #tpu.memory_space<smem>>
      %c21_i32_256 = arith.constant 21 : i32
      %c0_i32_257 = arith.constant 0 : i32
      %363 = tpu.memref_slice %arg4[%362, %c0_i32_257] : memref<64x128xf32, #tpu.memory_space<any>> -> memref<1x128xf32, #tpu.memory_space<any>>
      %c21_i32_258 = arith.constant 21 : i32
      %c0_i32_259 = arith.constant 0 : i32
      %364 = tpu.memref_slice %arg8[%190, %c21_i32_258, %c0_i32_259] : memref<2x32x128xf32, #tpu.memory_space<vmem>> -> memref<1x1x128xf32, #tpu.memory_space<vmem>>
      %365 = tpu.memref_squeeze %364 : memref<1x1x128xf32, #tpu.memory_space<vmem>> -> memref<1x128xf32, #tpu.memory_space<vmem>>
      %366 = tpu.memref_slice %arg9[%190, %c21_i32_256] : memref<2x32x!tpu.dma_semaphore, #tpu.memory_space<semaphore_mem>> -> memref<1x1x!tpu.dma_semaphore, #tpu.memory_space<semaphore_mem>>
      %367 = tpu.memref_squeeze %366 : memref<1x1x!tpu.dma_semaphore, #tpu.memory_space<semaphore_mem>> -> memref<!tpu.dma_semaphore, #tpu.memory_space<semaphore_mem>>
      tpu.enqueue_dma source(%363 : memref<1x128xf32, #tpu.memory_space<any>>) target(%365 : memref<1x128xf32, #tpu.memory_space<vmem>>) target_semaphore(%367 : memref<!tpu.dma_semaphore, #tpu.memory_space<semaphore_mem>>)
      %c22_i32_260 = arith.constant 22 : i32
      %368 = arith.addi %191, %c22_i32_260 : i32
      %369 = arith.index_cast %368 : i32 to index
      %370 = memref.load %arg1[%369] : memref<128xi32, #tpu.memory_space<smem>>
      %c22_i32_261 = arith.constant 22 : i32
      %c0_i32_262 = arith.constant 0 : i32
      %371 = tpu.memref_slice %arg4[%370, %c0_i32_262] : memref<64x128xf32, #tpu.memory_space<any>> -> memref<1x128xf32, #tpu.memory_space<any>>
      %c22_i32_263 = arith.constant 22 : i32
      %c0_i32_264 = arith.constant 0 : i32
      %372 = tpu.memref_slice %arg8[%190, %c22_i32_263, %c0_i32_264] : memref<2x32x128xf32, #tpu.memory_space<vmem>> -> memref<1x1x128xf32, #tpu.memory_space<vmem>>
      %373 = tpu.memref_squeeze %372 : memref<1x1x128xf32, #tpu.memory_space<vmem>> -> memref<1x128xf32, #tpu.memory_space<vmem>>
      %374 = tpu.memref_slice %arg9[%190, %c22_i32_261] : memref<2x32x!tpu.dma_semaphore, #tpu.memory_space<semaphore_mem>> -> memref<1x1x!tpu.dma_semaphore, #tpu.memory_space<semaphore_mem>>
      %375 = tpu.memref_squeeze %374 : memref<1x1x!tpu.dma_semaphore, #tpu.memory_space<semaphore_mem>> -> memref<!tpu.dma_semaphore, #tpu.memory_space<semaphore_mem>>
      tpu.enqueue_dma source(%371 : memref<1x128xf32, #tpu.memory_space<any>>) target(%373 : memref<1x128xf32, #tpu.memory_space<vmem>>) target_semaphore(%375 : memref<!tpu.dma_semaphore, #tpu.memory_space<semaphore_mem>>)
      %c23_i32_265 = arith.constant 23 : i32
      %376 = arith.addi %191, %c23_i32_265 : i32
      %377 = arith.index_cast %376 : i32 to index
      %378 = memref.load %arg1[%377] : memref<128xi32, #tpu.memory_space<smem>>
      %c23_i32_266 = arith.constant 23 : i32
      %c0_i32_267 = arith.constant 0 : i32
      %379 = tpu.memref_slice %arg4[%378, %c0_i32_267] : memref<64x128xf32, #tpu.memory_space<any>> -> memref<1x128xf32, #tpu.memory_space<any>>
      %c23_i32_268 = arith.constant 23 : i32
      %c0_i32_269 = arith.constant 0 : i32
      %380 = tpu.memref_slice %arg8[%190, %c23_i32_268, %c0_i32_269] : memref<2x32x128xf32, #tpu.memory_space<vmem>> -> memref<1x1x128xf32, #tpu.memory_space<vmem>>
      %381 = tpu.memref_squeeze %380 : memref<1x1x128xf32, #tpu.memory_space<vmem>> -> memref<1x128xf32, #tpu.memory_space<vmem>>
      %382 = tpu.memref_slice %arg9[%190, %c23_i32_266] : memref<2x32x!tpu.dma_semaphore, #tpu.memory_space<semaphore_mem>> -> memref<1x1x!tpu.dma_semaphore, #tpu.memory_space<semaphore_mem>>
      %383 = tpu.memref_squeeze %382 : memref<1x1x!tpu.dma_semaphore, #tpu.memory_space<semaphore_mem>> -> memref<!tpu.dma_semaphore, #tpu.memory_space<semaphore_mem>>
      tpu.enqueue_dma source(%379 : memref<1x128xf32, #tpu.memory_space<any>>) target(%381 : memref<1x128xf32, #tpu.memory_space<vmem>>) target_semaphore(%383 : memref<!tpu.dma_semaphore, #tpu.memory_space<semaphore_mem>>)
      %c24_i32_270 = arith.constant 24 : i32
      %384 = arith.addi %191, %c24_i32_270 : i32
      %385 = arith.index_cast %384 : i32 to index
      %386 = memref.load %arg1[%385] : memref<128xi32, #tpu.memory_space<smem>>
      %c24_i32_271 = arith.constant 24 : i32
      %c0_i32_272 = arith.constant 0 : i32
      %387 = tpu.memref_slice %arg4[%386, %c0_i32_272] : memref<64x128xf32, #tpu.memory_space<any>> -> memref<1x128xf32, #tpu.memory_space<any>>
      %c24_i32_273 = arith.constant 24 : i32
      %c0_i32_274 = arith.constant 0 : i32
      %388 = tpu.memref_slice %arg8[%190, %c24_i32_273, %c0_i32_274] : memref<2x32x128xf32, #tpu.memory_space<vmem>> -> memref<1x1x128xf32, #tpu.memory_space<vmem>>
      %389 = tpu.memref_squeeze %388 : memref<1x1x128xf32, #tpu.memory_space<vmem>> -> memref<1x128xf32, #tpu.memory_space<vmem>>
      %390 = tpu.memref_slice %arg9[%190, %c24_i32_271] : memref<2x32x!tpu.dma_semaphore, #tpu.memory_space<semaphore_mem>> -> memref<1x1x!tpu.dma_semaphore, #tpu.memory_space<semaphore_mem>>
      %391 = tpu.memref_squeeze %390 : memref<1x1x!tpu.dma_semaphore, #tpu.memory_space<semaphore_mem>> -> memref<!tpu.dma_semaphore, #tpu.memory_space<semaphore_mem>>
      tpu.enqueue_dma source(%387 : memref<1x128xf32, #tpu.memory_space<any>>) target(%389 : memref<1x128xf32, #tpu.memory_space<vmem>>) target_semaphore(%391 : memref<!tpu.dma_semaphore, #tpu.memory_space<semaphore_mem>>)
      %c25_i32_275 = arith.constant 25 : i32
      %392 = arith.addi %191, %c25_i32_275 : i32
      %393 = arith.index_cast %392 : i32 to index
      %394 = memref.load %arg1[%393] : memref<128xi32, #tpu.memory_space<smem>>
      %c25_i32_276 = arith.constant 25 : i32
      %c0_i32_277 = arith.constant 0 : i32
      %395 = tpu.memref_slice %arg4[%394, %c0_i32_277] : memref<64x128xf32, #tpu.memory_space<any>> -> memref<1x128xf32, #tpu.memory_space<any>>
      %c25_i32_278 = arith.constant 25 : i32
      %c0_i32_279 = arith.constant 0 : i32
      %396 = tpu.memref_slice %arg8[%190, %c25_i32_278, %c0_i32_279] : memref<2x32x128xf32, #tpu.memory_space<vmem>> -> memref<1x1x128xf32, #tpu.memory_space<vmem>>
      %397 = tpu.memref_squeeze %396 : memref<1x1x128xf32, #tpu.memory_space<vmem>> -> memref<1x128xf32, #tpu.memory_space<vmem>>
      %398 = tpu.memref_slice %arg9[%190, %c25_i32_276] : memref<2x32x!tpu.dma_semaphore, #tpu.memory_space<semaphore_mem>> -> memref<1x1x!tpu.dma_semaphore, #tpu.memory_space<semaphore_mem>>
      %399 = tpu.memref_squeeze %398 : memref<1x1x!tpu.dma_semaphore, #tpu.memory_space<semaphore_mem>> -> memref<!tpu.dma_semaphore, #tpu.memory_space<semaphore_mem>>
      tpu.enqueue_dma source(%395 : memref<1x128xf32, #tpu.memory_space<any>>) target(%397 : memref<1x128xf32, #tpu.memory_space<vmem>>) target_semaphore(%399 : memref<!tpu.dma_semaphore, #tpu.memory_space<semaphore_mem>>)
      %c26_i32_280 = arith.constant 26 : i32
      %400 = arith.addi %191, %c26_i32_280 : i32
      %401 = arith.index_cast %400 : i32 to index
      %402 = memref.load %arg1[%401] : memref<128xi32, #tpu.memory_space<smem>>
      %c26_i32_281 = arith.constant 26 : i32
      %c0_i32_282 = arith.constant 0 : i32
      %403 = tpu.memref_slice %arg4[%402, %c0_i32_282] : memref<64x128xf32, #tpu.memory_space<any>> -> memref<1x128xf32, #tpu.memory_space<any>>
      %c26_i32_283 = arith.constant 26 : i32
      %c0_i32_284 = arith.constant 0 : i32
      %404 = tpu.memref_slice %arg8[%190, %c26_i32_283, %c0_i32_284] : memref<2x32x128xf32, #tpu.memory_space<vmem>> -> memref<1x1x128xf32, #tpu.memory_space<vmem>>
      %405 = tpu.memref_squeeze %404 : memref<1x1x128xf32, #tpu.memory_space<vmem>> -> memref<1x128xf32, #tpu.memory_space<vmem>>
      %406 = tpu.memref_slice %arg9[%190, %c26_i32_281] : memref<2x32x!tpu.dma_semaphore, #tpu.memory_space<semaphore_mem>> -> memref<1x1x!tpu.dma_semaphore, #tpu.memory_space<semaphore_mem>>
      %407 = tpu.memref_squeeze %406 : memref<1x1x!tpu.dma_semaphore, #tpu.memory_space<semaphore_mem>> -> memref<!tpu.dma_semaphore, #tpu.memory_space<semaphore_mem>>
      tpu.enqueue_dma source(%403 : memref<1x128xf32, #tpu.memory_space<any>>) target(%405 : memref<1x128xf32, #tpu.memory_space<vmem>>) target_semaphore(%407 : memref<!tpu.dma_semaphore, #tpu.memory_space<semaphore_mem>>)
      %c27_i32_285 = arith.constant 27 : i32
      %408 = arith.addi %191, %c27_i32_285 : i32
      %409 = arith.index_cast %408 : i32 to index
      %410 = memref.load %arg1[%409] : memref<128xi32, #tpu.memory_space<smem>>
      %c27_i32_286 = arith.constant 27 : i32
      %c0_i32_287 = arith.constant 0 : i32
      %411 = tpu.memref_slice %arg4[%410, %c0_i32_287] : memref<64x128xf32, #tpu.memory_space<any>> -> memref<1x128xf32, #tpu.memory_space<any>>
      %c27_i32_288 = arith.constant 27 : i32
      %c0_i32_289 = arith.constant 0 : i32
      %412 = tpu.memref_slice %arg8[%190, %c27_i32_288, %c0_i32_289] : memref<2x32x128xf32, #tpu.memory_space<vmem>> -> memref<1x1x128xf32, #tpu.memory_space<vmem>>
      %413 = tpu.memref_squeeze %412 : memref<1x1x128xf32, #tpu.memory_space<vmem>> -> memref<1x128xf32, #tpu.memory_space<vmem>>
      %414 = tpu.memref_slice %arg9[%190, %c27_i32_286] : memref<2x32x!tpu.dma_semaphore, #tpu.memory_space<semaphore_mem>> -> memref<1x1x!tpu.dma_semaphore, #tpu.memory_space<semaphore_mem>>
      %415 = tpu.memref_squeeze %414 : memref<1x1x!tpu.dma_semaphore, #tpu.memory_space<semaphore_mem>> -> memref<!tpu.dma_semaphore, #tpu.memory_space<semaphore_mem>>
      tpu.enqueue_dma source(%411 : memref<1x128xf32, #tpu.memory_space<any>>) target(%413 : memref<1x128xf32, #tpu.memory_space<vmem>>) target_semaphore(%415 : memref<!tpu.dma_semaphore, #tpu.memory_space<semaphore_mem>>)
      %c28_i32_290 = arith.constant 28 : i32
      %416 = arith.addi %191, %c28_i32_290 : i32
      %417 = arith.index_cast %416 : i32 to index
      %418 = memref.load %arg1[%417] : memref<128xi32, #tpu.memory_space<smem>>
      %c28_i32_291 = arith.constant 28 : i32
      %c0_i32_292 = arith.constant 0 : i32
      %419 = tpu.memref_slice %arg4[%418, %c0_i32_292] : memref<64x128xf32, #tpu.memory_space<any>> -> memref<1x128xf32, #tpu.memory_space<any>>
      %c28_i32_293 = arith.constant 28 : i32
      %c0_i32_294 = arith.constant 0 : i32
      %420 = tpu.memref_slice %arg8[%190, %c28_i32_293, %c0_i32_294] : memref<2x32x128xf32, #tpu.memory_space<vmem>> -> memref<1x1x128xf32, #tpu.memory_space<vmem>>
      %421 = tpu.memref_squeeze %420 : memref<1x1x128xf32, #tpu.memory_space<vmem>> -> memref<1x128xf32, #tpu.memory_space<vmem>>
      %422 = tpu.memref_slice %arg9[%190, %c28_i32_291] : memref<2x32x!tpu.dma_semaphore, #tpu.memory_space<semaphore_mem>> -> memref<1x1x!tpu.dma_semaphore, #tpu.memory_space<semaphore_mem>>
      %423 = tpu.memref_squeeze %422 : memref<1x1x!tpu.dma_semaphore, #tpu.memory_space<semaphore_mem>> -> memref<!tpu.dma_semaphore, #tpu.memory_space<semaphore_mem>>
      tpu.enqueue_dma source(%419 : memref<1x128xf32, #tpu.memory_space<any>>) target(%421 : memref<1x128xf32, #tpu.memory_space<vmem>>) target_semaphore(%423 : memref<!tpu.dma_semaphore, #tpu.memory_space<semaphore_mem>>)
      %c29_i32_295 = arith.constant 29 : i32
      %424 = arith.addi %191, %c29_i32_295 : i32
      %425 = arith.index_cast %424 : i32 to index
      %426 = memref.load %arg1[%425] : memref<128xi32, #tpu.memory_space<smem>>
      %c29_i32_296 = arith.constant 29 : i32
      %c0_i32_297 = arith.constant 0 : i32
      %427 = tpu.memref_slice %arg4[%426, %c0_i32_297] : memref<64x128xf32, #tpu.memory_space<any>> -> memref<1x128xf32, #tpu.memory_space<any>>
      %c29_i32_298 = arith.constant 29 : i32
      %c0_i32_299 = arith.constant 0 : i32
      %428 = tpu.memref_slice %arg8[%190, %c29_i32_298, %c0_i32_299] : memref<2x32x128xf32, #tpu.memory_space<vmem>> -> memref<1x1x128xf32, #tpu.memory_space<vmem>>
      %429 = tpu.memref_squeeze %428 : memref<1x1x128xf32, #tpu.memory_space<vmem>> -> memref<1x128xf32, #tpu.memory_space<vmem>>
      %430 = tpu.memref_slice %arg9[%190, %c29_i32_296] : memref<2x32x!tpu.dma_semaphore, #tpu.memory_space<semaphore_mem>> -> memref<1x1x!tpu.dma_semaphore, #tpu.memory_space<semaphore_mem>>
      %431 = tpu.memref_squeeze %430 : memref<1x1x!tpu.dma_semaphore, #tpu.memory_space<semaphore_mem>> -> memref<!tpu.dma_semaphore, #tpu.memory_space<semaphore_mem>>
      tpu.enqueue_dma source(%427 : memref<1x128xf32, #tpu.memory_space<any>>) target(%429 : memref<1x128xf32, #tpu.memory_space<vmem>>) target_semaphore(%431 : memref<!tpu.dma_semaphore, #tpu.memory_space<semaphore_mem>>)
      %c30_i32_300 = arith.constant 30 : i32
      %432 = arith.addi %191, %c30_i32_300 : i32
      %433 = arith.index_cast %432 : i32 to index
      %434 = memref.load %arg1[%433] : memref<128xi32, #tpu.memory_space<smem>>
      %c30_i32_301 = arith.constant 30 : i32
      %c0_i32_302 = arith.constant 0 : i32
      %435 = tpu.memref_slice %arg4[%434, %c0_i32_302] : memref<64x128xf32, #tpu.memory_space<any>> -> memref<1x128xf32, #tpu.memory_space<any>>
      %c30_i32_303 = arith.constant 30 : i32
      %c0_i32_304 = arith.constant 0 : i32
      %436 = tpu.memref_slice %arg8[%190, %c30_i32_303, %c0_i32_304] : memref<2x32x128xf32, #tpu.memory_space<vmem>> -> memref<1x1x128xf32, #tpu.memory_space<vmem>>
      %437 = tpu.memref_squeeze %436 : memref<1x1x128xf32, #tpu.memory_space<vmem>> -> memref<1x128xf32, #tpu.memory_space<vmem>>
      %438 = tpu.memref_slice %arg9[%190, %c30_i32_301] : memref<2x32x!tpu.dma_semaphore, #tpu.memory_space<semaphore_mem>> -> memref<1x1x!tpu.dma_semaphore, #tpu.memory_space<semaphore_mem>>
      %439 = tpu.memref_squeeze %438 : memref<1x1x!tpu.dma_semaphore, #tpu.memory_space<semaphore_mem>> -> memref<!tpu.dma_semaphore, #tpu.memory_space<semaphore_mem>>
      tpu.enqueue_dma source(%435 : memref<1x128xf32, #tpu.memory_space<any>>) target(%437 : memref<1x128xf32, #tpu.memory_space<vmem>>) target_semaphore(%439 : memref<!tpu.dma_semaphore, #tpu.memory_space<semaphore_mem>>)
      %c31_i32_305 = arith.constant 31 : i32
      %440 = arith.addi %191, %c31_i32_305 : i32
      %441 = arith.index_cast %440 : i32 to index
      %442 = memref.load %arg1[%441] : memref<128xi32, #tpu.memory_space<smem>>
      %c31_i32_306 = arith.constant 31 : i32
      %c0_i32_307 = arith.constant 0 : i32
      %443 = tpu.memref_slice %arg4[%442, %c0_i32_307] : memref<64x128xf32, #tpu.memory_space<any>> -> memref<1x128xf32, #tpu.memory_space<any>>
      %c31_i32_308 = arith.constant 31 : i32
      %c0_i32_309 = arith.constant 0 : i32
      %444 = tpu.memref_slice %arg8[%190, %c31_i32_308, %c0_i32_309] : memref<2x32x128xf32, #tpu.memory_space<vmem>> -> memref<1x1x128xf32, #tpu.memory_space<vmem>>
      %445 = tpu.memref_squeeze %444 : memref<1x1x128xf32, #tpu.memory_space<vmem>> -> memref<1x128xf32, #tpu.memory_space<vmem>>
      %446 = tpu.memref_slice %arg9[%190, %c31_i32_306] : memref<2x32x!tpu.dma_semaphore, #tpu.memory_space<semaphore_mem>> -> memref<1x1x!tpu.dma_semaphore, #tpu.memory_space<semaphore_mem>>
      %447 = tpu.memref_squeeze %446 : memref<1x1x!tpu.dma_semaphore, #tpu.memory_space<semaphore_mem>> -> memref<!tpu.dma_semaphore, #tpu.memory_space<semaphore_mem>>
      tpu.enqueue_dma source(%443 : memref<1x128xf32, #tpu.memory_space<any>>) target(%445 : memref<1x128xf32, #tpu.memory_space<vmem>>) target_semaphore(%447 : memref<!tpu.dma_semaphore, #tpu.memory_space<semaphore_mem>>)
    } else {
    }
    %c0_i32_3 = arith.constant 0 : i32
    %c0_i32_4 = arith.constant 0 : i32
    %c0_i32_5 = arith.constant 0 : i32
    %8 = tpu.memref_slice %arg4[%c0_i32_4, %c0_i32_5] : memref<64x128xf32, #tpu.memory_space<any>> -> memref<1x128xf32, #tpu.memory_space<any>>
    %c0_i32_6 = arith.constant 0 : i32
    %c0_i32_7 = arith.constant 0 : i32
    %9 = tpu.memref_slice %arg8[%3, %c0_i32_6, %c0_i32_7] : memref<2x32x128xf32, #tpu.memory_space<vmem>> -> memref<1x1x128xf32, #tpu.memory_space<vmem>>
    %10 = tpu.memref_squeeze %9 : memref<1x1x128xf32, #tpu.memory_space<vmem>> -> memref<1x128xf32, #tpu.memory_space<vmem>>
    %11 = tpu.memref_slice %arg9[%3, %c0_i32_3] : memref<2x32x!tpu.dma_semaphore, #tpu.memory_space<semaphore_mem>> -> memref<1x1x!tpu.dma_semaphore, #tpu.memory_space<semaphore_mem>>
    %12 = tpu.memref_squeeze %11 : memref<1x1x!tpu.dma_semaphore, #tpu.memory_space<semaphore_mem>> -> memref<!tpu.dma_semaphore, #tpu.memory_space<semaphore_mem>>
    tpu.wait_dma2 semaphore(%12 : memref<!tpu.dma_semaphore, #tpu.memory_space<semaphore_mem>>) src(%8 : memref<1x128xf32, #tpu.memory_space<any>>) dst(%10 : memref<1x128xf32, #tpu.memory_space<vmem>>)
    %c1_i32_8 = arith.constant 1 : i32
    %c0_i32_9 = arith.constant 0 : i32
    %c0_i32_10 = arith.constant 0 : i32
    %13 = tpu.memref_slice %arg4[%c0_i32_9, %c0_i32_10] : memref<64x128xf32, #tpu.memory_space<any>> -> memref<1x128xf32, #tpu.memory_space<any>>
    %c1_i32_11 = arith.constant 1 : i32
    %c0_i32_12 = arith.constant 0 : i32
    %14 = tpu.memref_slice %arg8[%3, %c1_i32_11, %c0_i32_12] : memref<2x32x128xf32, #tpu.memory_space<vmem>> -> memref<1x1x128xf32, #tpu.memory_space<vmem>>
    %15 = tpu.memref_squeeze %14 : memref<1x1x128xf32, #tpu.memory_space<vmem>> -> memref<1x128xf32, #tpu.memory_space<vmem>>
    %16 = tpu.memref_slice %arg9[%3, %c1_i32_8] : memref<2x32x!tpu.dma_semaphore, #tpu.memory_space<semaphore_mem>> -> memref<1x1x!tpu.dma_semaphore, #tpu.memory_space<semaphore_mem>>
    %17 = tpu.memref_squeeze %16 : memref<1x1x!tpu.dma_semaphore, #tpu.memory_space<semaphore_mem>> -> memref<!tpu.dma_semaphore, #tpu.memory_space<semaphore_mem>>
    tpu.wait_dma2 semaphore(%17 : memref<!tpu.dma_semaphore, #tpu.memory_space<semaphore_mem>>) src(%13 : memref<1x128xf32, #tpu.memory_space<any>>) dst(%15 : memref<1x128xf32, #tpu.memory_space<vmem>>)
    %c2_i32 = arith.constant 2 : i32
    %c0_i32_13 = arith.constant 0 : i32
    %c0_i32_14 = arith.constant 0 : i32
    %18 = tpu.memref_slice %arg4[%c0_i32_13, %c0_i32_14] : memref<64x128xf32, #tpu.memory_space<any>> -> memref<1x128xf32, #tpu.memory_space<any>>
    %c2_i32_15 = arith.constant 2 : i32
    %c0_i32_16 = arith.constant 0 : i32
    %19 = tpu.memref_slice %arg8[%3, %c2_i32_15, %c0_i32_16] : memref<2x32x128xf32, #tpu.memory_space<vmem>> -> memref<1x1x128xf32, #tpu.memory_space<vmem>>
    %20 = tpu.memref_squeeze %19 : memref<1x1x128xf32, #tpu.memory_space<vmem>> -> memref<1x128xf32, #tpu.memory_space<vmem>>
    %21 = tpu.memref_slice %arg9[%3, %c2_i32] : memref<2x32x!tpu.dma_semaphore, #tpu.memory_space<semaphore_mem>> -> memref<1x1x!tpu.dma_semaphore, #tpu.memory_space<semaphore_mem>>
    %22 = tpu.memref_squeeze %21 : memref<1x1x!tpu.dma_semaphore, #tpu.memory_space<semaphore_mem>> -> memref<!tpu.dma_semaphore, #tpu.memory_space<semaphore_mem>>
    tpu.wait_dma2 semaphore(%22 : memref<!tpu.dma_semaphore, #tpu.memory_space<semaphore_mem>>) src(%18 : memref<1x128xf32, #tpu.memory_space<any>>) dst(%20 : memref<1x128xf32, #tpu.memory_space<vmem>>)
    %c3_i32 = arith.constant 3 : i32
    %c0_i32_17 = arith.constant 0 : i32
    %c0_i32_18 = arith.constant 0 : i32
    %23 = tpu.memref_slice %arg4[%c0_i32_17, %c0_i32_18] : memref<64x128xf32, #tpu.memory_space<any>> -> memref<1x128xf32, #tpu.memory_space<any>>
    %c3_i32_19 = arith.constant 3 : i32
    %c0_i32_20 = arith.constant 0 : i32
    %24 = tpu.memref_slice %arg8[%3, %c3_i32_19, %c0_i32_20] : memref<2x32x128xf32, #tpu.memory_space<vmem>> -> memref<1x1x128xf32, #tpu.memory_space<vmem>>
    %25 = tpu.memref_squeeze %24 : memref<1x1x128xf32, #tpu.memory_space<vmem>> -> memref<1x128xf32, #tpu.memory_space<vmem>>
    %26 = tpu.memref_slice %arg9[%3, %c3_i32] : memref<2x32x!tpu.dma_semaphore, #tpu.memory_space<semaphore_mem>> -> memref<1x1x!tpu.dma_semaphore, #tpu.memory_space<semaphore_mem>>
    %27 = tpu.memref_squeeze %26 : memref<1x1x!tpu.dma_semaphore, #tpu.memory_space<semaphore_mem>> -> memref<!tpu.dma_semaphore, #tpu.memory_space<semaphore_mem>>
    tpu.wait_dma2 semaphore(%27 : memref<!tpu.dma_semaphore, #tpu.memory_space<semaphore_mem>>) src(%23 : memref<1x128xf32, #tpu.memory_space<any>>) dst(%25 : memref<1x128xf32, #tpu.memory_space<vmem>>)
    %c4_i32_21 = arith.constant 4 : i32
    %c0_i32_22 = arith.constant 0 : i32
    %c0_i32_23 = arith.constant 0 : i32
    %28 = tpu.memref_slice %arg4[%c0_i32_22, %c0_i32_23] : memref<64x128xf32, #tpu.memory_space<any>> -> memref<1x128xf32, #tpu.memory_space<any>>
    %c4_i32_24 = arith.constant 4 : i32
    %c0_i32_25 = arith.constant 0 : i32
    %29 = tpu.memref_slice %arg8[%3, %c4_i32_24, %c0_i32_25] : memref<2x32x128xf32, #tpu.memory_space<vmem>> -> memref<1x1x128xf32, #tpu.memory_space<vmem>>
    %30 = tpu.memref_squeeze %29 : memref<1x1x128xf32, #tpu.memory_space<vmem>> -> memref<1x128xf32, #tpu.memory_space<vmem>>
    %31 = tpu.memref_slice %arg9[%3, %c4_i32_21] : memref<2x32x!tpu.dma_semaphore, #tpu.memory_space<semaphore_mem>> -> memref<1x1x!tpu.dma_semaphore, #tpu.memory_space<semaphore_mem>>
    %32 = tpu.memref_squeeze %31 : memref<1x1x!tpu.dma_semaphore, #tpu.memory_space<semaphore_mem>> -> memref<!tpu.dma_semaphore, #tpu.memory_space<semaphore_mem>>
    tpu.wait_dma2 semaphore(%32 : memref<!tpu.dma_semaphore, #tpu.memory_space<semaphore_mem>>) src(%28 : memref<1x128xf32, #tpu.memory_space<any>>) dst(%30 : memref<1x128xf32, #tpu.memory_space<vmem>>)
    %c5_i32 = arith.constant 5 : i32
    %c0_i32_26 = arith.constant 0 : i32
    %c0_i32_27 = arith.constant 0 : i32
    %33 = tpu.memref_slice %arg4[%c0_i32_26, %c0_i32_27] : memref<64x128xf32, #tpu.memory_space<any>> -> memref<1x128xf32, #tpu.memory_space<any>>
    %c5_i32_28 = arith.constant 5 : i32
    %c0_i32_29 = arith.constant 0 : i32
    %34 = tpu.memref_slice %arg8[%3, %c5_i32_28, %c0_i32_29] : memref<2x32x128xf32, #tpu.memory_space<vmem>> -> memref<1x1x128xf32, #tpu.memory_space<vmem>>
    %35 = tpu.memref_squeeze %34 : memref<1x1x128xf32, #tpu.memory_space<vmem>> -> memref<1x128xf32, #tpu.memory_space<vmem>>
    %36 = tpu.memref_slice %arg9[%3, %c5_i32] : memref<2x32x!tpu.dma_semaphore, #tpu.memory_space<semaphore_mem>> -> memref<1x1x!tpu.dma_semaphore, #tpu.memory_space<semaphore_mem>>
    %37 = tpu.memref_squeeze %36 : memref<1x1x!tpu.dma_semaphore, #tpu.memory_space<semaphore_mem>> -> memref<!tpu.dma_semaphore, #tpu.memory_space<semaphore_mem>>
    tpu.wait_dma2 semaphore(%37 : memref<!tpu.dma_semaphore, #tpu.memory_space<semaphore_mem>>) src(%33 : memref<1x128xf32, #tpu.memory_space<any>>) dst(%35 : memref<1x128xf32, #tpu.memory_space<vmem>>)
    %c6_i32 = arith.constant 6 : i32
    %c0_i32_30 = arith.constant 0 : i32
    %c0_i32_31 = arith.constant 0 : i32
    %38 = tpu.memref_slice %arg4[%c0_i32_30, %c0_i32_31] : memref<64x128xf32, #tpu.memory_space<any>> -> memref<1x128xf32, #tpu.memory_space<any>>
    %c6_i32_32 = arith.constant 6 : i32
    %c0_i32_33 = arith.constant 0 : i32
    %39 = tpu.memref_slice %arg8[%3, %c6_i32_32, %c0_i32_33] : memref<2x32x128xf32, #tpu.memory_space<vmem>> -> memref<1x1x128xf32, #tpu.memory_space<vmem>>
    %40 = tpu.memref_squeeze %39 : memref<1x1x128xf32, #tpu.memory_space<vmem>> -> memref<1x128xf32, #tpu.memory_space<vmem>>
    %41 = tpu.memref_slice %arg9[%3, %c6_i32] : memref<2x32x!tpu.dma_semaphore, #tpu.memory_space<semaphore_mem>> -> memref<1x1x!tpu.dma_semaphore, #tpu.memory_space<semaphore_mem>>
    %42 = tpu.memref_squeeze %41 : memref<1x1x!tpu.dma_semaphore, #tpu.memory_space<semaphore_mem>> -> memref<!tpu.dma_semaphore, #tpu.memory_space<semaphore_mem>>
    tpu.wait_dma2 semaphore(%42 : memref<!tpu.dma_semaphore, #tpu.memory_space<semaphore_mem>>) src(%38 : memref<1x128xf32, #tpu.memory_space<any>>) dst(%40 : memref<1x128xf32, #tpu.memory_space<vmem>>)
    %c7_i32 = arith.constant 7 : i32
    %c0_i32_34 = arith.constant 0 : i32
    %c0_i32_35 = arith.constant 0 : i32
    %43 = tpu.memref_slice %arg4[%c0_i32_34, %c0_i32_35] : memref<64x128xf32, #tpu.memory_space<any>> -> memref<1x128xf32, #tpu.memory_space<any>>
    %c7_i32_36 = arith.constant 7 : i32
    %c0_i32_37 = arith.constant 0 : i32
    %44 = tpu.memref_slice %arg8[%3, %c7_i32_36, %c0_i32_37] : memref<2x32x128xf32, #tpu.memory_space<vmem>> -> memref<1x1x128xf32, #tpu.memory_space<vmem>>
    %45 = tpu.memref_squeeze %44 : memref<1x1x128xf32, #tpu.memory_space<vmem>> -> memref<1x128xf32, #tpu.memory_space<vmem>>
    %46 = tpu.memref_slice %arg9[%3, %c7_i32] : memref<2x32x!tpu.dma_semaphore, #tpu.memory_space<semaphore_mem>> -> memref<1x1x!tpu.dma_semaphore, #tpu.memory_space<semaphore_mem>>
    %47 = tpu.memref_squeeze %46 : memref<1x1x!tpu.dma_semaphore, #tpu.memory_space<semaphore_mem>> -> memref<!tpu.dma_semaphore, #tpu.memory_space<semaphore_mem>>
    tpu.wait_dma2 semaphore(%47 : memref<!tpu.dma_semaphore, #tpu.memory_space<semaphore_mem>>) src(%43 : memref<1x128xf32, #tpu.memory_space<any>>) dst(%45 : memref<1x128xf32, #tpu.memory_space<vmem>>)
    %c8_i32 = arith.constant 8 : i32
    %c0_i32_38 = arith.constant 0 : i32
    %c0_i32_39 = arith.constant 0 : i32
    %48 = tpu.memref_slice %arg4[%c0_i32_38, %c0_i32_39] : memref<64x128xf32, #tpu.memory_space<any>> -> memref<1x128xf32, #tpu.memory_space<any>>
    %c8_i32_40 = arith.constant 8 : i32
    %c0_i32_41 = arith.constant 0 : i32
    %49 = tpu.memref_slice %arg8[%3, %c8_i32_40, %c0_i32_41] : memref<2x32x128xf32, #tpu.memory_space<vmem>> -> memref<1x1x128xf32, #tpu.memory_space<vmem>>
    %50 = tpu.memref_squeeze %49 : memref<1x1x128xf32, #tpu.memory_space<vmem>> -> memref<1x128xf32, #tpu.memory_space<vmem>>
    %51 = tpu.memref_slice %arg9[%3, %c8_i32] : memref<2x32x!tpu.dma_semaphore, #tpu.memory_space<semaphore_mem>> -> memref<1x1x!tpu.dma_semaphore, #tpu.memory_space<semaphore_mem>>
    %52 = tpu.memref_squeeze %51 : memref<1x1x!tpu.dma_semaphore, #tpu.memory_space<semaphore_mem>> -> memref<!tpu.dma_semaphore, #tpu.memory_space<semaphore_mem>>
    tpu.wait_dma2 semaphore(%52 : memref<!tpu.dma_semaphore, #tpu.memory_space<semaphore_mem>>) src(%48 : memref<1x128xf32, #tpu.memory_space<any>>) dst(%50 : memref<1x128xf32, #tpu.memory_space<vmem>>)
    %c9_i32 = arith.constant 9 : i32
    %c0_i32_42 = arith.constant 0 : i32
    %c0_i32_43 = arith.constant 0 : i32
    %53 = tpu.memref_slice %arg4[%c0_i32_42, %c0_i32_43] : memref<64x128xf32, #tpu.memory_space<any>> -> memref<1x128xf32, #tpu.memory_space<any>>
    %c9_i32_44 = arith.constant 9 : i32
    %c0_i32_45 = arith.constant 0 : i32
    %54 = tpu.memref_slice %arg8[%3, %c9_i32_44, %c0_i32_45] : memref<2x32x128xf32, #tpu.memory_space<vmem>> -> memref<1x1x128xf32, #tpu.memory_space<vmem>>
    %55 = tpu.memref_squeeze %54 : memref<1x1x128xf32, #tpu.memory_space<vmem>> -> memref<1x128xf32, #tpu.memory_space<vmem>>
    %56 = tpu.memref_slice %arg9[%3, %c9_i32] : memref<2x32x!tpu.dma_semaphore, #tpu.memory_space<semaphore_mem>> -> memref<1x1x!tpu.dma_semaphore, #tpu.memory_space<semaphore_mem>>
    %57 = tpu.memref_squeeze %56 : memref<1x1x!tpu.dma_semaphore, #tpu.memory_space<semaphore_mem>> -> memref<!tpu.dma_semaphore, #tpu.memory_space<semaphore_mem>>
    tpu.wait_dma2 semaphore(%57 : memref<!tpu.dma_semaphore, #tpu.memory_space<semaphore_mem>>) src(%53 : memref<1x128xf32, #tpu.memory_space<any>>) dst(%55 : memref<1x128xf32, #tpu.memory_space<vmem>>)
    %c10_i32 = arith.constant 10 : i32
    %c0_i32_46 = arith.constant 0 : i32
    %c0_i32_47 = arith.constant 0 : i32
    %58 = tpu.memref_slice %arg4[%c0_i32_46, %c0_i32_47] : memref<64x128xf32, #tpu.memory_space<any>> -> memref<1x128xf32, #tpu.memory_space<any>>
    %c10_i32_48 = arith.constant 10 : i32
    %c0_i32_49 = arith.constant 0 : i32
    %59 = tpu.memref_slice %arg8[%3, %c10_i32_48, %c0_i32_49] : memref<2x32x128xf32, #tpu.memory_space<vmem>> -> memref<1x1x128xf32, #tpu.memory_space<vmem>>
    %60 = tpu.memref_squeeze %59 : memref<1x1x128xf32, #tpu.memory_space<vmem>> -> memref<1x128xf32, #tpu.memory_space<vmem>>
    %61 = tpu.memref_slice %arg9[%3, %c10_i32] : memref<2x32x!tpu.dma_semaphore, #tpu.memory_space<semaphore_mem>> -> memref<1x1x!tpu.dma_semaphore, #tpu.memory_space<semaphore_mem>>
    %62 = tpu.memref_squeeze %61 : memref<1x1x!tpu.dma_semaphore, #tpu.memory_space<semaphore_mem>> -> memref<!tpu.dma_semaphore, #tpu.memory_space<semaphore_mem>>
    tpu.wait_dma2 semaphore(%62 : memref<!tpu.dma_semaphore, #tpu.memory_space<semaphore_mem>>) src(%58 : memref<1x128xf32, #tpu.memory_space<any>>) dst(%60 : memref<1x128xf32, #tpu.memory_space<vmem>>)
    %c11_i32 = arith.constant 11 : i32
    %c0_i32_50 = arith.constant 0 : i32
    %c0_i32_51 = arith.constant 0 : i32
    %63 = tpu.memref_slice %arg4[%c0_i32_50, %c0_i32_51] : memref<64x128xf32, #tpu.memory_space<any>> -> memref<1x128xf32, #tpu.memory_space<any>>
    %c11_i32_52 = arith.constant 11 : i32
    %c0_i32_53 = arith.constant 0 : i32
    %64 = tpu.memref_slice %arg8[%3, %c11_i32_52, %c0_i32_53] : memref<2x32x128xf32, #tpu.memory_space<vmem>> -> memref<1x1x128xf32, #tpu.memory_space<vmem>>
    %65 = tpu.memref_squeeze %64 : memref<1x1x128xf32, #tpu.memory_space<vmem>> -> memref<1x128xf32, #tpu.memory_space<vmem>>
    %66 = tpu.memref_slice %arg9[%3, %c11_i32] : memref<2x32x!tpu.dma_semaphore, #tpu.memory_space<semaphore_mem>> -> memref<1x1x!tpu.dma_semaphore, #tpu.memory_space<semaphore_mem>>
    %67 = tpu.memref_squeeze %66 : memref<1x1x!tpu.dma_semaphore, #tpu.memory_space<semaphore_mem>> -> memref<!tpu.dma_semaphore, #tpu.memory_space<semaphore_mem>>
    tpu.wait_dma2 semaphore(%67 : memref<!tpu.dma_semaphore, #tpu.memory_space<semaphore_mem>>) src(%63 : memref<1x128xf32, #tpu.memory_space<any>>) dst(%65 : memref<1x128xf32, #tpu.memory_space<vmem>>)
    %c12_i32 = arith.constant 12 : i32
    %c0_i32_54 = arith.constant 0 : i32
    %c0_i32_55 = arith.constant 0 : i32
    %68 = tpu.memref_slice %arg4[%c0_i32_54, %c0_i32_55] : memref<64x128xf32, #tpu.memory_space<any>> -> memref<1x128xf32, #tpu.memory_space<any>>
    %c12_i32_56 = arith.constant 12 : i32
    %c0_i32_57 = arith.constant 0 : i32
    %69 = tpu.memref_slice %arg8[%3, %c12_i32_56, %c0_i32_57] : memref<2x32x128xf32, #tpu.memory_space<vmem>> -> memref<1x1x128xf32, #tpu.memory_space<vmem>>
    %70 = tpu.memref_squeeze %69 : memref<1x1x128xf32, #tpu.memory_space<vmem>> -> memref<1x128xf32, #tpu.memory_space<vmem>>
    %71 = tpu.memref_slice %arg9[%3, %c12_i32] : memref<2x32x!tpu.dma_semaphore, #tpu.memory_space<semaphore_mem>> -> memref<1x1x!tpu.dma_semaphore, #tpu.memory_space<semaphore_mem>>
    %72 = tpu.memref_squeeze %71 : memref<1x1x!tpu.dma_semaphore, #tpu.memory_space<semaphore_mem>> -> memref<!tpu.dma_semaphore, #tpu.memory_space<semaphore_mem>>
    tpu.wait_dma2 semaphore(%72 : memref<!tpu.dma_semaphore, #tpu.memory_space<semaphore_mem>>) src(%68 : memref<1x128xf32, #tpu.memory_space<any>>) dst(%70 : memref<1x128xf32, #tpu.memory_space<vmem>>)
    %c13_i32 = arith.constant 13 : i32
    %c0_i32_58 = arith.constant 0 : i32
    %c0_i32_59 = arith.constant 0 : i32
    %73 = tpu.memref_slice %arg4[%c0_i32_58, %c0_i32_59] : memref<64x128xf32, #tpu.memory_space<any>> -> memref<1x128xf32, #tpu.memory_space<any>>
    %c13_i32_60 = arith.constant 13 : i32
    %c0_i32_61 = arith.constant 0 : i32
    %74 = tpu.memref_slice %arg8[%3, %c13_i32_60, %c0_i32_61] : memref<2x32x128xf32, #tpu.memory_space<vmem>> -> memref<1x1x128xf32, #tpu.memory_space<vmem>>
    %75 = tpu.memref_squeeze %74 : memref<1x1x128xf32, #tpu.memory_space<vmem>> -> memref<1x128xf32, #tpu.memory_space<vmem>>
    %76 = tpu.memref_slice %arg9[%3, %c13_i32] : memref<2x32x!tpu.dma_semaphore, #tpu.memory_space<semaphore_mem>> -> memref<1x1x!tpu.dma_semaphore, #tpu.memory_space<semaphore_mem>>
    %77 = tpu.memref_squeeze %76 : memref<1x1x!tpu.dma_semaphore, #tpu.memory_space<semaphore_mem>> -> memref<!tpu.dma_semaphore, #tpu.memory_space<semaphore_mem>>
    tpu.wait_dma2 semaphore(%77 : memref<!tpu.dma_semaphore, #tpu.memory_space<semaphore_mem>>) src(%73 : memref<1x128xf32, #tpu.memory_space<any>>) dst(%75 : memref<1x128xf32, #tpu.memory_space<vmem>>)
    %c14_i32 = arith.constant 14 : i32
    %c0_i32_62 = arith.constant 0 : i32
    %c0_i32_63 = arith.constant 0 : i32
    %78 = tpu.memref_slice %arg4[%c0_i32_62, %c0_i32_63] : memref<64x128xf32, #tpu.memory_space<any>> -> memref<1x128xf32, #tpu.memory_space<any>>
    %c14_i32_64 = arith.constant 14 : i32
    %c0_i32_65 = arith.constant 0 : i32
    %79 = tpu.memref_slice %arg8[%3, %c14_i32_64, %c0_i32_65] : memref<2x32x128xf32, #tpu.memory_space<vmem>> -> memref<1x1x128xf32, #tpu.memory_space<vmem>>
    %80 = tpu.memref_squeeze %79 : memref<1x1x128xf32, #tpu.memory_space<vmem>> -> memref<1x128xf32, #tpu.memory_space<vmem>>
    %81 = tpu.memref_slice %arg9[%3, %c14_i32] : memref<2x32x!tpu.dma_semaphore, #tpu.memory_space<semaphore_mem>> -> memref<1x1x!tpu.dma_semaphore, #tpu.memory_space<semaphore_mem>>
    %82 = tpu.memref_squeeze %81 : memref<1x1x!tpu.dma_semaphore, #tpu.memory_space<semaphore_mem>> -> memref<!tpu.dma_semaphore, #tpu.memory_space<semaphore_mem>>
    tpu.wait_dma2 semaphore(%82 : memref<!tpu.dma_semaphore, #tpu.memory_space<semaphore_mem>>) src(%78 : memref<1x128xf32, #tpu.memory_space<any>>) dst(%80 : memref<1x128xf32, #tpu.memory_space<vmem>>)
    %c15_i32 = arith.constant 15 : i32
    %c0_i32_66 = arith.constant 0 : i32
    %c0_i32_67 = arith.constant 0 : i32
    %83 = tpu.memref_slice %arg4[%c0_i32_66, %c0_i32_67] : memref<64x128xf32, #tpu.memory_space<any>> -> memref<1x128xf32, #tpu.memory_space<any>>
    %c15_i32_68 = arith.constant 15 : i32
    %c0_i32_69 = arith.constant 0 : i32
    %84 = tpu.memref_slice %arg8[%3, %c15_i32_68, %c0_i32_69] : memref<2x32x128xf32, #tpu.memory_space<vmem>> -> memref<1x1x128xf32, #tpu.memory_space<vmem>>
    %85 = tpu.memref_squeeze %84 : memref<1x1x128xf32, #tpu.memory_space<vmem>> -> memref<1x128xf32, #tpu.memory_space<vmem>>
    %86 = tpu.memref_slice %arg9[%3, %c15_i32] : memref<2x32x!tpu.dma_semaphore, #tpu.memory_space<semaphore_mem>> -> memref<1x1x!tpu.dma_semaphore, #tpu.memory_space<semaphore_mem>>
    %87 = tpu.memref_squeeze %86 : memref<1x1x!tpu.dma_semaphore, #tpu.memory_space<semaphore_mem>> -> memref<!tpu.dma_semaphore, #tpu.memory_space<semaphore_mem>>
    tpu.wait_dma2 semaphore(%87 : memref<!tpu.dma_semaphore, #tpu.memory_space<semaphore_mem>>) src(%83 : memref<1x128xf32, #tpu.memory_space<any>>) dst(%85 : memref<1x128xf32, #tpu.memory_space<vmem>>)
    %c16_i32 = arith.constant 16 : i32
    %c0_i32_70 = arith.constant 0 : i32
    %c0_i32_71 = arith.constant 0 : i32
    %88 = tpu.memref_slice %arg4[%c0_i32_70, %c0_i32_71] : memref<64x128xf32, #tpu.memory_space<any>> -> memref<1x128xf32, #tpu.memory_space<any>>
    %c16_i32_72 = arith.constant 16 : i32
    %c0_i32_73 = arith.constant 0 : i32
    %89 = tpu.memref_slice %arg8[%3, %c16_i32_72, %c0_i32_73] : memref<2x32x128xf32, #tpu.memory_space<vmem>> -> memref<1x1x128xf32, #tpu.memory_space<vmem>>
    %90 = tpu.memref_squeeze %89 : memref<1x1x128xf32, #tpu.memory_space<vmem>> -> memref<1x128xf32, #tpu.memory_space<vmem>>
    %91 = tpu.memref_slice %arg9[%3, %c16_i32] : memref<2x32x!tpu.dma_semaphore, #tpu.memory_space<semaphore_mem>> -> memref<1x1x!tpu.dma_semaphore, #tpu.memory_space<semaphore_mem>>
    %92 = tpu.memref_squeeze %91 : memref<1x1x!tpu.dma_semaphore, #tpu.memory_space<semaphore_mem>> -> memref<!tpu.dma_semaphore, #tpu.memory_space<semaphore_mem>>
    tpu.wait_dma2 semaphore(%92 : memref<!tpu.dma_semaphore, #tpu.memory_space<semaphore_mem>>) src(%88 : memref<1x128xf32, #tpu.memory_space<any>>) dst(%90 : memref<1x128xf32, #tpu.memory_space<vmem>>)
    %c17_i32 = arith.constant 17 : i32
    %c0_i32_74 = arith.constant 0 : i32
    %c0_i32_75 = arith.constant 0 : i32
    %93 = tpu.memref_slice %arg4[%c0_i32_74, %c0_i32_75] : memref<64x128xf32, #tpu.memory_space<any>> -> memref<1x128xf32, #tpu.memory_space<any>>
    %c17_i32_76 = arith.constant 17 : i32
    %c0_i32_77 = arith.constant 0 : i32
    %94 = tpu.memref_slice %arg8[%3, %c17_i32_76, %c0_i32_77] : memref<2x32x128xf32, #tpu.memory_space<vmem>> -> memref<1x1x128xf32, #tpu.memory_space<vmem>>
    %95 = tpu.memref_squeeze %94 : memref<1x1x128xf32, #tpu.memory_space<vmem>> -> memref<1x128xf32, #tpu.memory_space<vmem>>
    %96 = tpu.memref_slice %arg9[%3, %c17_i32] : memref<2x32x!tpu.dma_semaphore, #tpu.memory_space<semaphore_mem>> -> memref<1x1x!tpu.dma_semaphore, #tpu.memory_space<semaphore_mem>>
    %97 = tpu.memref_squeeze %96 : memref<1x1x!tpu.dma_semaphore, #tpu.memory_space<semaphore_mem>> -> memref<!tpu.dma_semaphore, #tpu.memory_space<semaphore_mem>>
    tpu.wait_dma2 semaphore(%97 : memref<!tpu.dma_semaphore, #tpu.memory_space<semaphore_mem>>) src(%93 : memref<1x128xf32, #tpu.memory_space<any>>) dst(%95 : memref<1x128xf32, #tpu.memory_space<vmem>>)
    %c18_i32 = arith.constant 18 : i32
    %c0_i32_78 = arith.constant 0 : i32
    %c0_i32_79 = arith.constant 0 : i32
    %98 = tpu.memref_slice %arg4[%c0_i32_78, %c0_i32_79] : memref<64x128xf32, #tpu.memory_space<any>> -> memref<1x128xf32, #tpu.memory_space<any>>
    %c18_i32_80 = arith.constant 18 : i32
    %c0_i32_81 = arith.constant 0 : i32
    %99 = tpu.memref_slice %arg8[%3, %c18_i32_80, %c0_i32_81] : memref<2x32x128xf32, #tpu.memory_space<vmem>> -> memref<1x1x128xf32, #tpu.memory_space<vmem>>
    %100 = tpu.memref_squeeze %99 : memref<1x1x128xf32, #tpu.memory_space<vmem>> -> memref<1x128xf32, #tpu.memory_space<vmem>>
    %101 = tpu.memref_slice %arg9[%3, %c18_i32] : memref<2x32x!tpu.dma_semaphore, #tpu.memory_space<semaphore_mem>> -> memref<1x1x!tpu.dma_semaphore, #tpu.memory_space<semaphore_mem>>
    %102 = tpu.memref_squeeze %101 : memref<1x1x!tpu.dma_semaphore, #tpu.memory_space<semaphore_mem>> -> memref<!tpu.dma_semaphore, #tpu.memory_space<semaphore_mem>>
    tpu.wait_dma2 semaphore(%102 : memref<!tpu.dma_semaphore, #tpu.memory_space<semaphore_mem>>) src(%98 : memref<1x128xf32, #tpu.memory_space<any>>) dst(%100 : memref<1x128xf32, #tpu.memory_space<vmem>>)
    %c19_i32 = arith.constant 19 : i32
    %c0_i32_82 = arith.constant 0 : i32
    %c0_i32_83 = arith.constant 0 : i32
    %103 = tpu.memref_slice %arg4[%c0_i32_82, %c0_i32_83] : memref<64x128xf32, #tpu.memory_space<any>> -> memref<1x128xf32, #tpu.memory_space<any>>
    %c19_i32_84 = arith.constant 19 : i32
    %c0_i32_85 = arith.constant 0 : i32
    %104 = tpu.memref_slice %arg8[%3, %c19_i32_84, %c0_i32_85] : memref<2x32x128xf32, #tpu.memory_space<vmem>> -> memref<1x1x128xf32, #tpu.memory_space<vmem>>
    %105 = tpu.memref_squeeze %104 : memref<1x1x128xf32, #tpu.memory_space<vmem>> -> memref<1x128xf32, #tpu.memory_space<vmem>>
    %106 = tpu.memref_slice %arg9[%3, %c19_i32] : memref<2x32x!tpu.dma_semaphore, #tpu.memory_space<semaphore_mem>> -> memref<1x1x!tpu.dma_semaphore, #tpu.memory_space<semaphore_mem>>
    %107 = tpu.memref_squeeze %106 : memref<1x1x!tpu.dma_semaphore, #tpu.memory_space<semaphore_mem>> -> memref<!tpu.dma_semaphore, #tpu.memory_space<semaphore_mem>>
    tpu.wait_dma2 semaphore(%107 : memref<!tpu.dma_semaphore, #tpu.memory_space<semaphore_mem>>) src(%103 : memref<1x128xf32, #tpu.memory_space<any>>) dst(%105 : memref<1x128xf32, #tpu.memory_space<vmem>>)
    %c20_i32 = arith.constant 20 : i32
    %c0_i32_86 = arith.constant 0 : i32
    %c0_i32_87 = arith.constant 0 : i32
    %108 = tpu.memref_slice %arg4[%c0_i32_86, %c0_i32_87] : memref<64x128xf32, #tpu.memory_space<any>> -> memref<1x128xf32, #tpu.memory_space<any>>
    %c20_i32_88 = arith.constant 20 : i32
    %c0_i32_89 = arith.constant 0 : i32
    %109 = tpu.memref_slice %arg8[%3, %c20_i32_88, %c0_i32_89] : memref<2x32x128xf32, #tpu.memory_space<vmem>> -> memref<1x1x128xf32, #tpu.memory_space<vmem>>
    %110 = tpu.memref_squeeze %109 : memref<1x1x128xf32, #tpu.memory_space<vmem>> -> memref<1x128xf32, #tpu.memory_space<vmem>>
    %111 = tpu.memref_slice %arg9[%3, %c20_i32] : memref<2x32x!tpu.dma_semaphore, #tpu.memory_space<semaphore_mem>> -> memref<1x1x!tpu.dma_semaphore, #tpu.memory_space<semaphore_mem>>
    %112 = tpu.memref_squeeze %111 : memref<1x1x!tpu.dma_semaphore, #tpu.memory_space<semaphore_mem>> -> memref<!tpu.dma_semaphore, #tpu.memory_space<semaphore_mem>>
    tpu.wait_dma2 semaphore(%112 : memref<!tpu.dma_semaphore, #tpu.memory_space<semaphore_mem>>) src(%108 : memref<1x128xf32, #tpu.memory_space<any>>) dst(%110 : memref<1x128xf32, #tpu.memory_space<vmem>>)
    %c21_i32 = arith.constant 21 : i32
    %c0_i32_90 = arith.constant 0 : i32
    %c0_i32_91 = arith.constant 0 : i32
    %113 = tpu.memref_slice %arg4[%c0_i32_90, %c0_i32_91] : memref<64x128xf32, #tpu.memory_space<any>> -> memref<1x128xf32, #tpu.memory_space<any>>
    %c21_i32_92 = arith.constant 21 : i32
    %c0_i32_93 = arith.constant 0 : i32
    %114 = tpu.memref_slice %arg8[%3, %c21_i32_92, %c0_i32_93] : memref<2x32x128xf32, #tpu.memory_space<vmem>> -> memref<1x1x128xf32, #tpu.memory_space<vmem>>
    %115 = tpu.memref_squeeze %114 : memref<1x1x128xf32, #tpu.memory_space<vmem>> -> memref<1x128xf32, #tpu.memory_space<vmem>>
    %116 = tpu.memref_slice %arg9[%3, %c21_i32] : memref<2x32x!tpu.dma_semaphore, #tpu.memory_space<semaphore_mem>> -> memref<1x1x!tpu.dma_semaphore, #tpu.memory_space<semaphore_mem>>
    %117 = tpu.memref_squeeze %116 : memref<1x1x!tpu.dma_semaphore, #tpu.memory_space<semaphore_mem>> -> memref<!tpu.dma_semaphore, #tpu.memory_space<semaphore_mem>>
    tpu.wait_dma2 semaphore(%117 : memref<!tpu.dma_semaphore, #tpu.memory_space<semaphore_mem>>) src(%113 : memref<1x128xf32, #tpu.memory_space<any>>) dst(%115 : memref<1x128xf32, #tpu.memory_space<vmem>>)
    %c22_i32 = arith.constant 22 : i32
    %c0_i32_94 = arith.constant 0 : i32
    %c0_i32_95 = arith.constant 0 : i32
    %118 = tpu.memref_slice %arg4[%c0_i32_94, %c0_i32_95] : memref<64x128xf32, #tpu.memory_space<any>> -> memref<1x128xf32, #tpu.memory_space<any>>
    %c22_i32_96 = arith.constant 22 : i32
    %c0_i32_97 = arith.constant 0 : i32
    %119 = tpu.memref_slice %arg8[%3, %c22_i32_96, %c0_i32_97] : memref<2x32x128xf32, #tpu.memory_space<vmem>> -> memref<1x1x128xf32, #tpu.memory_space<vmem>>
    %120 = tpu.memref_squeeze %119 : memref<1x1x128xf32, #tpu.memory_space<vmem>> -> memref<1x128xf32, #tpu.memory_space<vmem>>
    %121 = tpu.memref_slice %arg9[%3, %c22_i32] : memref<2x32x!tpu.dma_semaphore, #tpu.memory_space<semaphore_mem>> -> memref<1x1x!tpu.dma_semaphore, #tpu.memory_space<semaphore_mem>>
    %122 = tpu.memref_squeeze %121 : memref<1x1x!tpu.dma_semaphore, #tpu.memory_space<semaphore_mem>> -> memref<!tpu.dma_semaphore, #tpu.memory_space<semaphore_mem>>
    tpu.wait_dma2 semaphore(%122 : memref<!tpu.dma_semaphore, #tpu.memory_space<semaphore_mem>>) src(%118 : memref<1x128xf32, #tpu.memory_space<any>>) dst(%120 : memref<1x128xf32, #tpu.memory_space<vmem>>)
    %c23_i32 = arith.constant 23 : i32
    %c0_i32_98 = arith.constant 0 : i32
    %c0_i32_99 = arith.constant 0 : i32
    %123 = tpu.memref_slice %arg4[%c0_i32_98, %c0_i32_99] : memref<64x128xf32, #tpu.memory_space<any>> -> memref<1x128xf32, #tpu.memory_space<any>>
    %c23_i32_100 = arith.constant 23 : i32
    %c0_i32_101 = arith.constant 0 : i32
    %124 = tpu.memref_slice %arg8[%3, %c23_i32_100, %c0_i32_101] : memref<2x32x128xf32, #tpu.memory_space<vmem>> -> memref<1x1x128xf32, #tpu.memory_space<vmem>>
    %125 = tpu.memref_squeeze %124 : memref<1x1x128xf32, #tpu.memory_space<vmem>> -> memref<1x128xf32, #tpu.memory_space<vmem>>
    %126 = tpu.memref_slice %arg9[%3, %c23_i32] : memref<2x32x!tpu.dma_semaphore, #tpu.memory_space<semaphore_mem>> -> memref<1x1x!tpu.dma_semaphore, #tpu.memory_space<semaphore_mem>>
    %127 = tpu.memref_squeeze %126 : memref<1x1x!tpu.dma_semaphore, #tpu.memory_space<semaphore_mem>> -> memref<!tpu.dma_semaphore, #tpu.memory_space<semaphore_mem>>
    tpu.wait_dma2 semaphore(%127 : memref<!tpu.dma_semaphore, #tpu.memory_space<semaphore_mem>>) src(%123 : memref<1x128xf32, #tpu.memory_space<any>>) dst(%125 : memref<1x128xf32, #tpu.memory_space<vmem>>)
    %c24_i32 = arith.constant 24 : i32
    %c0_i32_102 = arith.constant 0 : i32
    %c0_i32_103 = arith.constant 0 : i32
    %128 = tpu.memref_slice %arg4[%c0_i32_102, %c0_i32_103] : memref<64x128xf32, #tpu.memory_space<any>> -> memref<1x128xf32, #tpu.memory_space<any>>
    %c24_i32_104 = arith.constant 24 : i32
    %c0_i32_105 = arith.constant 0 : i32
    %129 = tpu.memref_slice %arg8[%3, %c24_i32_104, %c0_i32_105] : memref<2x32x128xf32, #tpu.memory_space<vmem>> -> memref<1x1x128xf32, #tpu.memory_space<vmem>>
    %130 = tpu.memref_squeeze %129 : memref<1x1x128xf32, #tpu.memory_space<vmem>> -> memref<1x128xf32, #tpu.memory_space<vmem>>
    %131 = tpu.memref_slice %arg9[%3, %c24_i32] : memref<2x32x!tpu.dma_semaphore, #tpu.memory_space<semaphore_mem>> -> memref<1x1x!tpu.dma_semaphore, #tpu.memory_space<semaphore_mem>>
    %132 = tpu.memref_squeeze %131 : memref<1x1x!tpu.dma_semaphore, #tpu.memory_space<semaphore_mem>> -> memref<!tpu.dma_semaphore, #tpu.memory_space<semaphore_mem>>
    tpu.wait_dma2 semaphore(%132 : memref<!tpu.dma_semaphore, #tpu.memory_space<semaphore_mem>>) src(%128 : memref<1x128xf32, #tpu.memory_space<any>>) dst(%130 : memref<1x128xf32, #tpu.memory_space<vmem>>)
    %c25_i32 = arith.constant 25 : i32
    %c0_i32_106 = arith.constant 0 : i32
    %c0_i32_107 = arith.constant 0 : i32
    %133 = tpu.memref_slice %arg4[%c0_i32_106, %c0_i32_107] : memref<64x128xf32, #tpu.memory_space<any>> -> memref<1x128xf32, #tpu.memory_space<any>>
    %c25_i32_108 = arith.constant 25 : i32
    %c0_i32_109 = arith.constant 0 : i32
    %134 = tpu.memref_slice %arg8[%3, %c25_i32_108, %c0_i32_109] : memref<2x32x128xf32, #tpu.memory_space<vmem>> -> memref<1x1x128xf32, #tpu.memory_space<vmem>>
    %135 = tpu.memref_squeeze %134 : memref<1x1x128xf32, #tpu.memory_space<vmem>> -> memref<1x128xf32, #tpu.memory_space<vmem>>
    %136 = tpu.memref_slice %arg9[%3, %c25_i32] : memref<2x32x!tpu.dma_semaphore, #tpu.memory_space<semaphore_mem>> -> memref<1x1x!tpu.dma_semaphore, #tpu.memory_space<semaphore_mem>>
    %137 = tpu.memref_squeeze %136 : memref<1x1x!tpu.dma_semaphore, #tpu.memory_space<semaphore_mem>> -> memref<!tpu.dma_semaphore, #tpu.memory_space<semaphore_mem>>
    tpu.wait_dma2 semaphore(%137 : memref<!tpu.dma_semaphore, #tpu.memory_space<semaphore_mem>>) src(%133 : memref<1x128xf32, #tpu.memory_space<any>>) dst(%135 : memref<1x128xf32, #tpu.memory_space<vmem>>)
    %c26_i32 = arith.constant 26 : i32
    %c0_i32_110 = arith.constant 0 : i32
    %c0_i32_111 = arith.constant 0 : i32
    %138 = tpu.memref_slice %arg4[%c0_i32_110, %c0_i32_111] : memref<64x128xf32, #tpu.memory_space<any>> -> memref<1x128xf32, #tpu.memory_space<any>>
    %c26_i32_112 = arith.constant 26 : i32
    %c0_i32_113 = arith.constant 0 : i32
    %139 = tpu.memref_slice %arg8[%3, %c26_i32_112, %c0_i32_113] : memref<2x32x128xf32, #tpu.memory_space<vmem>> -> memref<1x1x128xf32, #tpu.memory_space<vmem>>
    %140 = tpu.memref_squeeze %139 : memref<1x1x128xf32, #tpu.memory_space<vmem>> -> memref<1x128xf32, #tpu.memory_space<vmem>>
    %141 = tpu.memref_slice %arg9[%3, %c26_i32] : memref<2x32x!tpu.dma_semaphore, #tpu.memory_space<semaphore_mem>> -> memref<1x1x!tpu.dma_semaphore, #tpu.memory_space<semaphore_mem>>
    %142 = tpu.memref_squeeze %141 : memref<1x1x!tpu.dma_semaphore, #tpu.memory_space<semaphore_mem>> -> memref<!tpu.dma_semaphore, #tpu.memory_space<semaphore_mem>>
    tpu.wait_dma2 semaphore(%142 : memref<!tpu.dma_semaphore, #tpu.memory_space<semaphore_mem>>) src(%138 : memref<1x128xf32, #tpu.memory_space<any>>) dst(%140 : memref<1x128xf32, #tpu.memory_space<vmem>>)
    %c27_i32 = arith.constant 27 : i32
    %c0_i32_114 = arith.constant 0 : i32
    %c0_i32_115 = arith.constant 0 : i32
    %143 = tpu.memref_slice %arg4[%c0_i32_114, %c0_i32_115] : memref<64x128xf32, #tpu.memory_space<any>> -> memref<1x128xf32, #tpu.memory_space<any>>
    %c27_i32_116 = arith.constant 27 : i32
    %c0_i32_117 = arith.constant 0 : i32
    %144 = tpu.memref_slice %arg8[%3, %c27_i32_116, %c0_i32_117] : memref<2x32x128xf32, #tpu.memory_space<vmem>> -> memref<1x1x128xf32, #tpu.memory_space<vmem>>
    %145 = tpu.memref_squeeze %144 : memref<1x1x128xf32, #tpu.memory_space<vmem>> -> memref<1x128xf32, #tpu.memory_space<vmem>>
    %146 = tpu.memref_slice %arg9[%3, %c27_i32] : memref<2x32x!tpu.dma_semaphore, #tpu.memory_space<semaphore_mem>> -> memref<1x1x!tpu.dma_semaphore, #tpu.memory_space<semaphore_mem>>
    %147 = tpu.memref_squeeze %146 : memref<1x1x!tpu.dma_semaphore, #tpu.memory_space<semaphore_mem>> -> memref<!tpu.dma_semaphore, #tpu.memory_space<semaphore_mem>>
    tpu.wait_dma2 semaphore(%147 : memref<!tpu.dma_semaphore, #tpu.memory_space<semaphore_mem>>) src(%143 : memref<1x128xf32, #tpu.memory_space<any>>) dst(%145 : memref<1x128xf32, #tpu.memory_space<vmem>>)
    %c28_i32 = arith.constant 28 : i32
    %c0_i32_118 = arith.constant 0 : i32
    %c0_i32_119 = arith.constant 0 : i32
    %148 = tpu.memref_slice %arg4[%c0_i32_118, %c0_i32_119] : memref<64x128xf32, #tpu.memory_space<any>> -> memref<1x128xf32, #tpu.memory_space<any>>
    %c28_i32_120 = arith.constant 28 : i32
    %c0_i32_121 = arith.constant 0 : i32
    %149 = tpu.memref_slice %arg8[%3, %c28_i32_120, %c0_i32_121] : memref<2x32x128xf32, #tpu.memory_space<vmem>> -> memref<1x1x128xf32, #tpu.memory_space<vmem>>
    %150 = tpu.memref_squeeze %149 : memref<1x1x128xf32, #tpu.memory_space<vmem>> -> memref<1x128xf32, #tpu.memory_space<vmem>>
    %151 = tpu.memref_slice %arg9[%3, %c28_i32] : memref<2x32x!tpu.dma_semaphore, #tpu.memory_space<semaphore_mem>> -> memref<1x1x!tpu.dma_semaphore, #tpu.memory_space<semaphore_mem>>
    %152 = tpu.memref_squeeze %151 : memref<1x1x!tpu.dma_semaphore, #tpu.memory_space<semaphore_mem>> -> memref<!tpu.dma_semaphore, #tpu.memory_space<semaphore_mem>>
    tpu.wait_dma2 semaphore(%152 : memref<!tpu.dma_semaphore, #tpu.memory_space<semaphore_mem>>) src(%148 : memref<1x128xf32, #tpu.memory_space<any>>) dst(%150 : memref<1x128xf32, #tpu.memory_space<vmem>>)
    %c29_i32 = arith.constant 29 : i32
    %c0_i32_122 = arith.constant 0 : i32
    %c0_i32_123 = arith.constant 0 : i32
    %153 = tpu.memref_slice %arg4[%c0_i32_122, %c0_i32_123] : memref<64x128xf32, #tpu.memory_space<any>> -> memref<1x128xf32, #tpu.memory_space<any>>
    %c29_i32_124 = arith.constant 29 : i32
    %c0_i32_125 = arith.constant 0 : i32
    %154 = tpu.memref_slice %arg8[%3, %c29_i32_124, %c0_i32_125] : memref<2x32x128xf32, #tpu.memory_space<vmem>> -> memref<1x1x128xf32, #tpu.memory_space<vmem>>
    %155 = tpu.memref_squeeze %154 : memref<1x1x128xf32, #tpu.memory_space<vmem>> -> memref<1x128xf32, #tpu.memory_space<vmem>>
    %156 = tpu.memref_slice %arg9[%3, %c29_i32] : memref<2x32x!tpu.dma_semaphore, #tpu.memory_space<semaphore_mem>> -> memref<1x1x!tpu.dma_semaphore, #tpu.memory_space<semaphore_mem>>
    %157 = tpu.memref_squeeze %156 : memref<1x1x!tpu.dma_semaphore, #tpu.memory_space<semaphore_mem>> -> memref<!tpu.dma_semaphore, #tpu.memory_space<semaphore_mem>>
    tpu.wait_dma2 semaphore(%157 : memref<!tpu.dma_semaphore, #tpu.memory_space<semaphore_mem>>) src(%153 : memref<1x128xf32, #tpu.memory_space<any>>) dst(%155 : memref<1x128xf32, #tpu.memory_space<vmem>>)
    %c30_i32 = arith.constant 30 : i32
    %c0_i32_126 = arith.constant 0 : i32
    %c0_i32_127 = arith.constant 0 : i32
    %158 = tpu.memref_slice %arg4[%c0_i32_126, %c0_i32_127] : memref<64x128xf32, #tpu.memory_space<any>> -> memref<1x128xf32, #tpu.memory_space<any>>
    %c30_i32_128 = arith.constant 30 : i32
    %c0_i32_129 = arith.constant 0 : i32
    %159 = tpu.memref_slice %arg8[%3, %c30_i32_128, %c0_i32_129] : memref<2x32x128xf32, #tpu.memory_space<vmem>> -> memref<1x1x128xf32, #tpu.memory_space<vmem>>
    %160 = tpu.memref_squeeze %159 : memref<1x1x128xf32, #tpu.memory_space<vmem>> -> memref<1x128xf32, #tpu.memory_space<vmem>>
    %161 = tpu.memref_slice %arg9[%3, %c30_i32] : memref<2x32x!tpu.dma_semaphore, #tpu.memory_space<semaphore_mem>> -> memref<1x1x!tpu.dma_semaphore, #tpu.memory_space<semaphore_mem>>
    %162 = tpu.memref_squeeze %161 : memref<1x1x!tpu.dma_semaphore, #tpu.memory_space<semaphore_mem>> -> memref<!tpu.dma_semaphore, #tpu.memory_space<semaphore_mem>>
    tpu.wait_dma2 semaphore(%162 : memref<!tpu.dma_semaphore, #tpu.memory_space<semaphore_mem>>) src(%158 : memref<1x128xf32, #tpu.memory_space<any>>) dst(%160 : memref<1x128xf32, #tpu.memory_space<vmem>>)
    %c31_i32 = arith.constant 31 : i32
    %c0_i32_130 = arith.constant 0 : i32
    %c0_i32_131 = arith.constant 0 : i32
    %163 = tpu.memref_slice %arg4[%c0_i32_130, %c0_i32_131] : memref<64x128xf32, #tpu.memory_space<any>> -> memref<1x128xf32, #tpu.memory_space<any>>
    %c31_i32_132 = arith.constant 31 : i32
    %c0_i32_133 = arith.constant 0 : i32
    %164 = tpu.memref_slice %arg8[%3, %c31_i32_132, %c0_i32_133] : memref<2x32x128xf32, #tpu.memory_space<vmem>> -> memref<1x1x128xf32, #tpu.memory_space<vmem>>
    %165 = tpu.memref_squeeze %164 : memref<1x1x128xf32, #tpu.memory_space<vmem>> -> memref<1x128xf32, #tpu.memory_space<vmem>>
    %166 = tpu.memref_slice %arg9[%3, %c31_i32] : memref<2x32x!tpu.dma_semaphore, #tpu.memory_space<semaphore_mem>> -> memref<1x1x!tpu.dma_semaphore, #tpu.memory_space<semaphore_mem>>
    %167 = tpu.memref_squeeze %166 : memref<1x1x!tpu.dma_semaphore, #tpu.memory_space<semaphore_mem>> -> memref<!tpu.dma_semaphore, #tpu.memory_space<semaphore_mem>>
    tpu.wait_dma2 semaphore(%167 : memref<!tpu.dma_semaphore, #tpu.memory_space<semaphore_mem>>) src(%163 : memref<1x128xf32, #tpu.memory_space<any>>) dst(%165 : memref<1x128xf32, #tpu.memory_space<vmem>>)
    %168 = arith.index_cast %3 : i32 to index
    %c0 = arith.constant 0 : index
    %c0_134 = arith.constant 0 : index
    %169 = vector.load %arg8[%168, %c0, %c0_134] : memref<2x32x128xf32, #tpu.memory_space<vmem>>, vector<1x32x128xf32>
    %170 = vector.shape_cast %169 : vector<1x32x128xf32> to vector<32x128xf32>
    %c0_135 = arith.constant 0 : index
    %c0_136 = arith.constant 0 : index
    %c0_137 = arith.constant 0 : index
    %171 = vector.load %arg2[%c0_135, %c0_136, %c0_137] : memref<1x1x32xi32, #tpu.memory_space<vmem>>, vector<1x1x32xi32>
    %172 = vector.shape_cast %171 : vector<1x1x32xi32> to vector<1x32xi32>
    %c0_138 = arith.constant 0 : index
    %c0_139 = arith.constant 0 : index
    %c0_140 = arith.constant 0 : index
    %173 = vector.load %arg3[%c0_138, %c0_139, %c0_140] : memref<1x1x32xf32, #tpu.memory_space<vmem>>, vector<1x1x32xf32>
    %174 = vector.shape_cast %173 : vector<1x1x32xf32> to vector<1x32xf32>
    %175 = tpu.iota {dimensions = array<i32: 0>} : vector<8x32xi32>
    %176 = vector.broadcast %172 : vector<1x32xi32> to vector<8x32xi32>
    %177 = arith.cmpi eq, %175, %176 : vector<8x32xi32>
    %cst = arith.constant 0.000000e+00 : f32
    %178 = vector.shape_cast %174 : vector<1x32xf32> to vector<1x32xf32>
    %179 = vector.broadcast %178 : vector<1x32xf32> to vector<8x32xf32>
    %180 = vector.broadcast %cst : f32 to vector<8x32xf32>
    %181 = arith.select %177, %179, %180 : vector<8x32xi1>, vector<8x32xf32>
    %c0_141 = arith.constant 0 : index
    %c0_142 = arith.constant 0 : index
    %182 = vector.load %arg12[%c0_141, %c0_142] : memref<8x128xf32, #tpu.memory_space<vmem>>, vector<8x128xf32>
    %cst_143 = arith.constant dense<0.000000e+00> : vector<8x128xf32>
    %183 = tpu.matmul %181, %170, %cst_143 {dimension_numbers = #tpu.dot_dimension_numbers<[1], [0], [0], [1], [0, 0, 1, 1], [], []>} : vector<8x32xf32>, vector<32x128xf32>, vector<8x128xf32> -> vector<8x128xf32>
    %184 = arith.addf %182, %183 : vector<8x128xf32>
    %c0_144 = arith.constant 0 : index
    %c0_145 = arith.constant 0 : index
    %185 = vector.load %arg12[%c0_144, %c0_145] : memref<8x128xf32, #tpu.memory_space<vmem>>, vector<8x128xf32>
    tpu.vector_store %arg12[%c0_144, %c0_145], %184 {strides = array<i32>} : memref<8x128xf32, #tpu.memory_space<vmem>>, vector<8x128xf32>,
    %c3_i32_146 = arith.constant 3 : i32
    %186 = arith.cmpi eq, %arg0, %c3_i32_146 : i32
    %187 = arith.extui %186 : i1 to i32
    %c0_i32_147 = arith.constant 0 : i32
    %188 = arith.cmpi ne, %187, %c0_i32_147 : i32
    scf.if %188 {
      %c0_i32_148 = arith.constant 0 : i32
      %189 = tpu.memref_slice %arg11[%c0_i32_148] : memref<1x!tpu.dma_semaphore, #tpu.memory_space<semaphore_mem>> -> memref<1x!tpu.dma_semaphore, #tpu.memory_space<semaphore_mem>>
      %190 = tpu.memref_squeeze %189 : memref<1x!tpu.dma_semaphore, #tpu.memory_space<semaphore_mem>> -> memref<!tpu.dma_semaphore, #tpu.memory_space<semaphore_mem>>
      tpu.wait_dma2 semaphore(%190 : memref<!tpu.dma_semaphore, #tpu.memory_space<semaphore_mem>>) src(%arg5 : memref<128x128xbf16, #tpu.memory_space<any>>) dst(%arg10 : memref<128x128xbf16, #tpu.memory_space<vmem>>)
      %c0_149 = arith.constant 0 : index
      %c0_150 = arith.constant 0 : index
      %191 = vector.load %arg12[%c0_149, %c0_150] : memref<8x128xf32, #tpu.memory_space<vmem>>, vector<8x128xf32>
      %cst_151 = arith.constant 0.000000e+00 : f32
      %192 = vector.broadcast %cst_151 : f32 to vector<8x128xf32>
      %193 = arith.cmpf oge, %191, %192 : vector<8x128xf32>
      %cst_152 = arith.constant 1.000000e-01 : f32
      %194 = vector.broadcast %cst_152 : f32 to vector<8x128xf32>
      %195 = arith.mulf %194, %191 : vector<8x128xf32>
      %196 = arith.select %193, %191, %195 : vector<8x128xi1>, vector<8x128xf32>
      %197 = arith.truncf %196 : vector<8x128xf32> to vector<8x128xbf16>
      %c0_153 = arith.constant 0 : index
      %c0_154 = arith.constant 0 : index
      %198 = vector.load %arg10[%c0_153, %c0_154] : memref<128x128xbf16, #tpu.memory_space<vmem>>, vector<128x128xbf16>
      %cst_155 = arith.constant dense<0.000000e+00> : vector<8x128xf32>
      %199 = tpu.matmul %197, %198, %cst_155 {dimension_numbers = #tpu.dot_dimension_numbers<[1], [0], [0], [1], [0, 0, 1, 1], [], []>} : vector<8x128xbf16>, vector<128x128xbf16>, vector<8x128xf32> -> vector<8x128xf32>
      %c0_156 = arith.constant 0 : index
      %c0_157 = arith.constant 0 : index
      %200 = vector.load %arg6[%c0_156, %c0_157] : memref<1x128xf32, #tpu.memory_space<vmem>>, vector<1x128xf32>
      %201 = vector.broadcast %200 : vector<1x128xf32> to vector<8x128xf32>
      %202 = arith.addf %199, %201 : vector<8x128xf32>
      %c0_158 = arith.constant 0 : index
      %c0_159 = arith.constant 0 : index
      %203 = vector.load %arg7[%c0_158, %c0_159] : memref<8x128xf32, #tpu.memory_space<vmem>>, vector<8x128xf32>
      tpu.vector_store %arg7[%c0_158, %c0_159], %202 {strides = array<i32>} : memref<8x128xf32, #tpu.memory_space<vmem>>, vector<8x128xf32>,
    } else {
    }
    return
  }
  func.func @transform_0(%arg0: i32, %arg1: memref<128xi32, #tpu.memory_space<smem>>) -> (i32, i32, i32) {
    %c0_i32 = arith.constant 0 : i32
    %c0_i32_0 = arith.constant 0 : i32
    %c0_i32_1 = arith.constant 0 : i32
    return %arg0, %c0_i32, %c0_i32_0 : i32, i32, i32
  }
  func.func @transform_1(%arg0: i32, %arg1: memref<128xi32, #tpu.memory_space<smem>>) -> (i32, i32, i32) {
    %c0_i32 = arith.constant 0 : i32
    %c0_i32_0 = arith.constant 0 : i32
    %c0_i32_1 = arith.constant 0 : i32
    return %arg0, %c0_i32, %c0_i32_0 : i32, i32, i32
  }
  func.func @transform_4(%arg0: i32, %arg1: memref<128xi32, #tpu.memory_space<smem>>) -> (i32, i32) {
    %c0_i32 = arith.constant 0 : i32
    %c0_i32_0 = arith.constant 0 : i32
    %c0_i32_1 = arith.constant 0 : i32
    return %c0_i32, %c0_i32_0 : i32, i32
  }
  func.func @transform_5(%arg0: i32, %arg1: memref<128xi32, #tpu.memory_space<smem>>) -> (i32, i32) {
    %c0_i32 = arith.constant 0 : i32
    %c0_i32_0 = arith.constant 0 : i32
    %c0_i32_1 = arith.constant 0 : i32
    return %c0_i32, %c0_i32_0 : i32, i32
  }
}

</mosaic_0001>

<llo_original>
// kernel: tpu_custom_call.1
$region0: #{tpu_custom_call.1}
  #allocation0 [shape = 'u32[]', space=smem, size = 0x4, offset = 0x4, fixed_abs, tag = 'smem constant byte address 0x4 - core index']
  #allocation1 [shape = 'u32[144,128]{1,0:T(1,128)}', space=vmem, size = 0x12000, scoped, tag = 'internal scratch']
  #allocation2 [shape = 'f32[2,32,128]{2,1,0:T(8,128)}', space=vmem, size = 0x8000, scoped, tag = 'scratch operand']
  #allocation3 [shape = 's32[64]{0}', space=sflag, size = 0x100, scoped, tag = 'scratch operand']
  #allocation4 [shape = 'bf16[128,128]{1,0:T(8,128)(2,1)}', space=vmem, size = 0x8000, scoped, tag = 'scratch operand']
  #allocation5 [shape = 's32[1]{0}', space=sflag, size = 0x4, scoped, tag = 'scratch operand']
  #allocation6 [shape = 'f32[8,128]{1,0:T(8,128)}', space=vmem, size = 0x1000, scoped, tag = 'scratch operand']
  #allocation7 [shape = 's32[1]{0}', space=sflag, size = 0x4, scoped, tag = 'scoped memory for tpu_custom_call.1']
  #allocation8 [shape = 'u8[512]{0}', space=smem, size = 0x200, scoped, tag = 'prefetched SMEM operand 0']
  #allocation15 [shape = 's32[]', space=sflag, size = 0x4, offset = 0, fixed_abs, tag = 'sflag constant byte address 0x0 - dummy sync flag']
  #allocation16 [shape = 's32[]', space=sflag, size = 0x4, offset = 0, fixed_abs, tag = 'sflag constant byte address 0x0 - dummy sync flag']
  #allocation17 [shape = 'u32[]', space=smem, size = 0x4, offset = 0x44, fixed_abs, tag = 'smem constant byte address 0x44 - assertion arg 0']
  #allocation18 [shape = 'u32[]', space=smem, size = 0x4, offset = 0x48, fixed_abs, tag = 'smem constant byte address 0x48 - assertion arg 1']
  #allocation19 [shape = 's32[]', space=sflag, size = 0x4, offset = 0, fixed_abs, tag = 'sflag constant byte address 0x0 - dummy sync flag']
  #allocation20 [shape = 's32[]', space=sflag, size = 0x4, offset = 0, fixed_abs, tag = 'sflag constant byte address 0x0 - dummy sync flag']
  #allocation21 [shape = 's32[]', space=sflag, size = 0x4, offset = 0, fixed_abs, tag = 'sflag constant byte address 0x0 - dummy sync flag']
  #allocation22 [shape = 's32[]', space=sflag, size = 0x4, offset = 0, fixed_abs, tag = 'sflag constant byte address 0x0 - dummy sync flag']
  #allocation23 [shape = 's32[]', space=sflag, size = 0x4, offset = 0, fixed_abs, tag = 'sflag constant byte address 0x0 - dummy sync flag']
  #allocation24 [shape = 's32[]', space=sflag, size = 0x4, offset = 0, fixed_abs, tag = 'sflag constant byte address 0x0 - dummy sync flag']
  #allocation25 [shape = 's32[]', space=sflag, size = 0x4, offset = 0, fixed_abs, tag = 'sflag constant byte address 0x0 - dummy sync flag']
  #allocation26 [shape = 's32[]', space=sflag, size = 0x4, offset = 0, fixed_abs, tag = 'sflag constant byte address 0x0 - dummy sync flag']
  #allocation27 [shape = 's32[]', space=sflag, size = 0x4, offset = 0, fixed_abs, tag = 'sflag constant byte address 0x0 - dummy sync flag']
  #allocation28 [shape = 's32[]', space=sflag, size = 0x4, offset = 0, fixed_abs, tag = 'sflag constant byte address 0x0 - dummy sync flag']
  #allocation29 [shape = 's32[]', space=sflag, size = 0x4, offset = 0, fixed_abs, tag = 'sflag constant byte address 0x0 - dummy sync flag']
  #allocation30 [shape = 's32[]', space=sflag, size = 0x4, offset = 0, fixed_abs, tag = 'sflag constant byte address 0x0 - dummy sync flag']
  #allocation31 [shape = 's32[]', space=sflag, size = 0x4, offset = 0, fixed_abs, tag = 'sflag constant byte address 0x0 - dummy sync flag']
  #allocation32 [shape = 's32[]', space=sflag, size = 0x4, offset = 0, fixed_abs, tag = 'sflag constant byte address 0x0 - dummy sync flag']
  #allocation33 [shape = 's32[]', space=sflag, size = 0x4, offset = 0, fixed_abs, tag = 'sflag constant byte address 0x0 - dummy sync flag']
  #allocation34 [shape = 's32[]', space=sflag, size = 0x4, offset = 0, fixed_abs, tag = 'sflag constant byte address 0x0 - dummy sync flag']
  #allocation35 [shape = 's32[]', space=sflag, size = 0x4, offset = 0, fixed_abs, tag = 'sflag constant byte address 0x0 - dummy sync flag']
  #allocation36 [shape = 's32[]', space=sflag, size = 0x4, offset = 0, fixed_abs, tag = 'sflag constant byte address 0x0 - dummy sync flag']
  #allocation37 [shape = 's32[]', space=sflag, size = 0x4, offset = 0, fixed_abs, tag = 'sflag constant byte address 0x0 - dummy sync flag']
  #allocation38 [shape = 's32[]', space=sflag, size = 0x4, offset = 0, fixed_abs, tag = 'sflag constant byte address 0x0 - dummy sync flag']
  #allocation39 [shape = 's32[]', space=sflag, size = 0x4, offset = 0, fixed_abs, tag = 'sflag constant byte address 0x0 - dummy sync flag']
  #allocation40 [shape = 's32[]', space=sflag, size = 0x4, offset = 0, fixed_abs, tag = 'sflag constant byte address 0x0 - dummy sync flag']
  #allocation41 [shape = 's32[]', space=sflag, size = 0x4, offset = 0, fixed_abs, tag = 'sflag constant byte address 0x0 - dummy sync flag']
  #allocation42 [shape = 's32[]', space=sflag, size = 0x4, offset = 0, fixed_abs, tag = 'sflag constant byte address 0x0 - dummy sync flag']
  #allocation43 [shape = 's32[]', space=sflag, size = 0x4, offset = 0, fixed_abs, tag = 'sflag constant byte address 0x0 - dummy sync flag']
  #allocation44 [shape = 's32[]', space=sflag, size = 0x4, offset = 0, fixed_abs, tag = 'sflag constant byte address 0x0 - dummy sync flag']
  #allocation45 [shape = 's32[]', space=sflag, size = 0x4, offset = 0, fixed_abs, tag = 'sflag constant byte address 0x0 - dummy sync flag']
  #allocation46 [shape = 's32[]', space=sflag, size = 0x4, offset = 0, fixed_abs, tag = 'sflag constant byte address 0x0 - dummy sync flag']
  #allocation47 [shape = 's32[]', space=sflag, size = 0x4, offset = 0, fixed_abs, tag = 'sflag constant byte address 0x0 - dummy sync flag']
  #allocation48 [shape = 's32[]', space=sflag, size = 0x4, offset = 0, fixed_abs, tag = 'sflag constant byte address 0x0 - dummy sync flag']
  #allocation49 [shape = 's32[]', space=sflag, size = 0x4, offset = 0, fixed_abs, tag = 'sflag constant byte address 0x0 - dummy sync flag']
  #allocation50 [shape = 's32[]', space=sflag, size = 0x4, offset = 0, fixed_abs, tag = 'sflag constant byte address 0x0 - dummy sync flag']
  #allocation51 [shape = 's32[]', space=sflag, size = 0x4, offset = 0, fixed_abs, tag = 'sflag constant byte address 0x0 - dummy sync flag']
  #allocation52 [shape = 's32[]', space=sflag, size = 0x4, offset = 0, fixed_abs, tag = 'sflag constant byte address 0x0 - dummy sync flag']
  #allocation53 [shape = 's32[]', space=sflag, size = 0x4, offset = 0, fixed_abs, tag = 'sflag constant byte address 0x0 - dummy sync flag']
  #allocation54 [shape = 's32[]', space=sflag, size = 0x4, offset = 0, fixed_abs, tag = 'sflag constant byte address 0x0 - dummy sync flag']
  #allocation55 [shape = 's32[]', space=sflag, size = 0x4, offset = 0, fixed_abs, tag = 'sflag constant byte address 0x0 - dummy sync flag']
  #allocation56 [shape = 's32[]', space=sflag, size = 0x4, offset = 0, fixed_abs, tag = 'sflag constant byte address 0x0 - dummy sync flag']
  #allocation57 [shape = 's32[]', space=sflag, size = 0x4, offset = 0, fixed_abs, tag = 'sflag constant byte address 0x0 - dummy sync flag']
  #allocation58 [shape = 's32[]', space=sflag, size = 0x4, offset = 0, fixed_abs, tag = 'sflag constant byte address 0x0 - dummy sync flag']
  #allocation59 [shape = 's32[]', space=sflag, size = 0x4, offset = 0, fixed_abs, tag = 'sflag constant byte address 0x0 - dummy sync flag']
  #allocation60 [shape = 's32[]', space=sflag, size = 0x4, offset = 0, fixed_abs, tag = 'sflag constant byte address 0x0 - dummy sync flag']
  #allocation61 [shape = 's32[]', space=sflag, size = 0x4, offset = 0, fixed_abs, tag = 'sflag constant byte address 0x0 - dummy sync flag']
  #allocation62 [shape = 's32[]', space=sflag, size = 0x4, offset = 0, fixed_abs, tag = 'sflag constant byte address 0x0 - dummy sync flag']
  #allocation63 [shape = 's32[]', space=sflag, size = 0x4, offset = 0, fixed_abs, tag = 'sflag constant byte address 0x0 - dummy sync flag']
  #allocation64 [shape = 's32[]', space=sflag, size = 0x4, offset = 0, fixed_abs, tag = 'sflag constant byte address 0x0 - dummy sync flag']
  #allocation65 [shape = 's32[]', space=sflag, size = 0x4, offset = 0, fixed_abs, tag = 'sflag constant byte address 0x0 - dummy sync flag']
  #allocation66 [shape = 's32[]', space=sflag, size = 0x4, offset = 0, fixed_abs, tag = 'sflag constant byte address 0x0 - dummy sync flag']
  #allocation67 [shape = 's32[]', space=sflag, size = 0x4, offset = 0, fixed_abs, tag = 'sflag constant byte address 0x0 - dummy sync flag']
  #allocation68 [shape = 's32[]', space=sflag, size = 0x4, offset = 0, fixed_abs, tag = 'sflag constant byte address 0x0 - dummy sync flag']
  #allocation69 [shape = 's32[]', space=sflag, size = 0x4, offset = 0, fixed_abs, tag = 'sflag constant byte address 0x0 - dummy sync flag']
  #allocation70 [shape = 's32[]', space=sflag, size = 0x4, offset = 0, fixed_abs, tag = 'sflag constant byte address 0x0 - dummy sync flag']
  #allocation71 [shape = 's32[]', space=sflag, size = 0x4, offset = 0, fixed_abs, tag = 'sflag constant byte address 0x0 - dummy sync flag']
  #allocation72 [shape = 's32[]', space=sflag, size = 0x4, offset = 0, fixed_abs, tag = 'sflag constant byte address 0x0 - dummy sync flag']
  #allocation73 [shape = 's32[]', space=sflag, size = 0x4, offset = 0, fixed_abs, tag = 'sflag constant byte address 0x0 - dummy sync flag']
  #allocation74 [shape = 's32[]', space=sflag, size = 0x4, offset = 0, fixed_abs, tag = 'sflag constant byte address 0x0 - dummy sync flag']
  #allocation75 [shape = 's32[]', space=sflag, size = 0x4, offset = 0, fixed_abs, tag = 'sflag constant byte address 0x0 - dummy sync flag']
  #allocation76 [shape = 's32[]', space=sflag, size = 0x4, offset = 0, fixed_abs, tag = 'sflag constant byte address 0x0 - dummy sync flag']
  #allocation77 [shape = 's32[]', space=sflag, size = 0x4, offset = 0, fixed_abs, tag = 'sflag constant byte address 0x0 - dummy sync flag']
  #allocation78 [shape = 's32[]', space=sflag, size = 0x4, offset = 0, fixed_abs, tag = 'sflag constant byte address 0x0 - dummy sync flag']
  #allocation79 [shape = 's32[]', space=sflag, size = 0x4, offset = 0, fixed_abs, tag = 'sflag constant byte address 0x0 - dummy sync flag']
  #allocation80 [shape = 's32[]', space=sflag, size = 0x4, offset = 0, fixed_abs, tag = 'sflag constant byte address 0x0 - dummy sync flag']
  #allocation81 [shape = 's32[]', space=sflag, size = 0x4, offset = 0, fixed_abs, tag = 'sflag constant byte address 0x0 - dummy sync flag']
  #allocation82 [shape = 's32[]', space=sflag, size = 0x4, offset = 0, fixed_abs, tag = 'sflag constant byte address 0x0 - dummy sync flag']
  #allocation83 [shape = 's32[]', space=sflag, size = 0x4, offset = 0, fixed_abs, tag = 'sflag constant byte address 0x0 - dummy sync flag']
  #allocation84 [shape = 's32[]', space=sflag, size = 0x4, offset = 0, fixed_abs, tag = 'sflag constant byte address 0x0 - dummy sync flag']
  #allocation85 [shape = 's32[]', space=sflag, size = 0x4, offset = 0, fixed_abs, tag = 'sflag constant byte address 0x0 - dummy sync flag']
  #allocation86 [shape = 's32[]', space=sflag, size = 0x4, offset = 0, fixed_abs, tag = 'sflag constant byte address 0x0 - dummy sync flag']
  #allocation87 [shape = 's32[]', space=sflag, size = 0x4, offset = 0, fixed_abs, tag = 'sflag constant byte address 0x0 - dummy sync flag']
  #allocation88 [shape = 's32[]', space=sflag, size = 0x4, offset = 0, fixed_abs, tag = 'sflag constant byte address 0x0 - dummy sync flag']
  #allocation89 [shape = 's32[]', space=sflag, size = 0x4, offset = 0, fixed_abs, tag = 'sflag constant byte address 0x0 - dummy sync flag']
  #allocation90 [shape = 's32[]', space=sflag, size = 0x4, offset = 0, fixed_abs, tag = 'sflag constant byte address 0x0 - dummy sync flag']
  #allocation91 [shape = 's32[]', space=sflag, size = 0x4, offset = 0, fixed_abs, tag = 'sflag constant byte address 0x0 - dummy sync flag']
  #allocation92 [shape = 's32[]', space=sflag, size = 0x4, offset = 0, fixed_abs, tag = 'sflag constant byte address 0x0 - dummy sync flag']
  #allocation93 [shape = 's32[]', space=sflag, size = 0x4, offset = 0, fixed_abs, tag = 'sflag constant byte address 0x0 - dummy sync flag']
  #allocation94 [shape = 's32[]', space=sflag, size = 0x4, offset = 0, fixed_abs, tag = 'sflag constant byte address 0x0 - dummy sync flag']
  #allocation95 [shape = 's32[]', space=sflag, size = 0x4, offset = 0, fixed_abs, tag = 'sflag constant byte address 0x0 - dummy sync flag']
  #allocation96 [shape = 's32[]', space=sflag, size = 0x4, offset = 0, fixed_abs, tag = 'sflag constant byte address 0x0 - dummy sync flag']
  #allocation97 [shape = 's32[]', space=sflag, size = 0x4, offset = 0, fixed_abs, tag = 'sflag constant byte address 0x0 - dummy sync flag']
  #allocation98 [shape = 's32[]', space=sflag, size = 0x4, offset = 0, fixed_abs, tag = 'sflag constant byte address 0x0 - dummy sync flag']
  #allocation99 [shape = 's32[]', space=sflag, size = 0x4, offset = 0, fixed_abs, tag = 'sflag constant byte address 0x0 - dummy sync flag']
  #allocation100 [shape = 's32[]', space=sflag, size = 0x4, offset = 0, fixed_abs, tag = 'sflag constant byte address 0x0 - dummy sync flag']
  #allocation101 [shape = 's32[]', space=sflag, size = 0x4, offset = 0, fixed_abs, tag = 'sflag constant byte address 0x0 - dummy sync flag']
  #allocation102 [shape = 's32[]', space=sflag, size = 0x4, offset = 0, fixed_abs, tag = 'sflag constant byte address 0x0 - dummy sync flag']
  #allocation103 [shape = 's32[]', space=sflag, size = 0x4, offset = 0, fixed_abs, tag = 'sflag constant byte address 0x0 - dummy sync flag']
  #allocation104 [shape = 's32[]', space=sflag, size = 0x4, offset = 0, fixed_abs, tag = 'sflag constant byte address 0x0 - dummy sync flag']
  #allocation105 [shape = 's32[]', space=sflag, size = 0x4, offset = 0, fixed_abs, tag = 'sflag constant byte address 0x0 - dummy sync flag']
  #allocation106 [shape = 's32[]', space=sflag, size = 0x4, offset = 0, fixed_abs, tag = 'sflag constant byte address 0x0 - dummy sync flag']
  #allocation107 [shape = 's32[]', space=sflag, size = 0x4, offset = 0, fixed_abs, tag = 'sflag constant byte address 0x0 - dummy sync flag']
  #allocation108 [shape = 's32[]', space=sflag, size = 0x4, offset = 0, fixed_abs, tag = 'sflag constant byte address 0x0 - dummy sync flag']
  #allocation109 [shape = 's32[]', space=sflag, size = 0x4, offset = 0, fixed_abs, tag = 'sflag constant byte address 0x0 - dummy sync flag']
  #allocation110 [shape = 's32[]', space=sflag, size = 0x4, offset = 0, fixed_abs, tag = 'sflag constant byte address 0x0 - dummy sync flag']
  #allocation111 [shape = 's32[]', space=sflag, size = 0x4, offset = 0, fixed_abs, tag = 'sflag constant byte address 0x0 - dummy sync flag']
  #allocation112 [shape = 's32[]', space=sflag, size = 0x4, offset = 0, fixed_abs, tag = 'sflag constant byte address 0x0 - dummy sync flag']
  #allocation113 [shape = 's32[]', space=sflag, size = 0x4, offset = 0, fixed_abs, tag = 'sflag constant byte address 0x0 - dummy sync flag']
  #allocation114 [shape = 's32[]', space=sflag, size = 0x4, offset = 0, fixed_abs, tag = 'sflag constant byte address 0x0 - dummy sync flag']
  #allocation115 [shape = 's32[]', space=sflag, size = 0x4, offset = 0, fixed_abs, tag = 'sflag constant byte address 0x0 - dummy sync flag']
  #allocation116 [shape = 's32[]', space=sflag, size = 0x4, offset = 0, fixed_abs, tag = 'sflag constant byte address 0x0 - dummy sync flag']
  #allocation117 [shape = 's32[]', space=sflag, size = 0x4, offset = 0, fixed_abs, tag = 'sflag constant byte address 0x0 - dummy sync flag']
  #allocation118 [shape = 's32[]', space=sflag, size = 0x4, offset = 0, fixed_abs, tag = 'sflag constant byte address 0x0 - dummy sync flag']
  #allocation119 [shape = 's32[]', space=sflag, size = 0x4, offset = 0, fixed_abs, tag = 'sflag constant byte address 0x0 - dummy sync flag']
  #allocation120 [shape = 's32[]', space=sflag, size = 0x4, offset = 0, fixed_abs, tag = 'sflag constant byte address 0x0 - dummy sync flag']
  #allocation121 [shape = 's32[]', space=sflag, size = 0x4, offset = 0, fixed_abs, tag = 'sflag constant byte address 0x0 - dummy sync flag']
  #allocation122 [shape = 's32[]', space=sflag, size = 0x4, offset = 0, fixed_abs, tag = 'sflag constant byte address 0x0 - dummy sync flag']
  #allocation123 [shape = 's32[]', space=sflag, size = 0x4, offset = 0, fixed_abs, tag = 'sflag constant byte address 0x0 - dummy sync flag']
  #allocation124 [shape = 's32[]', space=sflag, size = 0x4, offset = 0, fixed_abs, tag = 'sflag constant byte address 0x0 - dummy sync flag']
  #allocation125 [shape = 's32[]', space=sflag, size = 0x4, offset = 0, fixed_abs, tag = 'sflag constant byte address 0x0 - dummy sync flag']
  #allocation126 [shape = 's32[]', space=sflag, size = 0x4, offset = 0, fixed_abs, tag = 'sflag constant byte address 0x0 - dummy sync flag']
  #allocation127 [shape = 's32[]', space=sflag, size = 0x4, offset = 0, fixed_abs, tag = 'sflag constant byte address 0x0 - dummy sync flag']
  #allocation128 [shape = 's32[]', space=sflag, size = 0x4, offset = 0, fixed_abs, tag = 'sflag constant byte address 0x0 - dummy sync flag']
  #allocation129 [shape = 's32[]', space=sflag, size = 0x4, offset = 0, fixed_abs, tag = 'sflag constant byte address 0x0 - dummy sync flag']
  #allocation130 [shape = 's32[]', space=sflag, size = 0x4, offset = 0, fixed_abs, tag = 'sflag constant byte address 0x0 - dummy sync flag']
  #allocation131 [shape = 's32[]', space=sflag, size = 0x4, offset = 0, fixed_abs, tag = 'sflag constant byte address 0x0 - dummy sync flag']
  #allocation132 [shape = 's32[]', space=sflag, size = 0x4, offset = 0, fixed_abs, tag = 'sflag constant byte address 0x0 - dummy sync flag']
  #allocation133 [shape = 's32[]', space=sflag, size = 0x4, offset = 0, fixed_abs, tag = 'sflag constant byte address 0x0 - dummy sync flag']
  #allocation134 [shape = 's32[]', space=sflag, size = 0x4, offset = 0, fixed_abs, tag = 'sflag constant byte address 0x0 - dummy sync flag']
  #allocation135 [shape = 's32[]', space=sflag, size = 0x4, offset = 0, fixed_abs, tag = 'sflag constant byte address 0x0 - dummy sync flag']
  #allocation136 [shape = 's32[]', space=sflag, size = 0x4, offset = 0, fixed_abs, tag = 'sflag constant byte address 0x0 - dummy sync flag']
  #allocation137 [shape = 's32[]', space=sflag, size = 0x4, offset = 0, fixed_abs, tag = 'sflag constant byte address 0x0 - dummy sync flag']
  #allocation138 [shape = 's32[]', space=sflag, size = 0x4, offset = 0, fixed_abs, tag = 'sflag constant byte address 0x0 - dummy sync flag']
  #allocation139 [shape = 's32[]', space=sflag, size = 0x4, offset = 0, fixed_abs, tag = 'sflag constant byte address 0x0 - dummy sync flag']
  #allocation140 [shape = 's32[]', space=sflag, size = 0x4, offset = 0, fixed_abs, tag = 'sflag constant byte address 0x0 - dummy sync flag']
  #allocation141 [shape = 's32[]', space=sflag, size = 0x4, offset = 0, fixed_abs, tag = 'sflag constant byte address 0x0 - dummy sync flag']
  #allocation142 [shape = 's32[]', space=sflag, size = 0x4, offset = 0, fixed_abs, tag = 'sflag constant byte address 0x0 - dummy sync flag']
  #allocation143 [shape = 's32[]', space=sflag, size = 0x4, offset = 0, fixed_abs, tag = 'sflag constant byte address 0x0 - dummy sync flag']
  #allocation144 [shape = 's32[]', space=sflag, size = 0x4, offset = 0, fixed_abs, tag = 'sflag constant byte address 0x0 - dummy sync flag']
  #allocation145 [shape = 's32[]', space=sflag, size = 0x4, offset = 0, fixed_abs, tag = 'sflag constant byte address 0x0 - dummy sync flag']
  #allocation146 [shape = 's32[]', space=sflag, size = 0x4, offset = 0, fixed_abs, tag = 'sflag constant byte address 0x0 - dummy sync flag']
  %s0 = inlined_call_operand.hbm [shape: s32[128], index: 0, kind: input, shape index: {}]
  %s1 = inlined_call_operand.hbm [shape: s32[4,1,32], index: 1, kind: input, shape index: {}]
  %s2 = inlined_call_operand.hbm [shape: f32[4,1,32], index: 2, kind: input, shape index: {}]
  %s3 = inlined_call_operand.hbm [shape: f32[64,128], index: 3, kind: input, shape index: {}]
  %s4 = inlined_call_operand.hbm [shape: bf16[128,128], index: 4, kind: input, shape index: {}]
  %s5 = inlined_call_operand.vmem [shape: f32[1,128], index: 5, kind: input, shape index: {}]
  %s6 = inlined_call_operand.hbm [shape: f32[8,128], index: 6, kind: output, shape index: {}]
  %s7 = sld [smem:[#allocation0]]
  $region325: #{tpu_custom_call.1} parent=0
    _
  %s9 = ssub.s32 1, %s7
  %s10 = scalar_select 0, %s9, %s7
  %12 = dma.hbm_to_smem %s0, 16, [#allocation8], [#allocation7]
  %13 = dma.done [#allocation7], 16
  %14 = sfence
  $region1: #{tpu_custom_call.1} parent=0
    #allocation9 [shape = 'u8[1024]{0}', space=vmem, size = 0x400, scoped, tag = 'input window, operand 1']
    #allocation10 [shape = 's32[2]{0}', space=sflag, size = 0x8, scoped, tag = 'scoped memory for tpu_custom_call.1']
    #allocation11 [shape = 's32[2]{0}', space=sflag, size = 0x8, scoped, tag = 'scoped memory for tpu_custom_call.1']
    #allocation12 [shape = 'u8[1024]{0}', space=vmem, size = 0x400, scoped, tag = 'input window, operand 2']
    #allocation13 [shape = 's32[2]{0}', space=sflag, size = 0x8, scoped, tag = 'scoped memory for tpu_custom_call.1']
    #allocation14 [shape = 'u8[4096]{0}', space=vmem, size = 0x1000, scoped, tag = 'output window, operand 0, single buffered']
    %15 = vsyncpa [#allocation10], 0
    %s16 = scalar_lea.sflag [#allocation10], 1
    %17 = vsyncpa %s16, 0
    %18 = vsyncpa [#allocation13], 0
    %s19 = scalar_lea.sflag [#allocation13], 1
    %20 = vsyncpa %s19, 0
    %21 = vsyncpa [#allocation11], 0
    loop: start=0, step=1, limit=6
    $region2: #{tpu_custom_call.1} parent=1 // loop_pre_header
      _
    $region3: #{tpu_custom_call.1} parent=1 // loop_header
      %s23 = sphi 0, %s27
      %p24 = scmp.ge.s32.totalorder %s23, 6
      %s33 = sphi 0, %s35
      %s36 = sphi 0, %s33
      %s37 = sphi 0, %s36
      %s53 = sphi 0, %s37
      %s59 = sphi 0, %s61
      %s62 = sphi 0, %s59
      %s63 = sphi 0, %s62
      %s79 = sphi 0, %s63
      %s83 = sphi 0, %s83
      %s85 = sphi 0, %s83
      %s86 = sphi 0, %s85
      %s100 = sphi 0, %s86
      %s104 = sphi 0, %s104
      %s106 = sphi 0, %s104
      %s107 = sphi 0, %s106
      %s121 = sphi 0, %s107
    $region4: #{tpu_custom_call.1} parent=1 // loop_header_branch
      %26 = sbr.rel (%p24) target = $region8
    $region5: #{tpu_custom_call.1} parent=1 // loop_body
      %s28 = ssub.s32 %s23, 1
      %s29 = ssub.s32 %s23, 2
      %s30 = sadd.s32 %s23, 1
      %s31 = ssub.s32 %s23, %s30
      %p32 = scmp.eq.s32.totalorder %s31, 0
      %s34 = sadd.s32 %s33, 1
      %s35 = scalar_select %p32, %s33, %s34
      %p38 = pneg %p32
      %p39 = scmp.eq.s32.totalorder %s23, 3
      %p40 = por %p38, %p39
      %p41 = scmp.ne.s32.totalorder %s33, %s36
      %p42 = scmp.eq.s32.totalorder %s23, 0
      %p43 = por %p41, %p42
      %p44 = scmp.ne.s32.totalorder %s33, %s36
      %p45 = scmp.eq.s32.totalorder %s28, 3
      %p46 = por %p44, %p45
      %p47 = scmp.ne.s32.totalorder %s36, %s37
      %p48 = scmp.eq.s32.totalorder %s28, 0
      %p49 = por %p47, %p48
      %p50 = scmp.ne.s32.totalorder %s36, %s37
      %p51 = scmp.eq.s32.totalorder %s29, 3
      %p52 = por %p50, %p51
      %p54 = scmp.ne.s32.totalorder %s37, %s53
      %p55 = scmp.eq.s32.totalorder %s29, 0
      %p56 = por %p54, %p55
      %s57 = ssub.s32 %s23, %s30
      %p58 = scmp.eq.s32.totalorder %s57, 0
      %s60 = sadd.s32 %s59, 1
      %s61 = scalar_select %p58, %s59, %s60
      %p64 = pneg %p58
      %p65 = scmp.eq.s32.totalorder %s23, 3
      %p66 = por %p64, %p65
      %p67 = scmp.ne.s32.totalorder %s59, %s62
      %p68 = scmp.eq.s32.totalorder %s23, 0
      %p69 = por %p67, %p68
      %p70 = scmp.ne.s32.totalorder %s59, %s62
      %p71 = scmp.eq.s32.totalorder %s28, 3
      %p72 = por %p70, %p71
      %p73 = scmp.ne.s32.totalorder %s62, %s63
      %p74 = scmp.eq.s32.totalorder %s28, 0
      %p75 = por %p73, %p74
      %p76 = scmp.ne.s32.totalorder %s62, %s63
      %p77 = scmp.eq.s32.totalorder %s29, 3
      %p78 = por %p76, %p77
      %p80 = scmp.ne.s32.totalorder %s63, %s79
      %p81 = scmp.eq.s32.totalorder %s29, 0
      %p82 = por %p80, %p81
      %s84 = sadd.s32 %s83, 1
      %p87 = scmp.eq.s32.totalorder %s23, 3
      %p88 = scmp.ne.s32.totalorder %s83, %s85
      %p89 = scmp.eq.s32.totalorder %s23, 0
      %p90 = por %p88, %p89
      %p91 = scmp.ne.s32.totalorder %s83, %s85
      %p92 = scmp.eq.s32.totalorder %s28, 3
      %p93 = por %p91, %p92
      %p94 = scmp.ne.s32.totalorder %s85, %s86
      %p95 = scmp.eq.s32.totalorder %s28, 0
      %p96 = por %p94, %p95
      %p97 = scmp.ne.s32.totalorder %s85, %s86
      %p98 = scmp.eq.s32.totalorder %s29, 3
      %p99 = por %p97, %p98
      %p101 = scmp.ne.s32.totalorder %s86, %s100
      %p102 = scmp.eq.s32.totalorder %s29, 0
      %p103 = por %p101, %p102
      %s105 = sadd.s32 %s104, 1
      %p108 = scmp.eq.s32.totalorder %s23, 3
      %p109 = scmp.ne.s32.totalorder %s104, %s106
      %p110 = scmp.eq.s32.totalorder %s23, 0
      %p111 = por %p109, %p110
      %p112 = scmp.ne.s32.totalorder %s104, %s106
      %p113 = scmp.eq.s32.totalorder %s28, 3
      %p114 = por %p112, %p113
      %p115 = scmp.ne.s32.totalorder %s106, %s107
      %p116 = scmp.eq.s32.totalorder %s28, 0
      %p117 = por %p115, %p116
      %p118 = scmp.ne.s32.totalorder %s106, %s107
      %p119 = scmp.eq.s32.totalorder %s29, 3
      %p120 = por %p118, %p119
      %p122 = scmp.ne.s32.totalorder %s107, %s121
      %p123 = scmp.eq.s32.totalorder %s29, 0
      %p124 = por %p122, %p123
      %p125 = scmp.le.s32.totalorder 1, %s23
      %p126 = scmp.lt.s32.totalorder %s23, 5
      %p127 = pnand %p125, %p126
      %p128 = pneg %p127
      // Predicated region
      $region9: #{tpu_custom_call.1} parent=5 // pred_check
        _
      $region10: #{tpu_custom_call.1} parent=5 // pred_check_branch
        %130 = sbr.rel (%p127) target = $region12
      $region11: #{tpu_custom_call.1} parent=5 // pred_region
        %s131 = ssub.s32 %s23, 1
        // Predicated region
        $region13: #{tpu_custom_call.1} parent=11 // pred_check
          %p132 = pneg %p96
        $region14: #{tpu_custom_call.1} parent=11 // pred_check_branch
          %134 = sbr.rel (%p132) target = $region16
        $region15: #{tpu_custom_call.1} parent=11 // pred_region
          _
        $region16: #{tpu_custom_call.1} parent=11 // pred_fallthru
          _
      $region12: #{tpu_custom_call.1} parent=5 // pred_fallthru
        _
      %p135 = scmp.lt.s32.totalorder %s23, 4
      // Predicated region
      $region17: #{tpu_custom_call.1} parent=5 // pred_check
        %p136 = pneg %p135
      $region18: #{tpu_custom_call.1} parent=5 // pred_check_branch
        %138 = sbr.rel (%p136) target = $region20
      $region19: #{tpu_custom_call.1} parent=5 // pred_region
        // Predicated region
        $region21: #{tpu_custom_call.1} parent=19 // pred_check
          %p139 = pneg %p43
        $region22: #{tpu_custom_call.1} parent=19 // pred_check_branch
          %141 = sbr.rel (%p139) target = $region24
        $region23: #{tpu_custom_call.1} parent=19 // pred_region
          %s142 = sand.u32 %s33, 1
          %s143 = scalar_lea.sflag [#allocation10], %s142
          %s144 = sand.u32 %s33, 1
          %s145 = scalar_lea.vmem [#allocation9], %s144
          %s147 = ssub.s32 16, 16
          %148 = vsyncadd %s143, %s147
          %s149 = smul.addr %s23, 16
          %s150 = scalar_lea.hbm %s1, %s149
          %s152 = sshll.u32 %s145, 4
          %s153 = int_to_ptr.vmem [resolvable:$true] %s152
          %155 = dma.hbm_to_vmem [thread:$0]  %s150, 16, %s153, %s143
        $region24: #{tpu_custom_call.1} parent=19 // pred_fallthru
          _
        // Predicated region
        $region25: #{tpu_custom_call.1} parent=19 // pred_check
          %p156 = pneg %p69
        $region26: #{tpu_custom_call.1} parent=19 // pred_check_branch
          %158 = sbr.rel (%p156) target = $region28
        $region27: #{tpu_custom_call.1} parent=19 // pred_region
          %s159 = sand.u32 %s59, 1
          %s160 = scalar_lea.sflag [#allocation13], %s159
          %s161 = sand.u32 %s59, 1
          %s162 = scalar_lea.vmem [#allocation12], %s161
          %s164 = ssub.s32 16, 16
          %165 = vsyncadd %s160, %s164
          %s166 = smul.addr %s23, 16
          %s167 = scalar_lea.hbm %s2, %s166
          %s169 = sshll.u32 %s162, 4
          %s170 = int_to_ptr.vmem [resolvable:$true] %s169
          %172 = dma.hbm_to_vmem [thread:$0]  %s167, 16, %s170, %s160
        $region28: #{tpu_custom_call.1} parent=19 // pred_fallthru
          _
      $region20: #{tpu_custom_call.1} parent=5 // pred_fallthru
        _
      %p173 = scmp.le.s32.totalorder 1, %s23
      %p174 = scmp.lt.s32.totalorder %s23, 5
      %p175 = pnand %p173, %p174
      %p176 = pneg %p175
      // Predicated region
      $region29: #{tpu_custom_call.1} parent=5 // pred_check
        _
      $region30: #{tpu_custom_call.1} parent=5 // pred_check_branch
        %178 = sbr.rel (%p175) target = $region32
      $region31: #{tpu_custom_call.1} parent=5 // pred_region
        %s179 = ssub.s32 %s23, 1
        %s180 = sand.u32 %s36, 1
        %s181 = scalar_lea.sflag [#allocation10], %s180
        %s182 = sand.u32 %s36, 1
        %s183 = scalar_lea.vmem [#allocation9], %s182
        // Predicated region
        $region33: #{tpu_custom_call.1} parent=31 // pred_check
          %p184 = pneg %p49
        $region34: #{tpu_custom_call.1} parent=31 // pred_check_branch
          %186 = sbr.rel (%p184) target = $region36
        $region35: #{tpu_custom_call.1} parent=31 // pred_region
          %187 = dma.done %s181, 16
        $region36: #{tpu_custom_call.1} parent=31 // pred_fallthru
          _
        %s188 = sand.u32 %s62, 1
        %s189 = scalar_lea.sflag [#allocation13], %s188
        %s190 = sand.u32 %s62, 1
        %s191 = scalar_lea.vmem [#allocation12], %s190
        // Predicated region
        $region37: #{tpu_custom_call.1} parent=31 // pred_check
          %p192 = pneg %p75
        $region38: #{tpu_custom_call.1} parent=31 // pred_check_branch
          %194 = sbr.rel (%p192) target = $region40
        $region39: #{tpu_custom_call.1} parent=31 // pred_region
          %195 = dma.done %s189, 16
        $region40: #{tpu_custom_call.1} parent=31 // pred_fallthru
          _
        %s196 = sand.u32 %s36, 1
        %s197 = scalar_lea.sflag [#allocation10], %s196
        %s198 = sand.u32 %s36, 1
        %s199 = scalar_lea.vmem [#allocation9], %s198
        %p200 = pneg %p49
        %p201 = pneg %p46
        %s202 = sand.u32 %s62, 1
        %s203 = scalar_lea.sflag [#allocation13], %s202
        %s204 = sand.u32 %s62, 1
        %s205 = scalar_lea.vmem [#allocation12], %s204
        %p206 = pneg %p75
        %p207 = pneg %p72
        %p208 = pneg %p96
        %p209 = pneg %p93
        %p210 = pneg %p117
        %p211 = pneg %p114
        %p213 = scmp.eq.s32.totalorder %s28, 0
        // Predicated region
        $region41: #{tpu_custom_call.1} parent=31 // pred_check
          %p214 = pneg %p213
        $region42: #{tpu_custom_call.1} parent=31 // pred_check_branch
          %216 = sbr.rel (%p214) target = $region44
        $region43: #{tpu_custom_call.1} parent=31 // pred_region
          %217 = vst [vmem:[#allocation6] sm:$0xff] 0.0
          // Predicated region
          $region45: #{tpu_custom_call.1} parent=43 // pred_check
            _
          $region46: #{tpu_custom_call.1} parent=43 // pred_check_branch
            %219 = sbr.rel target = $region48
          $region47: #{tpu_custom_call.1} parent=43 // pred_region
            %220 = sst [smem:[#allocation17]] [#allocation16]
            %221 = sst [smem:[#allocation18]] [#allocation15]
          $region48: #{tpu_custom_call.1} parent=43 // pred_fallthru
            _
          %223 = shalt.err (0)
          %s225 = sshll.u32 [#allocation4], 4
          %s226 = int_to_ptr.vmem [resolvable:$true] %s225
          %228 = dma.hbm_to_vmem [thread:$0]  %s4, 1024, %s226, [#allocation5]
          %s229 = sld [smem:[#allocation8]]
          %s230 = smul.addr %s229, 16
          %s231 = scalar_lea.hbm %s3, %s230
          // Predicated region
          $region49: #{tpu_custom_call.1} parent=43 // pred_check
            _
          $region50: #{tpu_custom_call.1} parent=43 // pred_check_branch
            %233 = sbr.rel target = $region52
          $region51: #{tpu_custom_call.1} parent=43 // pred_region
            %234 = sst [smem:[#allocation17]] [#allocation20]
            %235 = sst [smem:[#allocation18]] [#allocation19]
          $region52: #{tpu_custom_call.1} parent=43 // pred_fallthru
            _
          %237 = shalt.err (0)
          %s239 = sshll.u32 [#allocation2], 4
          %s240 = int_to_ptr.vmem [resolvable:$true] %s239
          %242 = dma.hbm_to_vmem [thread:$0]  %s231, 16, %s240, [#allocation3]
          %s243 = sld [smem:[#allocation8 + $0x1]]
          %s244 = smul.addr %s243, 16
          %s245 = scalar_lea.hbm %s3, %s244
          %s246 = scalar_lea.vmem [#allocation2], 1
          %s247 = scalar_lea.sflag [#allocation3], 1
          // Predicated region
          $region53: #{tpu_custom_call.1} parent=43 // pred_check
            _
          $region54: #{tpu_custom_call.1} parent=43 // pred_check_branch
            %249 = sbr.rel target = $region56
          $region55: #{tpu_custom_call.1} parent=43 // pred_region
            %250 = sst [smem:[#allocation17]] [#allocation22]
            %251 = sst [smem:[#allocation18]] [#allocation21]
          $region56: #{tpu_custom_call.1} parent=43 // pred_fallthru
            _
          %253 = shalt.err (0)
          %s255 = sshll.u32 %s246, 4
          %s256 = int_to_ptr.vmem [resolvable:$true] %s255
          %258 = dma.hbm_to_vmem [thread:$0]  %s245, 16, %s256, %s247
          %s259 = sld [smem:[#allocation8 + $0x2]]
          %s260 = smul.addr %s259, 16
          %s261 = scalar_lea.hbm %s3, %s260
          %s262 = scalar_lea.vmem [#allocation2], 2
          %s263 = scalar_lea.sflag [#allocation3], 2
          // Predicated region
          $region57: #{tpu_custom_call.1} parent=43 // pred_check
            _
          $region58: #{tpu_custom_call.1} parent=43 // pred_check_branch
            %265 = sbr.rel target = $region60
          $region59: #{tpu_custom_call.1} parent=43 // pred_region
            %266 = sst [smem:[#allocation17]] [#allocation24]
            %267 = sst [smem:[#allocation18]] [#allocation23]
          $region60: #{tpu_custom_call.1} parent=43 // pred_fallthru
            _
          %269 = shalt.err (0)
          %s271 = sshll.u32 %s262, 4
          %s272 = int_to_ptr.vmem [resolvable:$true] %s271
          %274 = dma.hbm_to_vmem [thread:$0]  %s261, 16, %s272, %s263
          %s275 = sld [smem:[#allocation8 + $0x3]]
          %s276 = smul.addr %s275, 16
          %s277 = scalar_lea.hbm %s3, %s276
          %s278 = scalar_lea.vmem [#allocation2], 3
          %s279 = scalar_lea.sflag [#allocation3], 3
          // Predicated region
          $region61: #{tpu_custom_call.1} parent=43 // pred_check
            _
          $region62: #{tpu_custom_call.1} parent=43 // pred_check_branch
            %281 = sbr.rel target = $region64
          $region63: #{tpu_custom_call.1} parent=43 // pred_region
            %282 = sst [smem:[#allocation17]] [#allocation26]
            %283 = sst [smem:[#allocation18]] [#allocation25]
          $region64: #{tpu_custom_call.1} parent=43 // pred_fallthru
            _
          %285 = shalt.err (0)
          %s287 = sshll.u32 %s278, 4
          %s288 = int_to_ptr.vmem [resolvable:$true] %s287
          %290 = dma.hbm_to_vmem [thread:$0]  %s277, 16, %s288, %s279
          %s291 = sld [smem:[#allocation8 + $0x4]]
          %s292 = smul.addr %s291, 16
          %s293 = scalar_lea.hbm %s3, %s292
          %s294 = scalar_lea.vmem [#allocation2], 4
          %s295 = scalar_lea.sflag [#allocation3], 4
          // Predicated region
          $region65: #{tpu_custom_call.1} parent=43 // pred_check
            _
          $region66: #{tpu_custom_call.1} parent=43 // pred_check_branch
            %297 = sbr.rel target = $region68
          $region67: #{tpu_custom_call.1} parent=43 // pred_region
            %298 = sst [smem:[#allocation17]] [#allocation28]
            %299 = sst [smem:[#allocation18]] [#allocation27]
          $region68: #{tpu_custom_call.1} parent=43 // pred_fallthru
            _
          %301 = shalt.err (0)
          %s303 = sshll.u32 %s294, 4
          %s304 = int_to_ptr.vmem [resolvable:$true] %s303
          %306 = dma.hbm_to_vmem [thread:$0]  %s293, 16, %s304, %s295
          %s307 = sld [smem:[#allocation8 + $0x5]]
          %s308 = smul.addr %s307, 16
          %s309 = scalar_lea.hbm %s3, %s308
          %s310 = scalar_lea.vmem [#allocation2], 5
          %s311 = scalar_lea.sflag [#allocation3], 5
          // Predicated region
          $region69: #{tpu_custom_call.1} parent=43 // pred_check
            _
          $region70: #{tpu_custom_call.1} parent=43 // pred_check_branch
            %313 = sbr.rel target = $region72
          $region71: #{tpu_custom_call.1} parent=43 // pred_region
            %314 = sst [smem:[#allocation17]] [#allocation30]
            %315 = sst [smem:[#allocation18]] [#allocation29]
          $region72: #{tpu_custom_call.1} parent=43 // pred_fallthru
            _
          %317 = shalt.err (0)
          %s319 = sshll.u32 %s310, 4
          %s320 = int_to_ptr.vmem [resolvable:$true] %s319
          %322 = dma.hbm_to_vmem [thread:$0]  %s309, 16, %s320, %s311
          %s323 = sld [smem:[#allocation8 + $0x6]]
          %s324 = smul.addr %s323, 16
          %s325 = scalar_lea.hbm %s3, %s324
          %s326 = scalar_lea.vmem [#allocation2], 6
          %s327 = scalar_lea.sflag [#allocation3], 6
          // Predicated region
          $region73: #{tpu_custom_call.1} parent=43 // pred_check
            _
          $region74: #{tpu_custom_call.1} parent=43 // pred_check_branch
            %329 = sbr.rel target = $region76
          $region75: #{tpu_custom_call.1} parent=43 // pred_region
            %330 = sst [smem:[#allocation17]] [#allocation32]
            %331 = sst [smem:[#allocation18]] [#allocation31]
          $region76: #{tpu_custom_call.1} parent=43 // pred_fallthru
            _
          %333 = shalt.err (0)
          %s335 = sshll.u32 %s326, 4
          %s336 = int_to_ptr.vmem [resolvable:$true] %s335
          %338 = dma.hbm_to_vmem [thread:$0]  %s325, 16, %s336, %s327
          %s339 = sld [smem:[#allocation8 + $0x7]]
          %s340 = smul.addr %s339, 16
          %s341 = scalar_lea.hbm %s3, %s340
          %s342 = scalar_lea.vmem [#allocation2], 7
          %s343 = scalar_lea.sflag [#allocation3], 7
          // Predicated region
          $region77: #{tpu_custom_call.1} parent=43 // pred_check
            _
          $region78: #{tpu_custom_call.1} parent=43 // pred_check_branch
            %345 = sbr.rel target = $region80
          $region79: #{tpu_custom_call.1} parent=43 // pred_region
            %346 = sst [smem:[#allocation17]] [#allocation34]
            %347 = sst [smem:[#allocation18]] [#allocation33]
          $region80: #{tpu_custom_call.1} parent=43 // pred_fallthru
            _
          %349 = shalt.err (0)
          %s351 = sshll.u32 %s342, 4
          %s352 = int_to_ptr.vmem [resolvable:$true] %s351
          %354 = dma.hbm_to_vmem [thread:$0]  %s341, 16, %s352, %s343
          %s355 = sld [smem:[#allocation8 + $0x8]]
          %s356 = smul.addr %s355, 16
          %s357 = scalar_lea.hbm %s3, %s356
          %s358 = scalar_lea.vmem [#allocation2], 8
          %s359 = scalar_lea.sflag [#allocation3], 8
          // Predicated region
          $region81: #{tpu_custom_call.1} parent=43 // pred_check
            _
          $region82: #{tpu_custom_call.1} parent=43 // pred_check_branch
            %361 = sbr.rel target = $region84
          $region83: #{tpu_custom_call.1} parent=43 // pred_region
            %362 = sst [smem:[#allocation17]] [#allocation36]
            %363 = sst [smem:[#allocation18]] [#allocation35]
          $region84: #{tpu_custom_call.1} parent=43 // pred_fallthru
            _
          %365 = shalt.err (0)
          %s367 = sshll.u32 %s358, 4
          %s368 = int_to_ptr.vmem [resolvable:$true] %s367
          %370 = dma.hbm_to_vmem [thread:$0]  %s357, 16, %s368, %s359
          %s371 = sld [smem:[#allocation8 + $0x9]]
          %s372 = smul.addr %s371, 16
          %s373 = scalar_lea.hbm %s3, %s372
          %s374 = scalar_lea.vmem [#allocation2], 9
          %s375 = scalar_lea.sflag [#allocation3], 9
          // Predicated region
          $region85: #{tpu_custom_call.1} parent=43 // pred_check
            _
          $region86: #{tpu_custom_call.1} parent=43 // pred_check_branch
            %377 = sbr.rel target = $region88
          $region87: #{tpu_custom_call.1} parent=43 // pred_region
            %378 = sst [smem:[#allocation17]] [#allocation38]
            %379 = sst [smem:[#allocation18]] [#allocation37]
          $region88: #{tpu_custom_call.1} parent=43 // pred_fallthru
            _
          %381 = shalt.err (0)
          %s383 = sshll.u32 %s374, 4
          %s384 = int_to_ptr.vmem [resolvable:$true] %s383
          %386 = dma.hbm_to_vmem [thread:$0]  %s373, 16, %s384, %s375
          %s387 = sld [smem:[#allocation8 + $0xa]]
          %s388 = smul.addr %s387, 16
          %s389 = scalar_lea.hbm %s3, %s388
          %s390 = scalar_lea.vmem [#allocation2], 10
          %s391 = scalar_lea.sflag [#allocation3], 10
          // Predicated region
          $region89: #{tpu_custom_call.1} parent=43 // pred_check
            _
          $region90: #{tpu_custom_call.1} parent=43 // pred_check_branch
            %393 = sbr.rel target = $region92
          $region91: #{tpu_custom_call.1} parent=43 // pred_region
            %394 = sst [smem:[#allocation17]] [#allocation40]
            %395 = sst [smem:[#allocation18]] [#allocation39]
          $region92: #{tpu_custom_call.1} parent=43 // pred_fallthru
            _
          %397 = shalt.err (0)
          %s399 = sshll.u32 %s390, 4
          %s400 = int_to_ptr.vmem [resolvable:$true] %s399
          %402 = dma.hbm_to_vmem [thread:$0]  %s389, 16, %s400, %s391
          %s403 = sld [smem:[#allocation8 + $0xb]]
          %s404 = smul.addr %s403, 16
          %s405 = scalar_lea.hbm %s3, %s404
          %s406 = scalar_lea.vmem [#allocation2], 11
          %s407 = scalar_lea.sflag [#allocation3], 11
          // Predicated region
          $region93: #{tpu_custom_call.1} parent=43 // pred_check
            _
          $region94: #{tpu_custom_call.1} parent=43 // pred_check_branch
            %409 = sbr.rel target = $region96
          $region95: #{tpu_custom_call.1} parent=43 // pred_region
            %410 = sst [smem:[#allocation17]] [#allocation42]
            %411 = sst [smem:[#allocation18]] [#allocation41]
          $region96: #{tpu_custom_call.1} parent=43 // pred_fallthru
            _
          %413 = shalt.err (0)
          %s415 = sshll.u32 %s406, 4
          %s416 = int_to_ptr.vmem [resolvable:$true] %s415
          %418 = dma.hbm_to_vmem [thread:$0]  %s405, 16, %s416, %s407
          %s419 = sld [smem:[#allocation8 + $0xc]]
          %s420 = smul.addr %s419, 16
          %s421 = scalar_lea.hbm %s3, %s420
          %s422 = scalar_lea.vmem [#allocation2], 12
          %s423 = scalar_lea.sflag [#allocation3], 12
          // Predicated region
          $region97: #{tpu_custom_call.1} parent=43 // pred_check
            _
          $region98: #{tpu_custom_call.1} parent=43 // pred_check_branch
            %425 = sbr.rel target = $region100
          $region99: #{tpu_custom_call.1} parent=43 // pred_region
            %426 = sst [smem:[#allocation17]] [#allocation44]
            %427 = sst [smem:[#allocation18]] [#allocation43]
          $region100: #{tpu_custom_call.1} parent=43 // pred_fallthru
            _
          %429 = shalt.err (0)
          %s431 = sshll.u32 %s422, 4
          %s432 = int_to_ptr.vmem [resolvable:$true] %s431
          %434 = dma.hbm_to_vmem [thread:$0]  %s421, 16, %s432, %s423
          %s435 = sld [smem:[#allocation8 + $0xd]]
          %s436 = smul.addr %s435, 16
          %s437 = scalar_lea.hbm %s3, %s436
          %s438 = scalar_lea.vmem [#allocation2], 13
          %s439 = scalar_lea.sflag [#allocation3], 13
          // Predicated region
          $region101: #{tpu_custom_call.1} parent=43 // pred_check
            _
          $region102: #{tpu_custom_call.1} parent=43 // pred_check_branch
            %441 = sbr.rel target = $region104
          $region103: #{tpu_custom_call.1} parent=43 // pred_region
            %442 = sst [smem:[#allocation17]] [#allocation46]
            %443 = sst [smem:[#allocation18]] [#allocation45]
          $region104: #{tpu_custom_call.1} parent=43 // pred_fallthru
            _
          %445 = shalt.err (0)
          %s447 = sshll.u32 %s438, 4
          %s448 = int_to_ptr.vmem [resolvable:$true] %s447
          %450 = dma.hbm_to_vmem [thread:$0]  %s437, 16, %s448, %s439
          %s451 = sld [smem:[#allocation8 + $0xe]]
          %s452 = smul.addr %s451, 16
          %s453 = scalar_lea.hbm %s3, %s452
          %s454 = scalar_lea.vmem [#allocation2], 14
          %s455 = scalar_lea.sflag [#allocation3], 14
          // Predicated region
          $region105: #{tpu_custom_call.1} parent=43 // pred_check
            _
          $region106: #{tpu_custom_call.1} parent=43 // pred_check_branch
            %457 = sbr.rel target = $region108
          $region107: #{tpu_custom_call.1} parent=43 // pred_region
            %458 = sst [smem:[#allocation17]] [#allocation48]
            %459 = sst [smem:[#allocation18]] [#allocation47]
          $region108: #{tpu_custom_call.1} parent=43 // pred_fallthru
            _
          %461 = shalt.err (0)
          %s463 = sshll.u32 %s454, 4
          %s464 = int_to_ptr.vmem [resolvable:$true] %s463
          %466 = dma.hbm_to_vmem [thread:$0]  %s453, 16, %s464, %s455
          %s467 = sld [smem:[#allocation8 + $0xf]]
          %s468 = smul.addr %s467, 16
          %s469 = scalar_lea.hbm %s3, %s468
          %s470 = scalar_lea.vmem [#allocation2], 15
          %s471 = scalar_lea.sflag [#allocation3], 15
          // Predicated region
          $region109: #{tpu_custom_call.1} parent=43 // pred_check
            _
          $region110: #{tpu_custom_call.1} parent=43 // pred_check_branch
            %473 = sbr.rel target = $region112
          $region111: #{tpu_custom_call.1} parent=43 // pred_region
            %474 = sst [smem:[#allocation17]] [#allocation50]
            %475 = sst [smem:[#allocation18]] [#allocation49]
          $region112: #{tpu_custom_call.1} parent=43 // pred_fallthru
            _
          %477 = shalt.err (0)
          %s479 = sshll.u32 %s470, 4
          %s480 = int_to_ptr.vmem [resolvable:$true] %s479
          %482 = dma.hbm_to_vmem [thread:$0]  %s469, 16, %s480, %s471
          %s483 = sld [smem:[#allocation8 + $0x10]]
          %s484 = smul.addr %s483, 16
          %s485 = scalar_lea.hbm %s3, %s484
          %s486 = scalar_lea.vmem [#allocation2], 16
          %s487 = scalar_lea.sflag [#allocation3], 16
          // Predicated region
          $region113: #{tpu_custom_call.1} parent=43 // pred_check
            _
          $region114: #{tpu_custom_call.1} parent=43 // pred_check_branch
            %489 = sbr.rel target = $region116
          $region115: #{tpu_custom_call.1} parent=43 // pred_region
            %490 = sst [smem:[#allocation17]] [#allocation52]
            %491 = sst [smem:[#allocation18]] [#allocation51]
          $region116: #{tpu_custom_call.1} parent=43 // pred_fallthru
            _
          %493 = shalt.err (0)
          %s495 = sshll.u32 %s486, 4
          %s496 = int_to_ptr.vmem [resolvable:$true] %s495
          %498 = dma.hbm_to_vmem [thread:$0]  %s485, 16, %s496, %s487
          %s499 = sld [smem:[#allocation8 + $0x11]]
          %s500 = smul.addr %s499, 16
          %s501 = scalar_lea.hbm %s3, %s500
          %s502 = scalar_lea.vmem [#allocation2], 17
          %s503 = scalar_lea.sflag [#allocation3], 17
          // Predicated region
          $region117: #{tpu_custom_call.1} parent=43 // pred_check
            _
          $region118: #{tpu_custom_call.1} parent=43 // pred_check_branch
            %505 = sbr.rel target = $region120
          $region119: #{tpu_custom_call.1} parent=43 // pred_region
            %506 = sst [smem:[#allocation17]] [#allocation54]
            %507 = sst [smem:[#allocation18]] [#allocation53]
          $region120: #{tpu_custom_call.1} parent=43 // pred_fallthru
            _
          %509 = shalt.err (0)
          %s511 = sshll.u32 %s502, 4
          %s512 = int_to_ptr.vmem [resolvable:$true] %s511
          %514 = dma.hbm_to_vmem [thread:$0]  %s501, 16, %s512, %s503
          %s515 = sld [smem:[#allocation8 + $0x12]]
          %s516 = smul.addr %s515, 16
          %s517 = scalar_lea.hbm %s3, %s516
          %s518 = scalar_lea.vmem [#allocation2], 18
          %s519 = scalar_lea.sflag [#allocation3], 18
          // Predicated region
          $region121: #{tpu_custom_call.1} parent=43 // pred_check
            _
          $region122: #{tpu_custom_call.1} parent=43 // pred_check_branch
            %521 = sbr.rel target = $region124
          $region123: #{tpu_custom_call.1} parent=43 // pred_region
            %522 = sst [smem:[#allocation17]] [#allocation56]
            %523 = sst [smem:[#allocation18]] [#allocation55]
          $region124: #{tpu_custom_call.1} parent=43 // pred_fallthru
            _
          %525 = shalt.err (0)
          %s527 = sshll.u32 %s518, 4
          %s528 = int_to_ptr.vmem [resolvable:$true] %s527
          %530 = dma.hbm_to_vmem [thread:$0]  %s517, 16, %s528, %s519
          %s531 = sld [smem:[#allocation8 + $0x13]]
          %s532 = smul.addr %s531, 16
          %s533 = scalar_lea.hbm %s3, %s532
          %s534 = scalar_lea.vmem [#allocation2], 19
          %s535 = scalar_lea.sflag [#allocation3], 19
          // Predicated region
          $region125: #{tpu_custom_call.1} parent=43 // pred_check
            _
          $region126: #{tpu_custom_call.1} parent=43 // pred_check_branch
            %537 = sbr.rel target = $region128
          $region127: #{tpu_custom_call.1} parent=43 // pred_region
            %538 = sst [smem:[#allocation17]] [#allocation58]
            %539 = sst [smem:[#allocation18]] [#allocation57]
          $region128: #{tpu_custom_call.1} parent=43 // pred_fallthru
            _
          %541 = shalt.err (0)
          %s543 = sshll.u32 %s534, 4
          %s544 = int_to_ptr.vmem [resolvable:$true] %s543
          %546 = dma.hbm_to_vmem [thread:$0]  %s533, 16, %s544, %s535
          %s547 = sld [smem:[#allocation8 + $0x14]]
          %s548 = smul.addr %s547, 16
          %s549 = scalar_lea.hbm %s3, %s548
          %s550 = scalar_lea.vmem [#allocation2], 20
          %s551 = scalar_lea.sflag [#allocation3], 20
          // Predicated region
          $region129: #{tpu_custom_call.1} parent=43 // pred_check
            _
          $region130: #{tpu_custom_call.1} parent=43 // pred_check_branch
            %553 = sbr.rel target = $region132
          $region131: #{tpu_custom_call.1} parent=43 // pred_region
            %554 = sst [smem:[#allocation17]] [#allocation60]
            %555 = sst [smem:[#allocation18]] [#allocation59]
          $region132: #{tpu_custom_call.1} parent=43 // pred_fallthru
            _
          %557 = shalt.err (0)
          %s559 = sshll.u32 %s550, 4
          %s560 = int_to_ptr.vmem [resolvable:$true] %s559
          %562 = dma.hbm_to_vmem [thread:$0]  %s549, 16, %s560, %s551
          %s563 = sld [smem:[#allocation8 + $0x15]]
          %s564 = smul.addr %s563, 16
          %s565 = scalar_lea.hbm %s3, %s564
          %s566 = scalar_lea.vmem [#allocation2], 21
          %s567 = scalar_lea.sflag [#allocation3], 21
          // Predicated region
          $region133: #{tpu_custom_call.1} parent=43 // pred_check
            _
          $region134: #{tpu_custom_call.1} parent=43 // pred_check_branch
            %569 = sbr.rel target = $region136
          $region135: #{tpu_custom_call.1} parent=43 // pred_region
            %570 = sst [smem:[#allocation17]] [#allocation62]
            %571 = sst [smem:[#allocation18]] [#allocation61]
          $region136: #{tpu_custom_call.1} parent=43 // pred_fallthru
            _
          %573 = shalt.err (0)
          %s575 = sshll.u32 %s566, 4
          %s576 = int_to_ptr.vmem [resolvable:$true] %s575
          %578 = dma.hbm_to_vmem [thread:$0]  %s565, 16, %s576, %s567
          %s579 = sld [smem:[#allocation8 + $0x16]]
          %s580 = smul.addr %s579, 16
          %s581 = scalar_lea.hbm %s3, %s580
          %s582 = scalar_lea.vmem [#allocation2], 22
          %s583 = scalar_lea.sflag [#allocation3], 22
          // Predicated region
          $region137: #{tpu_custom_call.1} parent=43 // pred_check
            _
          $region138: #{tpu_custom_call.1} parent=43 // pred_check_branch
            %585 = sbr.rel target = $region140
          $region139: #{tpu_custom_call.1} parent=43 // pred_region
            %586 = sst [smem:[#allocation17]] [#allocation64]
            %587 = sst [smem:[#allocation18]] [#allocation63]
          $region140: #{tpu_custom_call.1} parent=43 // pred_fallthru
            _
          %589 = shalt.err (0)
          %s591 = sshll.u32 %s582, 4
          %s592 = int_to_ptr.vmem [resolvable:$true] %s591
          %594 = dma.hbm_to_vmem [thread:$0]  %s581, 16, %s592, %s583
          %s595 = sld [smem:[#allocation8 + $0x17]]
          %s596 = smul.addr %s595, 16
          %s597 = scalar_lea.hbm %s3, %s596
          %s598 = scalar_lea.vmem [#allocation2], 23
          %s599 = scalar_lea.sflag [#allocation3], 23
          // Predicated region
          $region141: #{tpu_custom_call.1} parent=43 // pred_check
            _
          $region142: #{tpu_custom_call.1} parent=43 // pred_check_branch
            %601 = sbr.rel target = $region144
          $region143: #{tpu_custom_call.1} parent=43 // pred_region
            %602 = sst [smem:[#allocation17]] [#allocation66]
            %603 = sst [smem:[#allocation18]] [#allocation65]
          $region144: #{tpu_custom_call.1} parent=43 // pred_fallthru
            _
          %605 = shalt.err (0)
          %s607 = sshll.u32 %s598, 4
          %s608 = int_to_ptr.vmem [resolvable:$true] %s607
          %610 = dma.hbm_to_vmem [thread:$0]  %s597, 16, %s608, %s599
          %s611 = sld [smem:[#allocation8 + $0x18]]
          %s612 = smul.addr %s611, 16
          %s613 = scalar_lea.hbm %s3, %s612
          %s614 = scalar_lea.vmem [#allocation2], 24
          %s615 = scalar_lea.sflag [#allocation3], 24
          // Predicated region
          $region145: #{tpu_custom_call.1} parent=43 // pred_check
            _
          $region146: #{tpu_custom_call.1} parent=43 // pred_check_branch
            %617 = sbr.rel target = $region148
          $region147: #{tpu_custom_call.1} parent=43 // pred_region
            %618 = sst [smem:[#allocation17]] [#allocation68]
            %619 = sst [smem:[#allocation18]] [#allocation67]
          $region148: #{tpu_custom_call.1} parent=43 // pred_fallthru
            _
          %621 = shalt.err (0)
          %s623 = sshll.u32 %s614, 4
          %s624 = int_to_ptr.vmem [resolvable:$true] %s623
          %626 = dma.hbm_to_vmem [thread:$0]  %s613, 16, %s624, %s615
          %s627 = sld [smem:[#allocation8 + $0x19]]
          %s628 = smul.addr %s627, 16
          %s629 = scalar_lea.hbm %s3, %s628
          %s630 = scalar_lea.vmem [#allocation2], 25
          %s631 = scalar_lea.sflag [#allocation3], 25
          // Predicated region
          $region149: #{tpu_custom_call.1} parent=43 // pred_check
            _
          $region150: #{tpu_custom_call.1} parent=43 // pred_check_branch
            %633 = sbr.rel target = $region152
          $region151: #{tpu_custom_call.1} parent=43 // pred_region
            %634 = sst [smem:[#allocation17]] [#allocation70]
            %635 = sst [smem:[#allocation18]] [#allocation69]
          $region152: #{tpu_custom_call.1} parent=43 // pred_fallthru
            _
          %637 = shalt.err (0)
          %s639 = sshll.u32 %s630, 4
          %s640 = int_to_ptr.vmem [resolvable:$true] %s639
          %642 = dma.hbm_to_vmem [thread:$0]  %s629, 16, %s640, %s631
          %s643 = sld [smem:[#allocation8 + $0x1a]]
          %s644 = smul.addr %s643, 16
          %s645 = scalar_lea.hbm %s3, %s644
          %s646 = scalar_lea.vmem [#allocation2], 26
          %s647 = scalar_lea.sflag [#allocation3], 26
          // Predicated region
          $region153: #{tpu_custom_call.1} parent=43 // pred_check
            _
          $region154: #{tpu_custom_call.1} parent=43 // pred_check_branch
            %649 = sbr.rel target = $region156
          $region155: #{tpu_custom_call.1} parent=43 // pred_region
            %650 = sst [smem:[#allocation17]] [#allocation72]
            %651 = sst [smem:[#allocation18]] [#allocation71]
          $region156: #{tpu_custom_call.1} parent=43 // pred_fallthru
            _
          %653 = shalt.err (0)
          %s655 = sshll.u32 %s646, 4
          %s656 = int_to_ptr.vmem [resolvable:$true] %s655
          %658 = dma.hbm_to_vmem [thread:$0]  %s645, 16, %s656, %s647
          %s659 = sld [smem:[#allocation8 + $0x1b]]
          %s660 = smul.addr %s659, 16
          %s661 = scalar_lea.hbm %s3, %s660
          %s662 = scalar_lea.vmem [#allocation2], 27
          %s663 = scalar_lea.sflag [#allocation3], 27
          // Predicated region
          $region157: #{tpu_custom_call.1} parent=43 // pred_check
            _
          $region158: #{tpu_custom_call.1} parent=43 // pred_check_branch
            %665 = sbr.rel target = $region160
          $region159: #{tpu_custom_call.1} parent=43 // pred_region
            %666 = sst [smem:[#allocation17]] [#allocation74]
            %667 = sst [smem:[#allocation18]] [#allocation73]
          $region160: #{tpu_custom_call.1} parent=43 // pred_fallthru
            _
          %669 = shalt.err (0)
          %s671 = sshll.u32 %s662, 4
          %s672 = int_to_ptr.vmem [resolvable:$true] %s671
          %674 = dma.hbm_to_vmem [thread:$0]  %s661, 16, %s672, %s663
          %s675 = sld [smem:[#allocation8 + $0x1c]]
          %s676 = smul.addr %s675, 16
          %s677 = scalar_lea.hbm %s3, %s676
          %s678 = scalar_lea.vmem [#allocation2], 28
          %s679 = scalar_lea.sflag [#allocation3], 28
          // Predicated region
          $region161: #{tpu_custom_call.1} parent=43 // pred_check
            _
          $region162: #{tpu_custom_call.1} parent=43 // pred_check_branch
            %681 = sbr.rel target = $region164
          $region163: #{tpu_custom_call.1} parent=43 // pred_region
            %682 = sst [smem:[#allocation17]] [#allocation76]
            %683 = sst [smem:[#allocation18]] [#allocation75]
          $region164: #{tpu_custom_call.1} parent=43 // pred_fallthru
            _
          %685 = shalt.err (0)
          %s687 = sshll.u32 %s678, 4
          %s688 = int_to_ptr.vmem [resolvable:$true] %s687
          %690 = dma.hbm_to_vmem [thread:$0]  %s677, 16, %s688, %s679
          %s691 = sld [smem:[#allocation8 + $0x1d]]
          %s692 = smul.addr %s691, 16
          %s693 = scalar_lea.hbm %s3, %s692
          %s694 = scalar_lea.vmem [#allocation2], 29
          %s695 = scalar_lea.sflag [#allocation3], 29
          // Predicated region
          $region165: #{tpu_custom_call.1} parent=43 // pred_check
            _
          $region166: #{tpu_custom_call.1} parent=43 // pred_check_branch
            %697 = sbr.rel target = $region168
          $region167: #{tpu_custom_call.1} parent=43 // pred_region
            %698 = sst [smem:[#allocation17]] [#allocation78]
            %699 = sst [smem:[#allocation18]] [#allocation77]
          $region168: #{tpu_custom_call.1} parent=43 // pred_fallthru
            _
          %701 = shalt.err (0)
          %s703 = sshll.u32 %s694, 4
          %s704 = int_to_ptr.vmem [resolvable:$true] %s703
          %706 = dma.hbm_to_vmem [thread:$0]  %s693, 16, %s704, %s695
          %s707 = sld [smem:[#allocation8 + $0x1e]]
          %s708 = smul.addr %s707, 16
          %s709 = scalar_lea.hbm %s3, %s708
          %s710 = scalar_lea.vmem [#allocation2], 30
          %s711 = scalar_lea.sflag [#allocation3], 30
          // Predicated region
          $region169: #{tpu_custom_call.1} parent=43 // pred_check
            _
          $region170: #{tpu_custom_call.1} parent=43 // pred_check_branch
            %713 = sbr.rel target = $region172
          $region171: #{tpu_custom_call.1} parent=43 // pred_region
            %714 = sst [smem:[#allocation17]] [#allocation80]
            %715 = sst [smem:[#allocation18]] [#allocation79]
          $region172: #{tpu_custom_call.1} parent=43 // pred_fallthru
            _
          %717 = shalt.err (0)
          %s719 = sshll.u32 %s710, 4
          %s720 = int_to_ptr.vmem [resolvable:$true] %s719
          %722 = dma.hbm_to_vmem [thread:$0]  %s709, 16, %s720, %s711
          %s723 = sld [smem:[#allocation8 + $0x1f]]
          %s724 = smul.addr %s723, 16
          %s725 = scalar_lea.hbm %s3, %s724
          %s726 = scalar_lea.vmem [#allocation2], 31
          %s727 = scalar_lea.sflag [#allocation3], 31
          // Predicated region
          $region173: #{tpu_custom_call.1} parent=43 // pred_check
            _
          $region174: #{tpu_custom_call.1} parent=43 // pred_check_branch
            %729 = sbr.rel target = $region176
          $region175: #{tpu_custom_call.1} parent=43 // pred_region
            %730 = sst [smem:[#allocation17]] [#allocation82]
            %731 = sst [smem:[#allocation18]] [#allocation81]
          $region176: #{tpu_custom_call.1} parent=43 // pred_fallthru
            _
          %733 = shalt.err (0)
          %s735 = sshll.u32 %s726, 4
          %s736 = int_to_ptr.vmem [resolvable:$true] %s735
          %738 = dma.hbm_to_vmem [thread:$0]  %s725, 16, %s736, %s727
        $region44: #{tpu_custom_call.1} parent=31 // pred_fallthru
          _
        %s739 = sand.u32 %s28, 1
        %s740 = sadd.s32 %s28, 1
        %p741 = scmp.lt.s32.totalorder %s740, 4
        // Predicated region
        $region177: #{tpu_custom_call.1} parent=31 // pred_check
          %p742 = pneg %p741
        $region178: #{tpu_custom_call.1} parent=31 // pred_check_branch
          %744 = sbr.rel (%p742) target = $region180
        $region179: #{tpu_custom_call.1} parent=31 // pred_region
          %s745 = ssub.s32 1, %s739
          %s746 = smul.u32 %s740, 32
          %s747 = sld [smem:[#allocation8 + %s746]]
          %s748 = smul.addr %s747, 16
          %s749 = scalar_lea.hbm %s3, %s748
          %s750 = smul.u32 %s745, 32
          %s751 = scalar_lea.vmem [#allocation2], %s750
          %s752 = scalar_lea.sflag [#allocation3], %s750
          // Predicated region
          $region181: #{tpu_custom_call.1} parent=179 // pred_check
            _
          $region182: #{tpu_custom_call.1} parent=179 // pred_check_branch
            %754 = sbr.rel target = $region184
          $region183: #{tpu_custom_call.1} parent=179 // pred_region
            %755 = sst [smem:[#allocation17]] [#allocation84]
            %756 = sst [smem:[#allocation18]] [#allocation83]
          $region184: #{tpu_custom_call.1} parent=179 // pred_fallthru
            _
          %758 = shalt.err (0)
          %s760 = sshll.u32 %s751, 4
          %s761 = int_to_ptr.vmem [resolvable:$true] %s760
          %763 = dma.hbm_to_vmem [thread:$0]  %s749, 16, %s761, %s752
          %s764 = sadd.s32 %s746, 1
          %s765 = sld [smem:[#allocation8 + %s764]]
          %s766 = smul.addr %s765, 16
          %s767 = scalar_lea.hbm %s3, %s766
          %s768 = sadd.s32 1, %s750
          %s769 = scalar_lea.vmem [#allocation2], %s768
          %s770 = scalar_lea.sflag [#allocation3], %s768
          // Predicated region
          $region185: #{tpu_custom_call.1} parent=179 // pred_check
            _
          $region186: #{tpu_custom_call.1} parent=179 // pred_check_branch
            %772 = sbr.rel target = $region188
          $region187: #{tpu_custom_call.1} parent=179 // pred_region
            %773 = sst [smem:[#allocation17]] [#allocation86]
            %774 = sst [smem:[#allocation18]] [#allocation85]
          $region188: #{tpu_custom_call.1} parent=179 // pred_fallthru
            _
          %776 = shalt.err (0)
          %s778 = sshll.u32 %s769, 4
          %s779 = int_to_ptr.vmem [resolvable:$true] %s778
          %781 = dma.hbm_to_vmem [thread:$0]  %s767, 16, %s779, %s770
          %s782 = sadd.s32 %s746, 2
          %s783 = sld [smem:[#allocation8 + %s782]]
          %s784 = smul.addr %s783, 16
          %s785 = scalar_lea.hbm %s3, %s784
          %s786 = sadd.s32 2, %s750
          %s787 = scalar_lea.vmem [#allocation2], %s786
          %s788 = scalar_lea.sflag [#allocation3], %s786
          // Predicated region
          $region189: #{tpu_custom_call.1} parent=179 // pred_check
            _
          $region190: #{tpu_custom_call.1} parent=179 // pred_check_branch
            %790 = sbr.rel target = $region192
          $region191: #{tpu_custom_call.1} parent=179 // pred_region
            %791 = sst [smem:[#allocation17]] [#allocation88]
            %792 = sst [smem:[#allocation18]] [#allocation87]
          $region192: #{tpu_custom_call.1} parent=179 // pred_fallthru
            _
          %794 = shalt.err (0)
          %s796 = sshll.u32 %s787, 4
          %s797 = int_to_ptr.vmem [resolvable:$true] %s796
          %799 = dma.hbm_to_vmem [thread:$0]  %s785, 16, %s797, %s788
          %s800 = sadd.s32 %s746, 3
          %s801 = sld [smem:[#allocation8 + %s800]]
          %s802 = smul.addr %s801, 16
          %s803 = scalar_lea.hbm %s3, %s802
          %s804 = sadd.s32 3, %s750
          %s805 = scalar_lea.vmem [#allocation2], %s804
          %s806 = scalar_lea.sflag [#allocation3], %s804
          // Predicated region
          $region193: #{tpu_custom_call.1} parent=179 // pred_check
            _
          $region194: #{tpu_custom_call.1} parent=179 // pred_check_branch
            %808 = sbr.rel target = $region196
          $region195: #{tpu_custom_call.1} parent=179 // pred_region
            %809 = sst [smem:[#allocation17]] [#allocation90]
            %810 = sst [smem:[#allocation18]] [#allocation89]
          $region196: #{tpu_custom_call.1} parent=179 // pred_fallthru
            _
          %812 = shalt.err (0)
          %s814 = sshll.u32 %s805, 4
          %s815 = int_to_ptr.vmem [resolvable:$true] %s814
          %817 = dma.hbm_to_vmem [thread:$0]  %s803, 16, %s815, %s806
          %s818 = sadd.s32 %s746, 4
          %s819 = sld [smem:[#allocation8 + %s818]]
          %s820 = smul.addr %s819, 16
          %s821 = scalar_lea.hbm %s3, %s820
          %s822 = sadd.s32 4, %s750
          %s823 = scalar_lea.vmem [#allocation2], %s822
          %s824 = scalar_lea.sflag [#allocation3], %s822
          // Predicated region
          $region197: #{tpu_custom_call.1} parent=179 // pred_check
            _
          $region198: #{tpu_custom_call.1} parent=179 // pred_check_branch
            %826 = sbr.rel target = $region200
          $region199: #{tpu_custom_call.1} parent=179 // pred_region
            %827 = sst [smem:[#allocation17]] [#allocation92]
            %828 = sst [smem:[#allocation18]] [#allocation91]
          $region200: #{tpu_custom_call.1} parent=179 // pred_fallthru
            _
          %830 = shalt.err (0)
          %s832 = sshll.u32 %s823, 4
          %s833 = int_to_ptr.vmem [resolvable:$true] %s832
          %835 = dma.hbm_to_vmem [thread:$0]  %s821, 16, %s833, %s824
          %s836 = sadd.s32 %s746, 5
          %s837 = sld [smem:[#allocation8 + %s836]]
          %s838 = smul.addr %s837, 16
          %s839 = scalar_lea.hbm %s3, %s838
          %s840 = sadd.s32 5, %s750
          %s841 = scalar_lea.vmem [#allocation2], %s840
          %s842 = scalar_lea.sflag [#allocation3], %s840
          // Predicated region
          $region201: #{tpu_custom_call.1} parent=179 // pred_check
            _
          $region202: #{tpu_custom_call.1} parent=179 // pred_check_branch
            %844 = sbr.rel target = $region204
          $region203: #{tpu_custom_call.1} parent=179 // pred_region
            %845 = sst [smem:[#allocation17]] [#allocation94]
            %846 = sst [smem:[#allocation18]] [#allocation93]
          $region204: #{tpu_custom_call.1} parent=179 // pred_fallthru
            _
          %848 = shalt.err (0)
          %s850 = sshll.u32 %s841, 4
          %s851 = int_to_ptr.vmem [resolvable:$true] %s850
          %853 = dma.hbm_to_vmem [thread:$0]  %s839, 16, %s851, %s842
          %s854 = sadd.s32 %s746, 6
          %s855 = sld [smem:[#allocation8 + %s854]]
          %s856 = smul.addr %s855, 16
          %s857 = scalar_lea.hbm %s3, %s856
          %s858 = sadd.s32 6, %s750
          %s859 = scalar_lea.vmem [#allocation2], %s858
          %s860 = scalar_lea.sflag [#allocation3], %s858
          // Predicated region
          $region205: #{tpu_custom_call.1} parent=179 // pred_check
            _
          $region206: #{tpu_custom_call.1} parent=179 // pred_check_branch
            %862 = sbr.rel target = $region208
          $region207: #{tpu_custom_call.1} parent=179 // pred_region
            %863 = sst [smem:[#allocation17]] [#allocation96]
            %864 = sst [smem:[#allocation18]] [#allocation95]
          $region208: #{tpu_custom_call.1} parent=179 // pred_fallthru
            _
          %866 = shalt.err (0)
          %s868 = sshll.u32 %s859, 4
          %s869 = int_to_ptr.vmem [resolvable:$true] %s868
          %871 = dma.hbm_to_vmem [thread:$0]  %s857, 16, %s869, %s860
          %s872 = sadd.s32 %s746, 7
          %s873 = sld [smem:[#allocation8 + %s872]]
          %s874 = smul.addr %s873, 16
          %s875 = scalar_lea.hbm %s3, %s874
          %s876 = sadd.s32 7, %s750
          %s877 = scalar_lea.vmem [#allocation2], %s876
          %s878 = scalar_lea.sflag [#allocation3], %s876
          // Predicated region
          $region209: #{tpu_custom_call.1} parent=179 // pred_check
            _
          $region210: #{tpu_custom_call.1} parent=179 // pred_check_branch
            %880 = sbr.rel target = $region212
          $region211: #{tpu_custom_call.1} parent=179 // pred_region
            %881 = sst [smem:[#allocation17]] [#allocation98]
            %882 = sst [smem:[#allocation18]] [#allocation97]
          $region212: #{tpu_custom_call.1} parent=179 // pred_fallthru
            _
          %884 = shalt.err (0)
          %s886 = sshll.u32 %s877, 4
          %s887 = int_to_ptr.vmem [resolvable:$true] %s886
          %889 = dma.hbm_to_vmem [thread:$0]  %s875, 16, %s887, %s878
          %s890 = sadd.s32 %s746, 8
          %s891 = sld [smem:[#allocation8 + %s890]]
          %s892 = smul.addr %s891, 16
          %s893 = scalar_lea.hbm %s3, %s892
          %s894 = sadd.s32 8, %s750
          %s895 = scalar_lea.vmem [#allocation2], %s894
          %s896 = scalar_lea.sflag [#allocation3], %s894
          // Predicated region
          $region213: #{tpu_custom_call.1} parent=179 // pred_check
            _
          $region214: #{tpu_custom_call.1} parent=179 // pred_check_branch
            %898 = sbr.rel target = $region216
          $region215: #{tpu_custom_call.1} parent=179 // pred_region
            %899 = sst [smem:[#allocation17]] [#allocation100]
            %900 = sst [smem:[#allocation18]] [#allocation99]
          $region216: #{tpu_custom_call.1} parent=179 // pred_fallthru
            _
          %902 = shalt.err (0)
          %s904 = sshll.u32 %s895, 4
          %s905 = int_to_ptr.vmem [resolvable:$true] %s904
          %907 = dma.hbm_to_vmem [thread:$0]  %s893, 16, %s905, %s896
          %s908 = sadd.s32 %s746, 9
          %s909 = sld [smem:[#allocation8 + %s908]]
          %s910 = smul.addr %s909, 16
          %s911 = scalar_lea.hbm %s3, %s910
          %s912 = sadd.s32 9, %s750
          %s913 = scalar_lea.vmem [#allocation2], %s912
          %s914 = scalar_lea.sflag [#allocation3], %s912
          // Predicated region
          $region217: #{tpu_custom_call.1} parent=179 // pred_check
            _
          $region218: #{tpu_custom_call.1} parent=179 // pred_check_branch
            %916 = sbr.rel target = $region220
          $region219: #{tpu_custom_call.1} parent=179 // pred_region
            %917 = sst [smem:[#allocation17]] [#allocation102]
            %918 = sst [smem:[#allocation18]] [#allocation101]
          $region220: #{tpu_custom_call.1} parent=179 // pred_fallthru
            _
          %920 = shalt.err (0)
          %s922 = sshll.u32 %s913, 4
          %s923 = int_to_ptr.vmem [resolvable:$true] %s922
          %925 = dma.hbm_to_vmem [thread:$0]  %s911, 16, %s923, %s914
          %s926 = sadd.s32 %s746, 10
          %s927 = sld [smem:[#allocation8 + %s926]]
          %s928 = smul.addr %s927, 16
          %s929 = scalar_lea.hbm %s3, %s928
          %s930 = sadd.s32 10, %s750
          %s931 = scalar_lea.vmem [#allocation2], %s930
          %s932 = scalar_lea.sflag [#allocation3], %s930
          // Predicated region
          $region221: #{tpu_custom_call.1} parent=179 // pred_check
            _
          $region222: #{tpu_custom_call.1} parent=179 // pred_check_branch
            %934 = sbr.rel target = $region224
          $region223: #{tpu_custom_call.1} parent=179 // pred_region
            %935 = sst [smem:[#allocation17]] [#allocation104]
            %936 = sst [smem:[#allocation18]] [#allocation103]
          $region224: #{tpu_custom_call.1} parent=179 // pred_fallthru
            _
          %938 = shalt.err (0)
          %s940 = sshll.u32 %s931, 4
          %s941 = int_to_ptr.vmem [resolvable:$true] %s940
          %943 = dma.hbm_to_vmem [thread:$0]  %s929, 16, %s941, %s932
          %s944 = sadd.s32 %s746, 11
          %s945 = sld [smem:[#allocation8 + %s944]]
          %s946 = smul.addr %s945, 16
          %s947 = scalar_lea.hbm %s3, %s946
          %s948 = sadd.s32 11, %s750
          %s949 = scalar_lea.vmem [#allocation2], %s948
          %s950 = scalar_lea.sflag [#allocation3], %s948
          // Predicated region
          $region225: #{tpu_custom_call.1} parent=179 // pred_check
            _
          $region226: #{tpu_custom_call.1} parent=179 // pred_check_branch
            %952 = sbr.rel target = $region228
          $region227: #{tpu_custom_call.1} parent=179 // pred_region
            %953 = sst [smem:[#allocation17]] [#allocation106]
            %954 = sst [smem:[#allocation18]] [#allocation105]
          $region228: #{tpu_custom_call.1} parent=179 // pred_fallthru
            _
          %956 = shalt.err (0)
          %s958 = sshll.u32 %s949, 4
          %s959 = int_to_ptr.vmem [resolvable:$true] %s958
          %961 = dma.hbm_to_vmem [thread:$0]  %s947, 16, %s959, %s950
          %s962 = sadd.s32 %s746, 12
          %s963 = sld [smem:[#allocation8 + %s962]]
          %s964 = smul.addr %s963, 16
          %s965 = scalar_lea.hbm %s3, %s964
          %s966 = sadd.s32 12, %s750
          %s967 = scalar_lea.vmem [#allocation2], %s966
          %s968 = scalar_lea.sflag [#allocation3], %s966
          // Predicated region
          $region229: #{tpu_custom_call.1} parent=179 // pred_check
            _
          $region230: #{tpu_custom_call.1} parent=179 // pred_check_branch
            %970 = sbr.rel target = $region232
          $region231: #{tpu_custom_call.1} parent=179 // pred_region
            %971 = sst [smem:[#allocation17]] [#allocation108]
            %972 = sst [smem:[#allocation18]] [#allocation107]
          $region232: #{tpu_custom_call.1} parent=179 // pred_fallthru
            _
          %974 = shalt.err (0)
          %s976 = sshll.u32 %s967, 4
          %s977 = int_to_ptr.vmem [resolvable:$true] %s976
          %979 = dma.hbm_to_vmem [thread:$0]  %s965, 16, %s977, %s968
          %s980 = sadd.s32 %s746, 13
          %s981 = sld [smem:[#allocation8 + %s980]]
          %s982 = smul.addr %s981, 16
          %s983 = scalar_lea.hbm %s3, %s982
          %s984 = sadd.s32 13, %s750
          %s985 = scalar_lea.vmem [#allocation2], %s984
          %s986 = scalar_lea.sflag [#allocation3], %s984
          // Predicated region
          $region233: #{tpu_custom_call.1} parent=179 // pred_check
            _
          $region234: #{tpu_custom_call.1} parent=179 // pred_check_branch
            %988 = sbr.rel target = $region236
          $region235: #{tpu_custom_call.1} parent=179 // pred_region
            %989 = sst [smem:[#allocation17]] [#allocation110]
            %990 = sst [smem:[#allocation18]] [#allocation109]
          $region236: #{tpu_custom_call.1} parent=179 // pred_fallthru
            _
          %992 = shalt.err (0)
          %s994 = sshll.u32 %s985, 4
          %s995 = int_to_ptr.vmem [resolvable:$true] %s994
          %997 = dma.hbm_to_vmem [thread:$0]  %s983, 16, %s995, %s986
          %s998 = sadd.s32 %s746, 14
          %s999 = sld [smem:[#allocation8 + %s998]]
          %s1000 = smul.addr %s999, 16
          %s1001 = scalar_lea.hbm %s3, %s1000
          %s1002 = sadd.s32 14, %s750
          %s1003 = scalar_lea.vmem [#allocation2], %s1002
          %s1004 = scalar_lea.sflag [#allocation3], %s1002
          // Predicated region
          $region237: #{tpu_custom_call.1} parent=179 // pred_check
            _
          $region238: #{tpu_custom_call.1} parent=179 // pred_check_branch
            %1006 = sbr.rel target = $region240
          $region239: #{tpu_custom_call.1} parent=179 // pred_region
            %1007 = sst [smem:[#allocation17]] [#allocation112]
            %1008 = sst [smem:[#allocation18]] [#allocation111]
          $region240: #{tpu_custom_call.1} parent=179 // pred_fallthru
            _
          %1010 = shalt.err (0)
          %s1012 = sshll.u32 %s1003, 4
          %s1013 = int_to_ptr.vmem [resolvable:$true] %s1012
          %1015 = dma.hbm_to_vmem [thread:$0]  %s1001, 16, %s1013, %s1004
          %s1016 = sadd.s32 %s746, 15
          %s1017 = sld [smem:[#allocation8 + %s1016]]
          %s1018 = smul.addr %s1017, 16
          %s1019 = scalar_lea.hbm %s3, %s1018
          %s1020 = sadd.s32 15, %s750
          %s1021 = scalar_lea.vmem [#allocation2], %s1020
          %s1022 = scalar_lea.sflag [#allocation3], %s1020
          // Predicated region
          $region241: #{tpu_custom_call.1} parent=179 // pred_check
            _
          $region242: #{tpu_custom_call.1} parent=179 // pred_check_branch
            %1024 = sbr.rel target = $region244
          $region243: #{tpu_custom_call.1} parent=179 // pred_region
            %1025 = sst [smem:[#allocation17]] [#allocation114]
            %1026 = sst [smem:[#allocation18]] [#allocation113]
          $region244: #{tpu_custom_call.1} parent=179 // pred_fallthru
            _
          %1028 = shalt.err (0)
          %s1030 = sshll.u32 %s1021, 4
          %s1031 = int_to_ptr.vmem [resolvable:$true] %s1030
          %1033 = dma.hbm_to_vmem [thread:$0]  %s1019, 16, %s1031, %s1022
          %s1034 = sadd.s32 %s746, 16
          %s1035 = sld [smem:[#allocation8 + %s1034]]
          %s1036 = smul.addr %s1035, 16
          %s1037 = scalar_lea.hbm %s3, %s1036
          %s1038 = sadd.s32 16, %s750
          %s1039 = scalar_lea.vmem [#allocation2], %s1038
          %s1040 = scalar_lea.sflag [#allocation3], %s1038
          // Predicated region
          $region245: #{tpu_custom_call.1} parent=179 // pred_check
            _
          $region246: #{tpu_custom_call.1} parent=179 // pred_check_branch
            %1042 = sbr.rel target = $region248
          $region247: #{tpu_custom_call.1} parent=179 // pred_region
            %1043 = sst [smem:[#allocation17]] [#allocation116]
            %1044 = sst [smem:[#allocation18]] [#allocation115]
          $region248: #{tpu_custom_call.1} parent=179 // pred_fallthru
            _
          %1046 = shalt.err (0)
          %s1048 = sshll.u32 %s1039, 4
          %s1049 = int_to_ptr.vmem [resolvable:$true] %s1048
          %1051 = dma.hbm_to_vmem [thread:$0]  %s1037, 16, %s1049, %s1040
          %s1052 = sadd.s32 %s746, 17
          %s1053 = sld [smem:[#allocation8 + %s1052]]
          %s1054 = smul.addr %s1053, 16
          %s1055 = scalar_lea.hbm %s3, %s1054
          %s1056 = sadd.s32 17, %s750
          %s1057 = scalar_lea.vmem [#allocation2], %s1056
          %s1058 = scalar_lea.sflag [#allocation3], %s1056
          // Predicated region
          $region249: #{tpu_custom_call.1} parent=179 // pred_check
            _
          $region250: #{tpu_custom_call.1} parent=179 // pred_check_branch
            %1060 = sbr.rel target = $region252
          $region251: #{tpu_custom_call.1} parent=179 // pred_region
            %1061 = sst [smem:[#allocation17]] [#allocation118]
            %1062 = sst [smem:[#allocation18]] [#allocation117]
          $region252: #{tpu_custom_call.1} parent=179 // pred_fallthru
            _
          %1064 = shalt.err (0)
          %s1066 = sshll.u32 %s1057, 4
          %s1067 = int_to_ptr.vmem [resolvable:$true] %s1066
          %1069 = dma.hbm_to_vmem [thread:$0]  %s1055, 16, %s1067, %s1058
          %s1070 = sadd.s32 %s746, 18
          %s1071 = sld [smem:[#allocation8 + %s1070]]
          %s1072 = smul.addr %s1071, 16
          %s1073 = scalar_lea.hbm %s3, %s1072
          %s1074 = sadd.s32 18, %s750
          %s1075 = scalar_lea.vmem [#allocation2], %s1074
          %s1076 = scalar_lea.sflag [#allocation3], %s1074
          // Predicated region
          $region253: #{tpu_custom_call.1} parent=179 // pred_check
            _
          $region254: #{tpu_custom_call.1} parent=179 // pred_check_branch
            %1078 = sbr.rel target = $region256
          $region255: #{tpu_custom_call.1} parent=179 // pred_region
            %1079 = sst [smem:[#allocation17]] [#allocation120]
            %1080 = sst [smem:[#allocation18]] [#allocation119]
          $region256: #{tpu_custom_call.1} parent=179 // pred_fallthru
            _
          %1082 = shalt.err (0)
          %s1084 = sshll.u32 %s1075, 4
          %s1085 = int_to_ptr.vmem [resolvable:$true] %s1084
          %1087 = dma.hbm_to_vmem [thread:$0]  %s1073, 16, %s1085, %s1076
          %s1088 = sadd.s32 %s746, 19
          %s1089 = sld [smem:[#allocation8 + %s1088]]
          %s1090 = smul.addr %s1089, 16
          %s1091 = scalar_lea.hbm %s3, %s1090
          %s1092 = sadd.s32 19, %s750
          %s1093 = scalar_lea.vmem [#allocation2], %s1092
          %s1094 = scalar_lea.sflag [#allocation3], %s1092
          // Predicated region
          $region257: #{tpu_custom_call.1} parent=179 // pred_check
            _
          $region258: #{tpu_custom_call.1} parent=179 // pred_check_branch
            %1096 = sbr.rel target = $region260
          $region259: #{tpu_custom_call.1} parent=179 // pred_region
            %1097 = sst [smem:[#allocation17]] [#allocation122]
            %1098 = sst [smem:[#allocation18]] [#allocation121]
          $region260: #{tpu_custom_call.1} parent=179 // pred_fallthru
            _
          %1100 = shalt.err (0)
          %s1102 = sshll.u32 %s1093, 4
          %s1103 = int_to_ptr.vmem [resolvable:$true] %s1102
          %1105 = dma.hbm_to_vmem [thread:$0]  %s1091, 16, %s1103, %s1094
          %s1106 = sadd.s32 %s746, 20
          %s1107 = sld [smem:[#allocation8 + %s1106]]
          %s1108 = smul.addr %s1107, 16
          %s1109 = scalar_lea.hbm %s3, %s1108
          %s1110 = sadd.s32 20, %s750
          %s1111 = scalar_lea.vmem [#allocation2], %s1110
          %s1112 = scalar_lea.sflag [#allocation3], %s1110
          // Predicated region
          $region261: #{tpu_custom_call.1} parent=179 // pred_check
            _
          $region262: #{tpu_custom_call.1} parent=179 // pred_check_branch
            %1114 = sbr.rel target = $region264
          $region263: #{tpu_custom_call.1} parent=179 // pred_region
            %1115 = sst [smem:[#allocation17]] [#allocation124]
            %1116 = sst [smem:[#allocation18]] [#allocation123]
          $region264: #{tpu_custom_call.1} parent=179 // pred_fallthru
            _
          %1118 = shalt.err (0)
          %s1120 = sshll.u32 %s1111, 4
          %s1121 = int_to_ptr.vmem [resolvable:$true] %s1120
          %1123 = dma.hbm_to_vmem [thread:$0]  %s1109, 16, %s1121, %s1112
          %s1124 = sadd.s32 %s746, 21
          %s1125 = sld [smem:[#allocation8 + %s1124]]
          %s1126 = smul.addr %s1125, 16
          %s1127 = scalar_lea.hbm %s3, %s1126
          %s1128 = sadd.s32 21, %s750
          %s1129 = scalar_lea.vmem [#allocation2], %s1128
          %s1130 = scalar_lea.sflag [#allocation3], %s1128
          // Predicated region
          $region265: #{tpu_custom_call.1} parent=179 // pred_check
            _
          $region266: #{tpu_custom_call.1} parent=179 // pred_check_branch
            %1132 = sbr.rel target = $region268
          $region267: #{tpu_custom_call.1} parent=179 // pred_region
            %1133 = sst [smem:[#allocation17]] [#allocation126]
            %1134 = sst [smem:[#allocation18]] [#allocation125]
          $region268: #{tpu_custom_call.1} parent=179 // pred_fallthru
            _
          %1136 = shalt.err (0)
          %s1138 = sshll.u32 %s1129, 4
          %s1139 = int_to_ptr.vmem [resolvable:$true] %s1138
          %1141 = dma.hbm_to_vmem [thread:$0]  %s1127, 16, %s1139, %s1130
          %s1142 = sadd.s32 %s746, 22
          %s1143 = sld [smem:[#allocation8 + %s1142]]
          %s1144 = smul.addr %s1143, 16
          %s1145 = scalar_lea.hbm %s3, %s1144
          %s1146 = sadd.s32 22, %s750
          %s1147 = scalar_lea.vmem [#allocation2], %s1146
          %s1148 = scalar_lea.sflag [#allocation3], %s1146
          // Predicated region
          $region269: #{tpu_custom_call.1} parent=179 // pred_check
            _
          $region270: #{tpu_custom_call.1} parent=179 // pred_check_branch
            %1150 = sbr.rel target = $region272
          $region271: #{tpu_custom_call.1} parent=179 // pred_region
            %1151 = sst [smem:[#allocation17]] [#allocation128]
            %1152 = sst [smem:[#allocation18]] [#allocation127]
          $region272: #{tpu_custom_call.1} parent=179 // pred_fallthru
            _
          %1154 = shalt.err (0)
          %s1156 = sshll.u32 %s1147, 4
          %s1157 = int_to_ptr.vmem [resolvable:$true] %s1156
          %1159 = dma.hbm_to_vmem [thread:$0]  %s1145, 16, %s1157, %s1148
          %s1160 = sadd.s32 %s746, 23
          %s1161 = sld [smem:[#allocation8 + %s1160]]
          %s1162 = smul.addr %s1161, 16
          %s1163 = scalar_lea.hbm %s3, %s1162
          %s1164 = sadd.s32 23, %s750
          %s1165 = scalar_lea.vmem [#allocation2], %s1164
          %s1166 = scalar_lea.sflag [#allocation3], %s1164
          // Predicated region
          $region273: #{tpu_custom_call.1} parent=179 // pred_check
            _
          $region274: #{tpu_custom_call.1} parent=179 // pred_check_branch
            %1168 = sbr.rel target = $region276
          $region275: #{tpu_custom_call.1} parent=179 // pred_region
            %1169 = sst [smem:[#allocation17]] [#allocation130]
            %1170 = sst [smem:[#allocation18]] [#allocation129]
          $region276: #{tpu_custom_call.1} parent=179 // pred_fallthru
            _
          %1172 = shalt.err (0)
          %s1174 = sshll.u32 %s1165, 4
          %s1175 = int_to_ptr.vmem [resolvable:$true] %s1174
          %1177 = dma.hbm_to_vmem [thread:$0]  %s1163, 16, %s1175, %s1166
          %s1178 = sadd.s32 %s746, 24
          %s1179 = sld [smem:[#allocation8 + %s1178]]
          %s1180 = smul.addr %s1179, 16
          %s1181 = scalar_lea.hbm %s3, %s1180
          %s1182 = sadd.s32 24, %s750
          %s1183 = scalar_lea.vmem [#allocation2], %s1182
          %s1184 = scalar_lea.sflag [#allocation3], %s1182
          // Predicated region
          $region277: #{tpu_custom_call.1} parent=179 // pred_check
            _
          $region278: #{tpu_custom_call.1} parent=179 // pred_check_branch
            %1186 = sbr.rel target = $region280
          $region279: #{tpu_custom_call.1} parent=179 // pred_region
            %1187 = sst [smem:[#allocation17]] [#allocation132]
            %1188 = sst [smem:[#allocation18]] [#allocation131]
          $region280: #{tpu_custom_call.1} parent=179 // pred_fallthru
            _
          %1190 = shalt.err (0)
          %s1192 = sshll.u32 %s1183, 4
          %s1193 = int_to_ptr.vmem [resolvable:$true] %s1192
          %1195 = dma.hbm_to_vmem [thread:$0]  %s1181, 16, %s1193, %s1184
          %s1196 = sadd.s32 %s746, 25
          %s1197 = sld [smem:[#allocation8 + %s1196]]
          %s1198 = smul.addr %s1197, 16
          %s1199 = scalar_lea.hbm %s3, %s1198
          %s1200 = sadd.s32 25, %s750
          %s1201 = scalar_lea.vmem [#allocation2], %s1200
          %s1202 = scalar_lea.sflag [#allocation3], %s1200
          // Predicated region
          $region281: #{tpu_custom_call.1} parent=179 // pred_check
            _
          $region282: #{tpu_custom_call.1} parent=179 // pred_check_branch
            %1204 = sbr.rel target = $region284
          $region283: #{tpu_custom_call.1} parent=179 // pred_region
            %1205 = sst [smem:[#allocation17]] [#allocation134]
            %1206 = sst [smem:[#allocation18]] [#allocation133]
          $region284: #{tpu_custom_call.1} parent=179 // pred_fallthru
            _
          %1208 = shalt.err (0)
          %s1210 = sshll.u32 %s1201, 4
          %s1211 = int_to_ptr.vmem [resolvable:$true] %s1210
          %1213 = dma.hbm_to_vmem [thread:$0]  %s1199, 16, %s1211, %s1202
          %s1214 = sadd.s32 %s746, 26
          %s1215 = sld [smem:[#allocation8 + %s1214]]
          %s1216 = smul.addr %s1215, 16
          %s1217 = scalar_lea.hbm %s3, %s1216
          %s1218 = sadd.s32 26, %s750
          %s1219 = scalar_lea.vmem [#allocation2], %s1218
          %s1220 = scalar_lea.sflag [#allocation3], %s1218
          // Predicated region
          $region285: #{tpu_custom_call.1} parent=179 // pred_check
            _
          $region286: #{tpu_custom_call.1} parent=179 // pred_check_branch
            %1222 = sbr.rel target = $region288
          $region287: #{tpu_custom_call.1} parent=179 // pred_region
            %1223 = sst [smem:[#allocation17]] [#allocation136]
            %1224 = sst [smem:[#allocation18]] [#allocation135]
          $region288: #{tpu_custom_call.1} parent=179 // pred_fallthru
            _
          %1226 = shalt.err (0)
          %s1228 = sshll.u32 %s1219, 4
          %s1229 = int_to_ptr.vmem [resolvable:$true] %s1228
          %1231 = dma.hbm_to_vmem [thread:$0]  %s1217, 16, %s1229, %s1220
          %s1232 = sadd.s32 %s746, 27
          %s1233 = sld [smem:[#allocation8 + %s1232]]
          %s1234 = smul.addr %s1233, 16
          %s1235 = scalar_lea.hbm %s3, %s1234
          %s1236 = sadd.s32 27, %s750
          %s1237 = scalar_lea.vmem [#allocation2], %s1236
          %s1238 = scalar_lea.sflag [#allocation3], %s1236
          // Predicated region
          $region289: #{tpu_custom_call.1} parent=179 // pred_check
            _
          $region290: #{tpu_custom_call.1} parent=179 // pred_check_branch
            %1240 = sbr.rel target = $region292
          $region291: #{tpu_custom_call.1} parent=179 // pred_region
            %1241 = sst [smem:[#allocation17]] [#allocation138]
            %1242 = sst [smem:[#allocation18]] [#allocation137]
          $region292: #{tpu_custom_call.1} parent=179 // pred_fallthru
            _
          %1244 = shalt.err (0)
          %s1246 = sshll.u32 %s1237, 4
          %s1247 = int_to_ptr.vmem [resolvable:$true] %s1246
          %1249 = dma.hbm_to_vmem [thread:$0]  %s1235, 16, %s1247, %s1238
          %s1250 = sadd.s32 %s746, 28
          %s1251 = sld [smem:[#allocation8 + %s1250]]
          %s1252 = smul.addr %s1251, 16
          %s1253 = scalar_lea.hbm %s3, %s1252
          %s1254 = sadd.s32 28, %s750
          %s1255 = scalar_lea.vmem [#allocation2], %s1254
          %s1256 = scalar_lea.sflag [#allocation3], %s1254
          // Predicated region
          $region293: #{tpu_custom_call.1} parent=179 // pred_check
            _
          $region294: #{tpu_custom_call.1} parent=179 // pred_check_branch
            %1258 = sbr.rel target = $region296
          $region295: #{tpu_custom_call.1} parent=179 // pred_region
            %1259 = sst [smem:[#allocation17]] [#allocation140]
            %1260 = sst [smem:[#allocation18]] [#allocation139]
          $region296: #{tpu_custom_call.1} parent=179 // pred_fallthru
            _
          %1262 = shalt.err (0)
          %s1264 = sshll.u32 %s1255, 4
          %s1265 = int_to_ptr.vmem [resolvable:$true] %s1264
          %1267 = dma.hbm_to_vmem [thread:$0]  %s1253, 16, %s1265, %s1256
          %s1268 = sadd.s32 %s746, 29
          %s1269 = sld [smem:[#allocation8 + %s1268]]
          %s1270 = smul.addr %s1269, 16
          %s1271 = scalar_lea.hbm %s3, %s1270
          %s1272 = sadd.s32 29, %s750
          %s1273 = scalar_lea.vmem [#allocation2], %s1272
          %s1274 = scalar_lea.sflag [#allocation3], %s1272
          // Predicated region
          $region297: #{tpu_custom_call.1} parent=179 // pred_check
            _
          $region298: #{tpu_custom_call.1} parent=179 // pred_check_branch
            %1276 = sbr.rel target = $region300
          $region299: #{tpu_custom_call.1} parent=179 // pred_region
            %1277 = sst [smem:[#allocation17]] [#allocation142]
            %1278 = sst [smem:[#allocation18]] [#allocation141]
          $region300: #{tpu_custom_call.1} parent=179 // pred_fallthru
            _
          %1280 = shalt.err (0)
          %s1282 = sshll.u32 %s1273, 4
          %s1283 = int_to_ptr.vmem [resolvable:$true] %s1282
          %1285 = dma.hbm_to_vmem [thread:$0]  %s1271, 16, %s1283, %s1274
          %s1286 = sadd.s32 %s746, 30
          %s1287 = sld [smem:[#allocation8 + %s1286]]
          %s1288 = smul.addr %s1287, 16
          %s1289 = scalar_lea.hbm %s3, %s1288
          %s1290 = sadd.s32 30, %s750
          %s1291 = scalar_lea.vmem [#allocation2], %s1290
          %s1292 = scalar_lea.sflag [#allocation3], %s1290
          // Predicated region
          $region301: #{tpu_custom_call.1} parent=179 // pred_check
            _
          $region302: #{tpu_custom_call.1} parent=179 // pred_check_branch
            %1294 = sbr.rel target = $region304
          $region303: #{tpu_custom_call.1} parent=179 // pred_region
            %1295 = sst [smem:[#allocation17]] [#allocation144]
            %1296 = sst [smem:[#allocation18]] [#allocation143]
          $region304: #{tpu_custom_call.1} parent=179 // pred_fallthru
            _
          %1298 = shalt.err (0)
          %s1300 = sshll.u32 %s1291, 4
          %s1301 = int_to_ptr.vmem [resolvable:$true] %s1300
          %1303 = dma.hbm_to_vmem [thread:$0]  %s1289, 16, %s1301, %s1292
          %s1304 = sadd.s32 %s746, 31
          %s1305 = sld [smem:[#allocation8 + %s1304]]
          %s1306 = smul.addr %s1305, 16
          %s1307 = scalar_lea.hbm %s3, %s1306
          %s1308 = sadd.s32 31, %s750
          %s1309 = scalar_lea.vmem [#allocation2], %s1308
          %s1310 = scalar_lea.sflag [#allocation3], %s1308
          // Predicated region
          $region305: #{tpu_custom_call.1} parent=179 // pred_check
            _
          $region306: #{tpu_custom_call.1} parent=179 // pred_check_branch
            %1312 = sbr.rel target = $region308
          $region307: #{tpu_custom_call.1} parent=179 // pred_region
            %1313 = sst [smem:[#allocation17]] [#allocation146]
            %1314 = sst [smem:[#allocation18]] [#allocation145]
          $region308: #{tpu_custom_call.1} parent=179 // pred_fallthru
            _
          %1316 = shalt.err (0)
          %s1318 = sshll.u32 %s1309, 4
          %s1319 = int_to_ptr.vmem [resolvable:$true] %s1318
          %1321 = dma.hbm_to_vmem [thread:$0]  %s1307, 16, %s1319, %s1310
        $region180: #{tpu_custom_call.1} parent=31 // pred_fallthru
          _
        %s1322 = smul.u32 %s739, 32
        %s1323 = scalar_lea.sflag [#allocation3], %s1322
        %s1324 = smul.u32 1, 1
        %s1325 = sshll.u32 %s1324, 4
        %1326 = dma.done %s1323, %s1325
        %s1327 = sadd.s32 1, %s1322
        %s1328 = scalar_lea.sflag [#allocation3], %s1327
        %s1329 = sshll.u32 %s1324, 4
        %1330 = dma.done %s1328, %s1329
        %s1331 = sadd.s32 2, %s1322
        %s1332 = scalar_lea.sflag [#allocation3], %s1331
        %s1333 = sshll.u32 %s1324, 4
        %1334 = dma.done %s1332, %s1333
        %s1335 = sadd.s32 3, %s1322
        %s1336 = scalar_lea.sflag [#allocation3], %s1335
        %s1337 = sshll.u32 %s1324, 4
        %1338 = dma.done %s1336, %s1337
        %s1339 = sadd.s32 4, %s1322
        %s1340 = scalar_lea.sflag [#allocation3], %s1339
        %s1341 = sshll.u32 %s1324, 4
        %1342 = dma.done %s1340, %s1341
        %s1343 = sadd.s32 5, %s1322
        %s1344 = scalar_lea.sflag [#allocation3], %s1343
        %s1345 = sshll.u32 %s1324, 4
        %1346 = dma.done %s1344, %s1345
        %s1347 = sadd.s32 6, %s1322
        %s1348 = scalar_lea.sflag [#allocation3], %s1347
        %s1349 = sshll.u32 %s1324, 4
        %1350 = dma.done %s1348, %s1349
        %s1351 = sadd.s32 7, %s1322
        %s1352 = scalar_lea.sflag [#allocation3], %s1351
        %s1353 = sshll.u32 %s1324, 4
        %1354 = dma.done %s1352, %s1353
        %s1355 = sadd.s32 8, %s1322
        %s1356 = scalar_lea.sflag [#allocation3], %s1355
        %s1357 = sshll.u32 %s1324, 4
        %1358 = dma.done %s1356, %s1357
        %s1359 = sadd.s32 9, %s1322
        %s1360 = scalar_lea.sflag [#allocation3], %s1359
        %s1361 = sshll.u32 %s1324, 4
        %1362 = dma.done %s1360, %s1361
        %s1363 = sadd.s32 10, %s1322
        %s1364 = scalar_lea.sflag [#allocation3], %s1363
        %s1365 = sshll.u32 %s1324, 4
        %1366 = dma.done %s1364, %s1365
        %s1367 = sadd.s32 11, %s1322
        %s1368 = scalar_lea.sflag [#allocation3], %s1367
        %s1369 = sshll.u32 %s1324, 4
        %1370 = dma.done %s1368, %s1369
        %s1371 = sadd.s32 12, %s1322
        %s1372 = scalar_lea.sflag [#allocation3], %s1371
        %s1373 = sshll.u32 %s1324, 4
        %1374 = dma.done %s1372, %s1373
        %s1375 = sadd.s32 13, %s1322
        %s1376 = scalar_lea.sflag [#allocation3], %s1375
        %s1377 = sshll.u32 %s1324, 4
        %1378 = dma.done %s1376, %s1377
        %s1379 = sadd.s32 14, %s1322
        %s1380 = scalar_lea.sflag [#allocation3], %s1379
        %s1381 = sshll.u32 %s1324, 4
        %1382 = dma.done %s1380, %s1381
        %s1383 = sadd.s32 15, %s1322
        %s1384 = scalar_lea.sflag [#allocation3], %s1383
        %s1385 = sshll.u32 %s1324, 4
        %1386 = dma.done %s1384, %s1385
        %s1387 = sadd.s32 16, %s1322
        %s1388 = scalar_lea.sflag [#allocation3], %s1387
        %s1389 = sshll.u32 %s1324, 4
        %1390 = dma.done %s1388, %s1389
        %s1391 = sadd.s32 17, %s1322
        %s1392 = scalar_lea.sflag [#allocation3], %s1391
        %s1393 = sshll.u32 %s1324, 4
        %1394 = dma.done %s1392, %s1393
        %s1395 = sadd.s32 18, %s1322
        %s1396 = scalar_lea.sflag [#allocation3], %s1395
        %s1397 = sshll.u32 %s1324, 4
        %1398 = dma.done %s1396, %s1397
        %s1399 = sadd.s32 19, %s1322
        %s1400 = scalar_lea.sflag [#allocation3], %s1399
        %s1401 = sshll.u32 %s1324, 4
        %1402 = dma.done %s1400, %s1401
        %s1403 = sadd.s32 20, %s1322
        %s1404 = scalar_lea.sflag [#allocation3], %s1403
        %s1405 = sshll.u32 %s1324, 4
        %1406 = dma.done %s1404, %s1405
        %s1407 = sadd.s32 21, %s1322
        %s1408 = scalar_lea.sflag [#allocation3], %s1407
        %s1409 = sshll.u32 %s1324, 4
        %1410 = dma.done %s1408, %s1409
        %s1411 = sadd.s32 22, %s1322
        %s1412 = scalar_lea.sflag [#allocation3], %s1411
        %s1413 = sshll.u32 %s1324, 4
        %1414 = dma.done %s1412, %s1413
        %s1415 = sadd.s32 23, %s1322
        %s1416 = scalar_lea.sflag [#allocation3], %s1415
        %s1417 = sshll.u32 %s1324, 4
        %1418 = dma.done %s1416, %s1417
        %s1419 = sadd.s32 24, %s1322
        %s1420 = scalar_lea.sflag [#allocation3], %s1419
        %s1421 = sshll.u32 %s1324, 4
        %1422 = dma.done %s1420, %s1421
        %s1423 = sadd.s32 25, %s1322
        %s1424 = scalar_lea.sflag [#allocation3], %s1423
        %s1425 = sshll.u32 %s1324, 4
        %1426 = dma.done %s1424, %s1425
        %s1427 = sadd.s32 26, %s1322
        %s1428 = scalar_lea.sflag [#allocation3], %s1427
        %s1429 = sshll.u32 %s1324, 4
        %1430 = dma.done %s1428, %s1429
        %s1431 = sadd.s32 27, %s1322
        %s1432 = scalar_lea.sflag [#allocation3], %s1431
        %s1433 = sshll.u32 %s1324, 4
        %1434 = dma.done %s1432, %s1433
        %s1435 = sadd.s32 28, %s1322
        %s1436 = scalar_lea.sflag [#allocation3], %s1435
        %s1437 = sshll.u32 %s1324, 4
        %1438 = dma.done %s1436, %s1437
        %s1439 = sadd.s32 29, %s1322
        %s1440 = scalar_lea.sflag [#allocation3], %s1439
        %s1441 = sshll.u32 %s1324, 4
        %1442 = dma.done %s1440, %s1441
        %s1443 = sadd.s32 30, %s1322
        %s1444 = scalar_lea.sflag [#allocation3], %s1443
        %s1445 = sshll.u32 %s1324, 4
        %1446 = dma.done %s1444, %s1445
        %s1447 = sadd.s32 31, %s1322
        %s1448 = scalar_lea.sflag [#allocation3], %s1447
        %s1449 = sshll.u32 %s1324, 4
        %1450 = dma.done %s1448, %s1449
        %s1451 = scalar_lea.vmem [#allocation2], %s1322
        %v1452 = vld [vmem:[%s1451] sm:$0xff]
        %v1453 = vld [vmem:[%s1451 + $0x8] sm:$0xff]
        %v1454 = vld [vmem:[%s1451 + $0x10] sm:$0xff]
        %v1455 = vld [vmem:[%s1451 + $0x18] sm:$0xff]
        %v1456 = vld [vmem:[%s183] sm:$0x1]
        %v1457 = vld [vmem:[%s191] sm:$0x1]
        %v1458 = vlaneseq
        %v1459 = vshrl.u32 %v1458, 7
        %v1460 = vlaneseq
        %v1461 = vshrl.u32 %v1460, 7
        %v1462 = vsub.s32 0, %v1461
        %v1463 = vrot.slane %v1456, %v1462
        %vm1464 = vcmp.eq.s32.totalorder %v1459, %v1463
        %v1466 = vlaneseq
        %v1467 = vshrl.u32 %v1466, 7
        %v1468 = vsub.s32 0, %v1467
        %v1469 = vrot.slane %v1457, %v1468
        %v1471 = vsel %vm1464, %v1469, 0.0
        %v1472 = vld [vmem:[#allocation6] sm:$0xff]
        %vm1473 = vcmask 261120
        %v1475 = vsel %vm1473, %v1471, 0
        %1477 = vmatprep.subr.mxu0 0.0
        %1478 = vmatpush1.msra.mxu0 0.0
        %1479 = vmatprep.subr.mxu0 0.0
        %1480 = vmatpush1.msra.mxu0 0.0
        %1481 = vmatprep.subr.mxu0 0.0
        %1482 = vmatpush1.msra.mxu0 0.0
        %1483 = vmatprep.subr.mxu0 0.0
        %1484 = vmatpush1.msra.mxu0 0.0
        %1485 = vmatprep.subr.mxu0 0.0
        %1486 = vmatpush1.msra.mxu0 0.0
        %1487 = vmatprep.subr.mxu0 0.0
        %1488 = vmatpush1.msra.mxu0 0.0
        %1489 = vmatprep.subr.mxu0 0.0
        %1490 = vmatpush1.msra.mxu0 0.0
        %1491 = vmatprep.subr.mxu0 0.0
        %1492 = vmatpush1.msra.mxu0 0.0
        %1493 = vmatprep.subr.mxu0 0.0
        %1494 = vmatpush1.msra.mxu0 0.0
        %1495 = vmatprep.subr.mxu0 0.0
        %1496 = vmatpush1.msra.mxu0 0.0
        %1497 = vmatprep.subr.mxu0 0.0
        %1498 = vmatpush1.msra.mxu0 0.0
        %1499 = vmatprep.subr.mxu0 0.0
        %1500 = vmatpush1.msra.mxu0 0.0
        %1501 = vmatprep.subr.mxu0 0.0
        %1502 = vmatpush1.msra.mxu0 %v1455
        %1503 = vmatprep.subr.mxu0 0.0
        %1504 = vmatpush1.msra.mxu0 %v1454
        %1505 = vmatprep.subr.mxu0 0.0
        %1506 = vmatpush1.msra.mxu0 %v1453
        %1507 = vmatprep.subr.mxu0 0.0
        %1508 = vmatpush1.msra.mxu0 %v1452
        %1509 = vmatprep.subr.mxu0 0.0
        %1510 = vmatpush2.msra.mxu0 0.0
        %1511 = vmatprep.subr.mxu0 0.0
        %1512 = vmatpush2.msra.mxu0 0.0
        %1513 = vmatprep.subr.mxu0 0.0
        %1514 = vmatpush2.msra.mxu0 0.0
        %1515 = vmatprep.subr.mxu0 0.0
        %1516 = vmatpush2.msra.mxu0 0.0
        %1517 = vmatprep.subr.mxu0 0.0
        %1518 = vmatpush2.msra.mxu0 0.0
        %1519 = vmatprep.subr.mxu0 0.0
        %1520 = vmatpush2.msra.mxu0 0.0
        %1521 = vmatprep.subr.mxu0 0.0
        %1522 = vmatpush2.msra.mxu0 0.0
        %1523 = vmatprep.subr.mxu0 0.0
        %1524 = vmatpush2.msra.mxu0 0.0
        %1525 = vmatprep.subr.mxu0 0.0
        %1526 = vmatpush2.msra.mxu0 0.0
        %1527 = vmatprep.subr.mxu0 0.0
        %1528 = vmatpush2.msra.mxu0 0.0
        %1529 = vmatprep.subr.mxu0 0.0
        %1530 = vmatpush2.msra.mxu0 0.0
        %1531 = vmatprep.subr.mxu0 0.0
        %1532 = vmatpush2.msra.mxu0 0.0
        %1533 = vmatprep.subr.mxu0 0.0
        %1534 = vmatpush2.msra.mxu0 0.0
        %1535 = vmatprep.subr.mxu0 0.0
        %1536 = vmatpush2.msra.mxu0 0.0
        %1537 = vmatprep.subr.mxu0 0.0
        %1538 = vmatpush2.msra.mxu0 0.0
        %1539 = vmatprep.subr.mxu0 0.0
        %1540 = vmatpush2.msra.mxu0 0.0
        %1541 = vmatprep.mubr.f32.mxu0 0.0
        %1542 = vmatmul.mubr.f32.gmra.mxu0 %v1475
        %v1543 = vpop.f32.mrf.mxu0
        %v1544 = vadd.f32 0.0, %v1543
        %v1545 = vpop.f32.mrf.mxu0
        %1546 = vdwg.mxu0
        %v1547 = vadd.f32 %v1472, %v1544
        %1548 = vst [vmem:[#allocation6] sm:$0xff] %v1547
        %p1549 = scmp.eq.s32.totalorder %s28, 3
        // Predicated region
        $region309: #{tpu_custom_call.1} parent=31 // pred_check
          %p1550 = pneg %p1549
        $region310: #{tpu_custom_call.1} parent=31 // pred_check_branch
          %1552 = sbr.rel (%p1550) target = $region312
        $region311: #{tpu_custom_call.1} parent=31 // pred_region
          %s1553 = smul.u32 4, 16
          %s1554 = smul.u32 %s1553, 1
          %s1555 = sshll.u32 %s1554, 4
          %1556 = dma.done [#allocation5], %s1555
          %v1557 = vld [vmem:[#allocation6] sm:$0xff]
          %vm1558 = vcmp.ge.f32.partialorder %v1557, 0.0
          %v1559 = vmul.f32 %v1557, 0.1
          %v1560 = vsel %vm1558, %v1557, %v1559
          %v1561 = vpack.c.bf16 %v1560, %v1560
          %v1562 = vld [vmem:[#allocation4] sm:$0xf]
          %v1563 = vld [vmem:[#allocation4 + $0x4] sm:$0xf]
          %v1564 = vld [vmem:[#allocation4 + $0x8] sm:$0xf]
          %v1565 = vld [vmem:[#allocation4 + $0xc] sm:$0xf]
          %v1566 = vld [vmem:[#allocation4 + $0x10] sm:$0xf]
          %v1567 = vld [vmem:[#allocation4 + $0x14] sm:$0xf]
          %v1568 = vld [vmem:[#allocation4 + $0x18] sm:$0xf]
          %v1569 = vld [vmem:[#allocation4 + $0x1c] sm:$0xf]
          %v1570 = vld [vmem:[#allocation4 + $0x20] sm:$0xf]
          %v1571 = vld [vmem:[#allocation4 + $0x24] sm:$0xf]
          %v1572 = vld [vmem:[#allocation4 + $0x28] sm:$0xf]
          %v1573 = vld [vmem:[#allocation4 + $0x2c] sm:$0xf]
          %v1574 = vld [vmem:[#allocation4 + $0x30] sm:$0xf]
          %v1575 = vld [vmem:[#allocation4 + $0x34] sm:$0xf]
          %v1576 = vld [vmem:[#allocation4 + $0x38] sm:$0xf]
          %v1577 = vld [vmem:[#allocation4 + $0x3c] sm:$0xf]
          %v1578 = vld [vmem:[%s5] sm:$0x1]
          %v1580 = vlaneseq
          %v1581 = vshrl.u32 %v1580, 7
          %v1582 = vsub.s32 0, %v1581
          %v1583 = vrot.slane %v1578, %v1582
          %v1601 = vunpack.c.l.b16 %v1562
          %v1602 = vunpack.c.l.b16 %v1563
          %v1603 = vunpack.c.l.b16 %v1564
          %v1604 = vunpack.c.l.b16 %v1565
          %v1605 = vunpack.c.l.b16 %v1566
          %v1606 = vunpack.c.l.b16 %v1567
          %v1607 = vunpack.c.l.b16 %v1568
          %v1608 = vunpack.c.l.b16 %v1569
          %v1609 = vunpack.c.l.b16 %v1570
          %v1610 = vunpack.c.l.b16 %v1571
          %v1611 = vunpack.c.l.b16 %v1572
          %v1612 = vunpack.c.l.b16 %v1573
          %v1613 = vunpack.c.l.b16 %v1574
          %v1614 = vunpack.c.l.b16 %v1575
          %v1615 = vunpack.c.l.b16 %v1576
          %v1616 = vunpack.c.l.b16 %v1577
          %v1617 = vpack.c.b16 %v1602, %v1601
          %v1618 = vpack.c.b16 %v1604, %v1603
          %v1619 = vpack.c.b16 %v1606, %v1605
          %v1620 = vpack.c.b16 %v1608, %v1607
          %v1621 = vpack.c.b16 %v1610, %v1609
          %v1622 = vpack.c.b16 %v1612, %v1611
          %v1623 = vpack.c.b16 %v1614, %v1613
          %v1624 = vpack.c.b16 %v1616, %v1615
          %1633 = vmatprep.subr.bf16.mxu0 0
          %1634 = vmatpush1.bf16.msra.mxu0 %v1624
          %1635 = vmatprep.subr.bf16.mxu0 0
          %1636 = vmatpush1.bf16.msra.mxu0 %v1623
          %1637 = vmatprep.subr.bf16.mxu0 0
          %1638 = vmatpush1.bf16.msra.mxu0 %v1622
          %1639 = vmatprep.subr.bf16.mxu0 0
          %1640 = vmatpush1.bf16.msra.mxu0 %v1621
          %1641 = vmatprep.subr.bf16.mxu0 0
          %1642 = vmatpush1.bf16.msra.mxu0 %v1620
          %1643 = vmatprep.subr.bf16.mxu0 0
          %1644 = vmatpush1.bf16.msra.mxu0 %v1619
          %1645 = vmatprep.subr.bf16.mxu0 0
          %1646 = vmatpush1.bf16.msra.mxu0 %v1618
          %1647 = vmatprep.subr.bf16.mxu0 0
          %1648 = vmatpush1.bf16.msra.mxu0 %v1617
          %1649 = vmatprep.subr.bf16.mxu0 0
          %1650 = vmatpush2.bf16.msra.mxu0 0
          %1651 = vmatprep.subr.bf16.mxu0 0
          %1652 = vmatpush2.bf16.msra.mxu0 0
          %1653 = vmatprep.subr.bf16.mxu0 0
          %1654 = vmatpush2.bf16.msra.mxu0 0
          %1655 = vmatprep.subr.bf16.mxu0 0
          %1656 = vmatpush2.bf16.msra.mxu0 0
          %1657 = vmatprep.subr.bf16.mxu0 0
          %1658 = vmatpush2.bf16.msra.mxu0 0
          %1659 = vmatprep.subr.bf16.mxu0 0
          %1660 = vmatpush2.bf16.msra.mxu0 0
          %1661 = vmatprep.subr.bf16.mxu0 0
          %1662 = vmatpush2.bf16.msra.mxu0 0
          %1663 = vmatprep.subr.bf16.mxu0 0
          %1664 = vmatpush2.bf16.msra.mxu0 0
          %1665 = vmatprep.mubr.bf16.mxu0 0
          %1666 = vmatmul.mubr.bf16.gmra.mxu0 %v1561
          %v1667 = vpop.f32.mrf.mxu0
          %v1668 = vadd.f32 %v1583, %v1667
          %v1669 = vpop.f32.mrf.mxu0
          %v1670 = vpop.f32.mrf.mxu0
          %v1671 = vpop.f32.mrf.mxu0
          %1672 = vdwg.mxu0
          %1673 = vst [vmem:[#allocation14] sm:$0xff] %v1668
        $region312: #{tpu_custom_call.1} parent=31 // pred_fallthru
          _
        // Predicated region
        $region313: #{tpu_custom_call.1} parent=31 // pred_check
          %p1674 = pneg %p114
        $region314: #{tpu_custom_call.1} parent=31 // pred_check_branch
          %1676 = sbr.rel (%p1674) target = $region316
        $region315: #{tpu_custom_call.1} parent=31 // pred_region
          %s1678 = ssub.s32 128, 128
          %1679 = vsyncadd [#allocation11], %s1678
          %s1681 = sshll.u32 [#allocation14], 4
          %s1682 = int_to_ptr.vmem [resolvable:$true] %s1681
          %1684 = dma.vmem_to_hbm [thread:$0]  %s1682, 128, %s6, [#allocation11]
        $region316: #{tpu_custom_call.1} parent=31 // pred_fallthru
          _
        // Predicated region
        $region317: #{tpu_custom_call.1} parent=31 // pred_check
          %p1685 = pneg %p114
        $region318: #{tpu_custom_call.1} parent=31 // pred_check_branch
          %1687 = sbr.rel (%p1685) target = $region320
        $region319: #{tpu_custom_call.1} parent=31 // pred_region
          %1688 = dma.done [#allocation11], 128
        $region320: #{tpu_custom_call.1} parent=31 // pred_fallthru
          _
      $region32: #{tpu_custom_call.1} parent=5 // pred_fallthru
        _
      %p1689 = scmp.le.s32.totalorder 2, %s23
      // Predicated region
      $region321: #{tpu_custom_call.1} parent=5 // pred_check
        %p1690 = pneg %p1689
      $region322: #{tpu_custom_call.1} parent=5 // pred_check_branch
        %1692 = sbr.rel (%p1690) target = $region324
      $region323: #{tpu_custom_call.1} parent=5 // pred_region
        %s1693 = ssub.s32 %s23, 2
      $region324: #{tpu_custom_call.1} parent=5 // pred_fallthru
        _
    $region6: #{tpu_custom_call.1} parent=1 // loop_footer
      %s27 = sadd.s32 1, %s23
    $region7: #{tpu_custom_call.1} parent=1 // loop_footer_branch
      %22 = sbr.rel target = $region3
    $region8: #{tpu_custom_call.1} parent=1 // loop_exit
      _
    %1694 = vsyncpa [#allocation10], 1
    %s1695 = scalar_lea.sflag [#allocation10], 1
    %1696 = vsyncpa %s1695, 1
    %1697 = vsyncpa [#allocation13], 1
    %s1698 = scalar_lea.sflag [#allocation13], 1
    %1699 = vsyncpa %s1698, 1
    %1700 = vsyncpa [#allocation11], 1
    %s1701 = scalar_lea.sflag [#allocation11], 1
    %1702 = vsyncpa %s1701, 1
  %1703 = vsyncmov [#allocation3]
  %s1704 = vpop.sfrf %1703
  %p1705 = scmp.eq.s32.totalorder %s1704, 0
  %p1706 = pneg %p1705
  %1708 = shalt.err (%p1706)
  %s1709 = scalar_lea.sflag [#allocation3], 1
  %1710 = vsyncmov %s1709
  %s1711 = vpop.sfrf %1710
  %p1712 = scmp.eq.s32.totalorder %s1711, 0
  %p1713 = pneg %p1712
  %1715 = shalt.err (%p1713)
  %s1716 = scalar_lea.sflag [#allocation3], 2
  %1717 = vsyncmov %s1716
  %s1718 = vpop.sfrf %1717
  %p1719 = scmp.eq.s32.totalorder %s1718, 0
  %p1720 = pneg %p1719
  %1722 = shalt.err (%p1720)
  %s1723 = scalar_lea.sflag [#allocation3], 3
  %1724 = vsyncmov %s1723
  %s1725 = vpop.sfrf %1724
  %p1726 = scmp.eq.s32.totalorder %s1725, 0
  %p1727 = pneg %p1726
  %1729 = shalt.err (%p1727)
  %s1730 = scalar_lea.sflag [#allocation3], 4
  %1731 = vsyncmov %s1730
  %s1732 = vpop.sfrf %1731
  %p1733 = scmp.eq.s32.totalorder %s1732, 0
  %p1734 = pneg %p1733
  %1736 = shalt.err (%p1734)
  %s1737 = scalar_lea.sflag [#allocation3], 5
  %1738 = vsyncmov %s1737
  %s1739 = vpop.sfrf %1738
  %p1740 = scmp.eq.s32.totalorder %s1739, 0
  %p1741 = pneg %p1740
  %1743 = shalt.err (%p1741)
  %s1744 = scalar_lea.sflag [#allocation3], 6
  %1745 = vsyncmov %s1744
  %s1746 = vpop.sfrf %1745
  %p1747 = scmp.eq.s32.totalorder %s1746, 0
  %p1748 = pneg %p1747
  %1750 = shalt.err (%p1748)
  %s1751 = scalar_lea.sflag [#allocation3], 7
  %1752 = vsyncmov %s1751
  %s1753 = vpop.sfrf %1752
  %p1754 = scmp.eq.s32.totalorder %s1753, 0
  %p1755 = pneg %p1754
  %1757 = shalt.err (%p1755)
  %s1758 = scalar_lea.sflag [#allocation3], 8
  %1759 = vsyncmov %s1758
  %s1760 = vpop.sfrf %1759
  %p1761 = scmp.eq.s32.totalorder %s1760, 0
  %p1762 = pneg %p1761
  %1764 = shalt.err (%p1762)
  %s1765 = scalar_lea.sflag [#allocation3], 9
  %1766 = vsyncmov %s1765
  %s1767 = vpop.sfrf %1766
  %p1768 = scmp.eq.s32.totalorder %s1767, 0
  %p1769 = pneg %p1768
  %1771 = shalt.err (%p1769)
  %s1772 = scalar_lea.sflag [#allocation3], 10
  %1773 = vsyncmov %s1772
  %s1774 = vpop.sfrf %1773
  %p1775 = scmp.eq.s32.totalorder %s1774, 0
  %p1776 = pneg %p1775
  %1778 = shalt.err (%p1776)
  %s1779 = scalar_lea.sflag [#allocation3], 11
  %1780 = vsyncmov %s1779
  %s1781 = vpop.sfrf %1780
  %p1782 = scmp.eq.s32.totalorder %s1781, 0
  %p1783 = pneg %p1782
  %1785 = shalt.err (%p1783)
  %s1786 = scalar_lea.sflag [#allocation3], 12
  %1787 = vsyncmov %s1786
  %s1788 = vpop.sfrf %1787
  %p1789 = scmp.eq.s32.totalorder %s1788, 0
  %p1790 = pneg %p1789
  %1792 = shalt.err (%p1790)
  %s1793 = scalar_lea.sflag [#allocation3], 13
  %1794 = vsyncmov %s1793
  %s1795 = vpop.sfrf %1794
  %p1796 = scmp.eq.s32.totalorder %s1795, 0
  %p1797 = pneg %p1796
  %1799 = shalt.err (%p1797)
  %s1800 = scalar_lea.sflag [#allocation3], 14
  %1801 = vsyncmov %s1800
  %s1802 = vpop.sfrf %1801
  %p1803 = scmp.eq.s32.totalorder %s1802, 0
  %p1804 = pneg %p1803
  %1806 = shalt.err (%p1804)
  %s1807 = scalar_lea.sflag [#allocation3], 15
  %1808 = vsyncmov %s1807
  %s1809 = vpop.sfrf %1808
  %p1810 = scmp.eq.s32.totalorder %s1809, 0
  %p1811 = pneg %p1810
  %1813 = shalt.err (%p1811)
  %s1814 = scalar_lea.sflag [#allocation3], 16
  %1815 = vsyncmov %s1814
  %s1816 = vpop.sfrf %1815
  %p1817 = scmp.eq.s32.totalorder %s1816, 0
  %p1818 = pneg %p1817
  %1820 = shalt.err (%p1818)
  %s1821 = scalar_lea.sflag [#allocation3], 17
  %1822 = vsyncmov %s1821
  %s1823 = vpop.sfrf %1822
  %p1824 = scmp.eq.s32.totalorder %s1823, 0
  %p1825 = pneg %p1824
  %1827 = shalt.err (%p1825)
  %s1828 = scalar_lea.sflag [#allocation3], 18
  %1829 = vsyncmov %s1828
  %s1830 = vpop.sfrf %1829
  %p1831 = scmp.eq.s32.totalorder %s1830, 0
  %p1832 = pneg %p1831
  %1834 = shalt.err (%p1832)
  %s1835 = scalar_lea.sflag [#allocation3], 19
  %1836 = vsyncmov %s1835
  %s1837 = vpop.sfrf %1836
  %p1838 = scmp.eq.s32.totalorder %s1837, 0
  %p1839 = pneg %p1838
  %1841 = shalt.err (%p1839)
  %s1842 = scalar_lea.sflag [#allocation3], 20
  %1843 = vsyncmov %s1842
  %s1844 = vpop.sfrf %1843
  %p1845 = scmp.eq.s32.totalorder %s1844, 0
  %p1846 = pneg %p1845
  %1848 = shalt.err (%p1846)
  %s1849 = scalar_lea.sflag [#allocation3], 21
  %1850 = vsyncmov %s1849
  %s1851 = vpop.sfrf %1850
  %p1852 = scmp.eq.s32.totalorder %s1851, 0
  %p1853 = pneg %p1852
  %1855 = shalt.err (%p1853)
  %s1856 = scalar_lea.sflag [#allocation3], 22
  %1857 = vsyncmov %s1856
  %s1858 = vpop.sfrf %1857
  %p1859 = scmp.eq.s32.totalorder %s1858, 0
  %p1860 = pneg %p1859
  %1862 = shalt.err (%p1860)
  %s1863 = scalar_lea.sflag [#allocation3], 23
  %1864 = vsyncmov %s1863
  %s1865 = vpop.sfrf %1864
  %p1866 = scmp.eq.s32.totalorder %s1865, 0
  %p1867 = pneg %p1866
  %1869 = shalt.err (%p1867)
  %s1870 = scalar_lea.sflag [#allocation3], 24
  %1871 = vsyncmov %s1870
  %s1872 = vpop.sfrf %1871
  %p1873 = scmp.eq.s32.totalorder %s1872, 0
  %p1874 = pneg %p1873
  %1876 = shalt.err (%p1874)
  %s1877 = scalar_lea.sflag [#allocation3], 25
  %1878 = vsyncmov %s1877
  %s1879 = vpop.sfrf %1878
  %p1880 = scmp.eq.s32.totalorder %s1879, 0
  %p1881 = pneg %p1880
  %1883 = shalt.err (%p1881)
  %s1884 = scalar_lea.sflag [#allocation3], 26
  %1885 = vsyncmov %s1884
  %s1886 = vpop.sfrf %1885
  %p1887 = scmp.eq.s32.totalorder %s1886, 0
  %p1888 = pneg %p1887
  %1890 = shalt.err (%p1888)
  %s1891 = scalar_lea.sflag [#allocation3], 27
  %1892 = vsyncmov %s1891
  %s1893 = vpop.sfrf %1892
  %p1894 = scmp.eq.s32.totalorder %s1893, 0
  %p1895 = pneg %p1894
  %1897 = shalt.err (%p1895)
  %s1898 = scalar_lea.sflag [#allocation3], 28
  %1899 = vsyncmov %s1898
  %s1900 = vpop.sfrf %1899
  %p1901 = scmp.eq.s32.totalorder %s1900, 0
  %p1902 = pneg %p1901
  %1904 = shalt.err (%p1902)
  %s1905 = scalar_lea.sflag [#allocation3], 29
  %1906 = vsyncmov %s1905
  %s1907 = vpop.sfrf %1906
  %p1908 = scmp.eq.s32.totalorder %s1907, 0
  %p1909 = pneg %p1908
  %1911 = shalt.err (%p1909)
  %s1912 = scalar_lea.sflag [#allocation3], 30
  %1913 = vsyncmov %s1912
  %s1914 = vpop.sfrf %1913
  %p1915 = scmp.eq.s32.totalorder %s1914, 0
  %p1916 = pneg %p1915
  %1918 = shalt.err (%p1916)
  %s1919 = scalar_lea.sflag [#allocation3], 31
  %1920 = vsyncmov %s1919
  %s1921 = vpop.sfrf %1920
  %p1922 = scmp.eq.s32.totalorder %s1921, 0
  %p1923 = pneg %p1922
  %1925 = shalt.err (%p1923)
  %s1926 = scalar_lea.sflag [#allocation3], 32
  %1927 = vsyncmov %s1926
  %s1928 = vpop.sfrf %1927
  %p1929 = scmp.eq.s32.totalorder %s1928, 0
  %p1930 = pneg %p1929
  %1932 = shalt.err (%p1930)
  %s1933 = scalar_lea.sflag [#allocation3], 33
  %1934 = vsyncmov %s1933
  %s1935 = vpop.sfrf %1934
  %p1936 = scmp.eq.s32.totalorder %s1935, 0
  %p1937 = pneg %p1936
  %1939 = shalt.err (%p1937)
  %s1940 = scalar_lea.sflag [#allocation3], 34
  %1941 = vsyncmov %s1940
  %s1942 = vpop.sfrf %1941
  %p1943 = scmp.eq.s32.totalorder %s1942, 0
  %p1944 = pneg %p1943
  %1946 = shalt.err (%p1944)
  %s1947 = scalar_lea.sflag [#allocation3], 35
  %1948 = vsyncmov %s1947
  %s1949 = vpop.sfrf %1948
  %p1950 = scmp.eq.s32.totalorder %s1949, 0
  %p1951 = pneg %p1950
  %1953 = shalt.err (%p1951)
  %s1954 = scalar_lea.sflag [#allocation3], 36
  %1955 = vsyncmov %s1954
  %s1956 = vpop.sfrf %1955
  %p1957 = scmp.eq.s32.totalorder %s1956, 0
  %p1958 = pneg %p1957
  %1960 = shalt.err (%p1958)
  %s1961 = scalar_lea.sflag [#allocation3], 37
  %1962 = vsyncmov %s1961
  %s1963 = vpop.sfrf %1962
  %p1964 = scmp.eq.s32.totalorder %s1963, 0
  %p1965 = pneg %p1964
  %1967 = shalt.err (%p1965)
  %s1968 = scalar_lea.sflag [#allocation3], 38
  %1969 = vsyncmov %s1968
  %s1970 = vpop.sfrf %1969
  %p1971 = scmp.eq.s32.totalorder %s1970, 0
  %p1972 = pneg %p1971
  %1974 = shalt.err (%p1972)
  %s1975 = scalar_lea.sflag [#allocation3], 39
  %1976 = vsyncmov %s1975
  %s1977 = vpop.sfrf %1976
  %p1978 = scmp.eq.s32.totalorder %s1977, 0
  %p1979 = pneg %p1978
  %1981 = shalt.err (%p1979)
  %s1982 = scalar_lea.sflag [#allocation3], 40
  %1983 = vsyncmov %s1982
  %s1984 = vpop.sfrf %1983
  %p1985 = scmp.eq.s32.totalorder %s1984, 0
  %p1986 = pneg %p1985
  %1988 = shalt.err (%p1986)
  %s1989 = scalar_lea.sflag [#allocation3], 41
  %1990 = vsyncmov %s1989
  %s1991 = vpop.sfrf %1990
  %p1992 = scmp.eq.s32.totalorder %s1991, 0
  %p1993 = pneg %p1992
  %1995 = shalt.err (%p1993)
  %s1996 = scalar_lea.sflag [#allocation3], 42
  %1997 = vsyncmov %s1996
  %s1998 = vpop.sfrf %1997
  %p1999 = scmp.eq.s32.totalorder %s1998, 0
  %p2000 = pneg %p1999
  %2002 = shalt.err (%p2000)
  %s2003 = scalar_lea.sflag [#allocation3], 43
  %2004 = vsyncmov %s2003
  %s2005 = vpop.sfrf %2004
  %p2006 = scmp.eq.s32.totalorder %s2005, 0
  %p2007 = pneg %p2006
  %2009 = shalt.err (%p2007)
  %s2010 = scalar_lea.sflag [#allocation3], 44
  %2011 = vsyncmov %s2010
  %s2012 = vpop.sfrf %2011
  %p2013 = scmp.eq.s32.totalorder %s2012, 0
  %p2014 = pneg %p2013
  %2016 = shalt.err (%p2014)
  %s2017 = scalar_lea.sflag [#allocation3], 45
  %2018 = vsyncmov %s2017
  %s2019 = vpop.sfrf %2018
  %p2020 = scmp.eq.s32.totalorder %s2019, 0
  %p2021 = pneg %p2020
  %2023 = shalt.err (%p2021)
  %s2024 = scalar_lea.sflag [#allocation3], 46
  %2025 = vsyncmov %s2024
  %s2026 = vpop.sfrf %2025
  %p2027 = scmp.eq.s32.totalorder %s2026, 0
  %p2028 = pneg %p2027
  %2030 = shalt.err (%p2028)
  %s2031 = scalar_lea.sflag [#allocation3], 47
  %2032 = vsyncmov %s2031
  %s2033 = vpop.sfrf %2032
  %p2034 = scmp.eq.s32.totalorder %s2033, 0
  %p2035 = pneg %p2034
  %2037 = shalt.err (%p2035)
  %s2038 = scalar_lea.sflag [#allocation3], 48
  %2039 = vsyncmov %s2038
  %s2040 = vpop.sfrf %2039
  %p2041 = scmp.eq.s32.totalorder %s2040, 0
  %p2042 = pneg %p2041
  %2044 = shalt.err (%p2042)
  %s2045 = scalar_lea.sflag [#allocation3], 49
  %2046 = vsyncmov %s2045
  %s2047 = vpop.sfrf %2046
  %p2048 = scmp.eq.s32.totalorder %s2047, 0
  %p2049 = pneg %p2048
  %2051 = shalt.err (%p2049)
  %s2052 = scalar_lea.sflag [#allocation3], 50
  %2053 = vsyncmov %s2052
  %s2054 = vpop.sfrf %2053
  %p2055 = scmp.eq.s32.totalorder %s2054, 0
  %p2056 = pneg %p2055
  %2058 = shalt.err (%p2056)
  %s2059 = scalar_lea.sflag [#allocation3], 51
  %2060 = vsyncmov %s2059
  %s2061 = vpop.sfrf %2060
  %p2062 = scmp.eq.s32.totalorder %s2061, 0
  %p2063 = pneg %p2062
  %2065 = shalt.err (%p2063)
  %s2066 = scalar_lea.sflag [#allocation3], 52
  %2067 = vsyncmov %s2066
  %s2068 = vpop.sfrf %2067
  %p2069 = scmp.eq.s32.totalorder %s2068, 0
  %p2070 = pneg %p2069
  %2072 = shalt.err (%p2070)
  %s2073 = scalar_lea.sflag [#allocation3], 53
  %2074 = vsyncmov %s2073
  %s2075 = vpop.sfrf %2074
  %p2076 = scmp.eq.s32.totalorder %s2075, 0
  %p2077 = pneg %p2076
  %2079 = shalt.err (%p2077)
  %s2080 = scalar_lea.sflag [#allocation3], 54
  %2081 = vsyncmov %s2080
  %s2082 = vpop.sfrf %2081
  %p2083 = scmp.eq.s32.totalorder %s2082, 0
  %p2084 = pneg %p2083
  %2086 = shalt.err (%p2084)
  %s2087 = scalar_lea.sflag [#allocation3], 55
  %2088 = vsyncmov %s2087
  %s2089 = vpop.sfrf %2088
  %p2090 = scmp.eq.s32.totalorder %s2089, 0
  %p2091 = pneg %p2090
  %2093 = shalt.err (%p2091)
  %s2094 = scalar_lea.sflag [#allocation3], 56
  %2095 = vsyncmov %s2094
  %s2096 = vpop.sfrf %2095
  %p2097 = scmp.eq.s32.totalorder %s2096, 0
  %p2098 = pneg %p2097
  %2100 = shalt.err (%p2098)
  %s2101 = scalar_lea.sflag [#allocation3], 57
  %2102 = vsyncmov %s2101
  %s2103 = vpop.sfrf %2102
  %p2104 = scmp.eq.s32.totalorder %s2103, 0
  %p2105 = pneg %p2104
  %2107 = shalt.err (%p2105)
  %s2108 = scalar_lea.sflag [#allocation3], 58
  %2109 = vsyncmov %s2108
  %s2110 = vpop.sfrf %2109
  %p2111 = scmp.eq.s32.totalorder %s2110, 0
  %p2112 = pneg %p2111
  %2114 = shalt.err (%p2112)
  %s2115 = scalar_lea.sflag [#allocation3], 59
  %2116 = vsyncmov %s2115
  %s2117 = vpop.sfrf %2116
  %p2118 = scmp.eq.s32.totalorder %s2117, 0
  %p2119 = pneg %p2118
  %2121 = shalt.err (%p2119)
  %s2122 = scalar_lea.sflag [#allocation3], 60
  %2123 = vsyncmov %s2122
  %s2124 = vpop.sfrf %2123
  %p2125 = scmp.eq.s32.totalorder %s2124, 0
  %p2126 = pneg %p2125
  %2128 = shalt.err (%p2126)
  %s2129 = scalar_lea.sflag [#allocation3], 61
  %2130 = vsyncmov %s2129
  %s2131 = vpop.sfrf %2130
  %p2132 = scmp.eq.s32.totalorder %s2131, 0
  %p2133 = pneg %p2132
  %2135 = shalt.err (%p2133)
  %s2136 = scalar_lea.sflag [#allocation3], 62
  %2137 = vsyncmov %s2136
  %s2138 = vpop.sfrf %2137
  %p2139 = scmp.eq.s32.totalorder %s2138, 0
  %p2140 = pneg %p2139
  %2142 = shalt.err (%p2140)
  %s2143 = scalar_lea.sflag [#allocation3], 63
  %2144 = vsyncmov %s2143
  %s2145 = vpop.sfrf %2144
  %p2146 = scmp.eq.s32.totalorder %s2145, 0
  %p2147 = pneg %p2146
  %2149 = shalt.err (%p2147)
  %2150 = vsyncmov [#allocation5]
  %s2151 = vpop.sfrf %2150
  %p2152 = scmp.eq.s32.totalorder %s2151, 0
  %p2153 = pneg %p2152
  %2155 = shalt.err (%p2153)

</llo_original>
